<compile_context>
chip_gen: v7x
topology: tpu7x:2x2x1
jax: 0.10.0
libtpu: 0.0.40
codegen_flags: <defaults>
</compile_context>

<pallas_src>
import jax
import jax.numpy as jnp
from jax import lax
from jax.experimental import pallas as pl
from jax.experimental.pallas import tpu as pltpu

EPS = 1e-5
LANE = 128


def _round_up(x, m):
    return (x + m - 1) // m * m


def residual_block_kernel(x_ref, w1_ref, b1_ref, w3_ref, b2_ref, o_ref):
    # x_ref : (Nb, H, W, C)   true (unpadded) channel count
    # w1_ref: (C, Cp)         bf16/f32, BN1 scale folded in
    # b1_ref: (1, Cp)         f32 folded BN1 shift (zero in padded lanes)
    # w3_ref: (3, 3*Cp, Cp)   bf16/f32, BN2 scale folded in; per-dy rows ordered dx*Cp + ci
    # b2_ref: (1, Cp)         f32 folded BN2 shift
    # o_ref : (Nb, H, W, C)
    Nb, H, W, C = x_ref.shape
    Cp = w1_ref.shape[1]
    M = Nb * H * W
    mm_dtype = w1_ref.dtype

    # ---- 1x1 conv == per-pixel channel matmul (MXU), BN1 shift + ReLU ----
    x2d = x_ref[...].astype(jnp.float32).reshape(M, C)
    t1 = jnp.dot(x2d.astype(mm_dtype), w1_ref[...],
                 preferred_element_type=jnp.float32)
    t1 = jnp.maximum(t1 + b1_ref[...], 0.0)                       # (M, Cp) f32

    # ---- 3x3 conv (stride 1, pad 1): roll + mask window construction, grouped by dy ----
    # Flat row index m = (n*H + h)*W + w ; neighbour (h+dy-1, w+dx-1) is a flat shift of
    # (dy-1)*W + (dx-1), realised with sublane rotations (XLU) and boundary masks (VPU).
    hrow = lax.broadcasted_iota(jnp.int32, (Nb, H, W, Cp), 1).reshape(M, Cp)
    wcol = lax.broadcasted_iota(jnp.int32, (Nb, H, W, Cp), 2).reshape(M, Cp)
    not_top = hrow >= 1
    not_bot = hrow <= H - 2
    not_left = wcol >= 1
    not_right = wcol <= W - 2

    acc = jnp.zeros((M, Cp), jnp.float32)
    for dy in range(3):                                           # unrolled at trace time
        if dy == 0:
            base = jnp.where(not_top, pltpu.roll(t1, W, 0), 0.0)          # t1[h-1, w]
        elif dy == 1:
            base = t1                                                      # t1[h,   w]
        else:
            base = jnp.where(not_bot, pltpu.roll(t1, (M - W) % M, 0), 0.0)  # t1[h+1, w]
        left = jnp.where(not_left, pltpu.roll(base, 1, 0), 0.0)            # ..[.., w-1]
        right = jnp.where(not_right, pltpu.roll(base, M - 1, 0), 0.0)      # ..[.., w+1]
        k3 = jnp.concatenate([left, base, right], axis=1).astype(mm_dtype)  # (M, 3*Cp)
        acc = acc + jnp.dot(k3, w3_ref[dy], preferred_element_type=jnp.float32)

    # ---- BN2 shift + identity residual (re-read x: short live range) + final ReLU ----
    xr = x_ref[...].astype(jnp.float32).reshape(M, C)
    out = jnp.maximum((acc + b2_ref[...])[:, :C] + xr, 0.0)
    o_ref[...] = out.reshape(Nb, H, W, C).astype(o_ref.dtype)


def _vmem_bytes_estimate(Nb, H, W, C, Cp, x_bytes, mm_bytes):
    M = Nb * H * W
    io = 2 * 2 * M * C * x_bytes                               # x + out blocks, dbl-buffered
    weights = 2 * (C * Cp + 9 * Cp * Cp) * mm_bytes + 2 * 2 * Cp * 4
    inter = (M * Cp * 4                                        # t1
             + M * Cp * 4                                      # acc
             + 2 * M * Cp * 4                                  # rolled/masked temporaries
             + M * 3 * Cp * 4                                  # k3 (f32, pre-cast)
             + M * 3 * Cp * mm_bytes                           # k3 (matmul dtype)
             + 2 * M * Cp * 4)                                 # iota masks (i32)
    return io + weights + inter


def _pick_nb(N, H, W, C, Cp, x_bytes, mm_bytes, budget):
    best = 1
    for nb in range(1, N + 1):
        if N % nb == 0 and _vmem_bytes_estimate(nb, H, W, C, Cp, x_bytes, mm_bytes) <= budget:
            best = nb
    return best


def residual_block(x_nhwc, w1_oihw, g1, be1, m1, v1, w3_oihw, g2, be2, m2, v2,
                   matmul_dtype=jnp.bfloat16, vmem_budget_bytes=24 * (1 << 20)):
    """x_nhwc: (N, H, W, C). Conv weights in PyTorch OIHW layout. Returns (N, H, W, C)."""
    N, H, W, Cin = x_nhwc.shape
    Cout = w1_oihw.shape[0]
    assert Cin == Cout, "identity shortcut requires inchannel == outchannel (stride=1)"
    C = Cin
    Cp = _round_up(C, LANE)                                    # lane-dense matmul N/K dim

    # ---- fold BatchNorm (inference) into per-output-channel scale / shift ----
    s1 = g1 / jnp.sqrt(v1 + EPS)
    s2 = g2 / jnp.sqrt(v2 + EPS)
    b1 = be1 - m1 * s1
    b2 = be2 - m2 * s2

    # ---- repack weights: channel-matmul form, BN scale folded, output lanes padded ----
    w1_mat = jnp.transpose(w1_oihw[:, :, 0, 0], (1, 0)) * s1[None, :]           # (C, C)
    w1_mat = jnp.pad(w1_mat, ((0, 0), (0, Cp - C))).astype(matmul_dtype)        # (C, Cp)

    w3_hwio = jnp.transpose(w3_oihw, (2, 3, 1, 0)) * s2[None, None, None, :]    # (3,3,I,O)
    w3_hwio = jnp.pad(w3_hwio, ((0, 0), (0, 0), (0, Cp - C), (0, Cp - C)))
    w3_mat = w3_hwio.reshape(3, 3 * Cp, Cp).astype(matmul_dtype)  # per-dy rows: dx*Cp + ci

    b1_p = jnp.pad(b1, (0, Cp - C)).reshape(1, Cp).astype(jnp.float32)
    b2_p = jnp.pad(b2, (0, Cp - C)).reshape(1, Cp).astype(jnp.float32)

    x_bytes = jnp.dtype(x_nhwc.dtype).itemsize
    mm_bytes = jnp.dtype(matmul_dtype).itemsize
    Nb = _pick_nb(N, H, W, C, Cp, x_bytes, mm_bytes, vmem_budget_bytes)
    grid = (N // Nb,)

    est = _vmem_bytes_estimate(Nb, H, W, C, Cp, x_bytes, mm_bytes)
    vmem_limit = int(min(max(int(1.5 * est), 32 * (1 << 20)), 64 * (1 << 20)))

    out = pl.pallas_call(
        residual_block_kernel,
        out_shape=jax.ShapeDtypeStruct((N, H, W, C), x_nhwc.dtype),
        grid_spec=pltpu.PrefetchScalarGridSpec(
            num_scalar_prefetch=0,
            grid=grid,
            in_specs=[
                pl.BlockSpec((Nb, H, W, C), lambda n: (n, 0, 0, 0)),
                pl.BlockSpec((C, Cp), lambda n: (0, 0)),
                pl.BlockSpec((1, Cp), lambda n: (0, 0)),
                pl.BlockSpec((3, 3 * Cp, Cp), lambda n: (0, 0, 0)),
                pl.BlockSpec((1, Cp), lambda n: (0, 0)),
            ],
            out_specs=pl.BlockSpec((Nb, H, W, C), lambda n: (n, 0, 0, 0)),
        ),
        compiler_params=pltpu.CompilerParams(
            dimension_semantics=("parallel",),        # batch blocks independent (v7x 2 TCs)
            vmem_limit_bytes=vmem_limit),
    )(x_nhwc, w1_mat, b1_p, w3_mat, b2_p)
    return out


def reference_forward(x_nhwc, w1_oihw, g1, be1, m1, v1, w3_oihw, g2, be2, m2, v2):
    """Plain-JAX reference (inference-mode BN), NHWC, f32."""
    dn = ("NHWC", "HWIO", "NHWC")
    y = lax.conv_general_dilated(x_nhwc, jnp.transpose(w1_oihw, (2, 3, 1, 0)),
                                 (1, 1), "VALID", dimension_numbers=dn)
    y = (y - m1) / jnp.sqrt(v1 + EPS) * g1 + be1
    y = jnp.maximum(y, 0.0)
    y = lax.conv_general_dilated(y, jnp.transpose(w3_oihw, (2, 3, 1, 0)),
                                 (1, 1), ((1, 1), (1, 1)), dimension_numbers=dn)
    y = (y - m2) / jnp.sqrt(v2 + EPS) * g2 + be2
    return jnp.maximum(y + x_nhwc, 0.0)


if __name__ == "__main__":
    # small shapes consistent with the module: batch=2, in=out channels=4, spatial=16
    N, C, H, W = 2, 4, 16, 16
    key = jax.random.PRNGKey(0)
    kx, k1, k3, kb1, kb2, km1, km2, kv1, kv2, kg1, kg2 = jax.random.split(key, 11)

    x_nchw = jax.random.normal(kx, (N, C, H, W), jnp.float32)   # PyTorch-convention input
    x_nhwc = jnp.transpose(x_nchw, (0, 2, 3, 1))                # kernel layout

    # deterministic synthetic parameters (PyTorch OIHW conv weights, BN stats)
    w1 = jax.random.normal(k1, (C, C, 1, 1), jnp.float32) * 0.3
    w3 = jax.random.normal(k3, (C, C, 3, 3), jnp.float32) * 0.1
    g1 = 1.0 + 0.1 * jax.random.normal(kg1, (C,), jnp.float32)
    g2 = 1.0 + 0.1 * jax.random.normal(kg2, (C,), jnp.float32)
    be1 = 0.1 * jax.random.normal(kb1, (C,), jnp.float32)
    be2 = 0.1 * jax.random.normal(kb2, (C,), jnp.float32)
    m1 = 0.1 * jax.random.normal(km1, (C,), jnp.float32)
    m2 = 0.1 * jax.random.normal(km2, (C,), jnp.float32)
    v1 = jnp.abs(jax.random.normal(kv1, (C,), jnp.float32)) + 0.5
    v2 = jnp.abs(jax.random.normal(kv2, (C,), jnp.float32)) + 0.5

    out = residual_block(x_nhwc, w1, g1, be1, m1, v1, w3, g2, be2, m2, v2)
    out = jax.block_until_ready(out)

    ref = reference_forward(x_nhwc, w1, g1, be1, m1, v1, w3, g2, be2, m2, v2)
    assert out.shape == (N, H, W, C)
    # bf16 matmul operands (f32 accumulation) -> tolerance loosened vs. a pure-f32 check
    assert jnp.allclose(out, ref, atol=2e-2, rtol=2e-2), "mismatch vs reference"

    print("KERNEL_OK")
</pallas_src>

<mosaic_0001>
module attributes {stable_mosaic.version = 11 : i64} {
  func.func @residual_block_kernel(%arg0: i32, %arg1: memref<2x16x16x4xf32, #tpu.memory_space<vmem>>, %arg2: memref<4x128xbf16, #tpu.memory_space<vmem>>, %arg3: memref<1x128xf32, #tpu.memory_space<vmem>>, %arg4: memref<3x384x128xbf16, #tpu.memory_space<vmem>>, %arg5: memref<1x128xf32, #tpu.memory_space<vmem>>, %arg6: memref<2x16x16x4xf32, #tpu.memory_space<vmem>>) attributes {dimension_semantics = [#tpu.dimension_semantics<parallel>], iteration_bounds = array<i64: 1>, scalar_prefetch = 0 : i64, scratch_operands = 0 : i64, tpu.core_type = #tpu.core_type<tc>, window_params = [{transform_indices = @transform_0, window_bounds = array<i64: 2, 16, 16, 4>}, {pipeline_mode = #tpu.pipeline_mode<synchronous>, transform_indices = @transform_1, window_bounds = array<i64: 4, 128>}, {pipeline_mode = #tpu.pipeline_mode<synchronous>, transform_indices = @transform_2, window_bounds = array<i64: 1, 128>}, {pipeline_mode = #tpu.pipeline_mode<synchronous>, transform_indices = @transform_3, window_bounds = array<i64: 3, 384, 128>}, {pipeline_mode = #tpu.pipeline_mode<synchronous>, transform_indices = @transform_4, window_bounds = array<i64: 1, 128>}, {transform_indices = @transform_5, window_bounds = array<i64: 2, 16, 16, 4>}]} {
    %c0 = arith.constant 0 : index
    %c0_0 = arith.constant 0 : index
    %c0_1 = arith.constant 0 : index
    %c0_2 = arith.constant 0 : index
    %0 = vector.load %arg1[%c0, %c0_0, %c0_1, %c0_2] : memref<2x16x16x4xf32, #tpu.memory_space<vmem>>, vector<2x16x16x4xf32>
    %1 = vector.shape_cast %0 : vector<2x16x16x4xf32> to vector<512x4xf32>
    %2 = arith.truncf %1 : vector<512x4xf32> to vector<512x4xbf16>
    %c0_3 = arith.constant 0 : index
    %c0_4 = arith.constant 0 : index
    %3 = vector.load %arg2[%c0_3, %c0_4] : memref<4x128xbf16, #tpu.memory_space<vmem>>, vector<4x128xbf16>
    %cst = arith.constant dense<0.000000e+00> : vector<512x128xf32>
    %4 = tpu.matmul %2, %3, %cst {dimension_numbers = #tpu.dot_dimension_numbers<[1], [0], [0], [1], [0, 0, 1, 1], [], []>} : vector<512x4xbf16>, vector<4x128xbf16>, vector<512x128xf32> -> vector<512x128xf32>
    %c0_5 = arith.constant 0 : index
    %c0_6 = arith.constant 0 : index
    %5 = vector.load %arg3[%c0_5, %c0_6] : memref<1x128xf32, #tpu.memory_space<vmem>>, vector<1x128xf32>
    %6 = vector.broadcast %5 : vector<1x128xf32> to vector<512x128xf32>
    %7 = arith.addf %4, %6 : vector<512x128xf32>
    %cst_7 = arith.constant 0.000000e+00 : f32
    %8 = vector.broadcast %cst_7 : f32 to vector<512x128xf32>
    %9 = arith.maximumf %7, %8 : vector<512x128xf32>
    %10 = tpu.iota {dimensions = array<i32: 1>} : vector<2x16x16x128xi32>
    %11 = vector.shape_cast %10 : vector<2x16x16x128xi32> to vector<512x128xi32>
    %12 = tpu.iota {dimensions = array<i32: 2>} : vector<2x16x16x128xi32>
    %13 = vector.shape_cast %12 : vector<2x16x16x128xi32> to vector<512x128xi32>
    %c1_i32 = arith.constant 1 : i32
    %14 = vector.broadcast %c1_i32 : i32 to vector<512x128xi32>
    %15 = arith.cmpi sge, %11, %14 : vector<512x128xi32>
    %c14_i32 = arith.constant 14 : i32
    %16 = vector.broadcast %c14_i32 : i32 to vector<512x128xi32>
    %17 = arith.cmpi sle, %11, %16 : vector<512x128xi32>
    %c1_i32_8 = arith.constant 1 : i32
    %18 = vector.broadcast %c1_i32_8 : i32 to vector<512x128xi32>
    %19 = arith.cmpi sge, %13, %18 : vector<512x128xi32>
    %c14_i32_9 = arith.constant 14 : i32
    %20 = vector.broadcast %c14_i32_9 : i32 to vector<512x128xi32>
    %21 = arith.cmpi sle, %13, %20 : vector<512x128xi32>
    %cst_10 = arith.constant 0.000000e+00 : f32
    %22 = vector.broadcast %cst_10 : f32 to vector<512x128xf32>
    %c16_i32 = arith.constant 16 : i32
    %23 = tpu.dynamic_rotate %9 by %c16_i32 dim 0 : vector<512x128xf32>, i32 -> vector<512x128xf32>
    %cst_11 = arith.constant 0.000000e+00 : f32
    %24 = vector.broadcast %cst_11 : f32 to vector<512x128xf32>
    %25 = arith.select %15, %23, %24 : vector<512x128xi1>, vector<512x128xf32>
    %c1_i32_12 = arith.constant 1 : i32
    %26 = tpu.dynamic_rotate %25 by %c1_i32_12 dim 0 : vector<512x128xf32>, i32 -> vector<512x128xf32>
    %cst_13 = arith.constant 0.000000e+00 : f32
    %27 = vector.broadcast %cst_13 : f32 to vector<512x128xf32>
    %28 = arith.select %19, %26, %27 : vector<512x128xi1>, vector<512x128xf32>
    %c511_i32 = arith.constant 511 : i32
    %29 = tpu.dynamic_rotate %25 by %c511_i32 dim 0 : vector<512x128xf32>, i32 -> vector<512x128xf32>
    %cst_14 = arith.constant 0.000000e+00 : f32
    %30 = vector.broadcast %cst_14 : f32 to vector<512x128xf32>
    %31 = arith.select %21, %29, %30 : vector<512x128xi1>, vector<512x128xf32>
    %32 = tpu.concatenate %28, %25, %31 in 1 : vector<512x128xf32>, vector<512x128xf32>, vector<512x128xf32> -> vector<512x384xf32>
    %33 = arith.truncf %32 : vector<512x384xf32> to vector<512x384xbf16>
    %c0_15 = arith.constant 0 : index
    %c0_16 = arith.constant 0 : index
    %c0_17 = arith.constant 0 : index
    %34 = vector.load %arg4[%c0_15, %c0_16, %c0_17] : memref<3x384x128xbf16, #tpu.memory_space<vmem>>, vector<1x384x128xbf16>
    %35 = vector.shape_cast %34 : vector<1x384x128xbf16> to vector<384x128xbf16>
    %cst_18 = arith.constant dense<0.000000e+00> : vector<512x128xf32>
    %36 = tpu.matmul %33, %35, %cst_18 {dimension_numbers = #tpu.dot_dimension_numbers<[1], [0], [0], [1], [0, 0, 1, 1], [], []>} : vector<512x384xbf16>, vector<384x128xbf16>, vector<512x128xf32> -> vector<512x128xf32>
    %37 = arith.addf %22, %36 : vector<512x128xf32>
    %c1_i32_19 = arith.constant 1 : i32
    %38 = tpu.dynamic_rotate %9 by %c1_i32_19 dim 0 : vector<512x128xf32>, i32 -> vector<512x128xf32>
    %cst_20 = arith.constant 0.000000e+00 : f32
    %39 = vector.broadcast %cst_20 : f32 to vector<512x128xf32>
    %40 = arith.select %19, %38, %39 : vector<512x128xi1>, vector<512x128xf32>
    %c511_i32_21 = arith.constant 511 : i32
    %41 = tpu.dynamic_rotate %9 by %c511_i32_21 dim 0 : vector<512x128xf32>, i32 -> vector<512x128xf32>
    %cst_22 = arith.constant 0.000000e+00 : f32
    %42 = vector.broadcast %cst_22 : f32 to vector<512x128xf32>
    %43 = arith.select %21, %41, %42 : vector<512x128xi1>, vector<512x128xf32>
    %44 = tpu.concatenate %40, %9, %43 in 1 : vector<512x128xf32>, vector<512x128xf32>, vector<512x128xf32> -> vector<512x384xf32>
    %45 = arith.truncf %44 : vector<512x384xf32> to vector<512x384xbf16>
    %c1 = arith.constant 1 : index
    %c0_23 = arith.constant 0 : index
    %c0_24 = arith.constant 0 : index
    %46 = vector.load %arg4[%c1, %c0_23, %c0_24] : memref<3x384x128xbf16, #tpu.memory_space<vmem>>, vector<1x384x128xbf16>
    %47 = vector.shape_cast %46 : vector<1x384x128xbf16> to vector<384x128xbf16>
    %cst_25 = arith.constant dense<0.000000e+00> : vector<512x128xf32>
    %48 = tpu.matmul %45, %47, %cst_25 {dimension_numbers = #tpu.dot_dimension_numbers<[1], [0], [0], [1], [0, 0, 1, 1], [], []>} : vector<512x384xbf16>, vector<384x128xbf16>, vector<512x128xf32> -> vector<512x128xf32>
    %49 = arith.addf %37, %48 : vector<512x128xf32>
    %c496_i32 = arith.constant 496 : i32
    %50 = tpu.dynamic_rotate %9 by %c496_i32 dim 0 : vector<512x128xf32>, i32 -> vector<512x128xf32>
    %cst_26 = arith.constant 0.000000e+00 : f32
    %51 = vector.broadcast %cst_26 : f32 to vector<512x128xf32>
    %52 = arith.select %17, %50, %51 : vector<512x128xi1>, vector<512x128xf32>
    %c1_i32_27 = arith.constant 1 : i32
    %53 = tpu.dynamic_rotate %52 by %c1_i32_27 dim 0 : vector<512x128xf32>, i32 -> vector<512x128xf32>
    %cst_28 = arith.constant 0.000000e+00 : f32
    %54 = vector.broadcast %cst_28 : f32 to vector<512x128xf32>
    %55 = arith.select %19, %53, %54 : vector<512x128xi1>, vector<512x128xf32>
    %c511_i32_29 = arith.constant 511 : i32
    %56 = tpu.dynamic_rotate %52 by %c511_i32_29 dim 0 : vector<512x128xf32>, i32 -> vector<512x128xf32>
    %cst_30 = arith.constant 0.000000e+00 : f32
    %57 = vector.broadcast %cst_30 : f32 to vector<512x128xf32>
    %58 = arith.select %21, %56, %57 : vector<512x128xi1>, vector<512x128xf32>
    %59 = tpu.concatenate %55, %52, %58 in 1 : vector<512x128xf32>, vector<512x128xf32>, vector<512x128xf32> -> vector<512x384xf32>
    %60 = arith.truncf %59 : vector<512x384xf32> to vector<512x384xbf16>
    %c2 = arith.constant 2 : index
    %c0_31 = arith.constant 0 : index
    %c0_32 = arith.constant 0 : index
    %61 = vector.load %arg4[%c2, %c0_31, %c0_32] : memref<3x384x128xbf16, #tpu.memory_space<vmem>>, vector<1x384x128xbf16>
    %62 = vector.shape_cast %61 : vector<1x384x128xbf16> to vector<384x128xbf16>
    %cst_33 = arith.constant dense<0.000000e+00> : vector<512x128xf32>
    %63 = tpu.matmul %60, %62, %cst_33 {dimension_numbers = #tpu.dot_dimension_numbers<[1], [0], [0], [1], [0, 0, 1, 1], [], []>} : vector<512x384xbf16>, vector<384x128xbf16>, vector<512x128xf32> -> vector<512x128xf32>
    %64 = arith.addf %49, %63 : vector<512x128xf32>
    %c0_34 = arith.constant 0 : index
    %c0_35 = arith.constant 0 : index
    %c0_36 = arith.constant 0 : index
    %c0_37 = arith.constant 0 : index
    %65 = vector.load %arg1[%c0_34, %c0_35, %c0_36, %c0_37] : memref<2x16x16x4xf32, #tpu.memory_space<vmem>>, vector<2x16x16x4xf32>
    %66 = vector.shape_cast %65 : vector<2x16x16x4xf32> to vector<512x4xf32>
    %c0_38 = arith.constant 0 : index
    %c0_39 = arith.constant 0 : index
    %67 = vector.load %arg5[%c0_38, %c0_39] : memref<1x128xf32, #tpu.memory_space<vmem>>, vector<1x128xf32>
    %68 = vector.broadcast %67 : vector<1x128xf32> to vector<512x128xf32>
    %69 = arith.addf %64, %68 : vector<512x128xf32>
    %70 = vector.extract_strided_slice %69 {offsets = [0, 0], sizes = [512, 4], strides = [1, 1]} : vector<512x128xf32> to vector<512x4xf32>
    %71 = arith.addf %70, %66 : vector<512x4xf32>
    %cst_40 = arith.constant 0.000000e+00 : f32
    %72 = vector.broadcast %cst_40 : f32 to vector<512x4xf32>
    %73 = arith.maximumf %71, %72 : vector<512x4xf32>
    %74 = vector.shape_cast %73 : vector<512x4xf32> to vector<2x16x16x4xf32>
    %c0_41 = arith.constant 0 : index
    %c0_42 = arith.constant 0 : index
    %c0_43 = arith.constant 0 : index
    %c0_44 = arith.constant 0 : index
    %75 = vector.load %arg6[%c0_41, %c0_42, %c0_43, %c0_44] : memref<2x16x16x4xf32, #tpu.memory_space<vmem>>, vector<2x16x16x4xf32>
    tpu.vector_store %arg6[%c0_41, %c0_42, %c0_43, %c0_44], %74 {strides = array<i32>} : memref<2x16x16x4xf32, #tpu.memory_space<vmem>>, vector<2x16x16x4xf32>,
    return
  }
  func.func @transform_0(%arg0: i32) -> (i32, i32, i32, i32) {
    %c0_i32 = arith.constant 0 : i32
    %c0_i32_0 = arith.constant 0 : i32
    %c0_i32_1 = arith.constant 0 : i32
    %c0_i32_2 = arith.constant 0 : i32
    return %arg0, %c0_i32, %c0_i32_0, %c0_i32_1 : i32, i32, i32, i32
  }
  func.func @transform_1(%arg0: i32) -> (i32, i32) {
    %c0_i32 = arith.constant 0 : i32
    %c0_i32_0 = arith.constant 0 : i32
    %c0_i32_1 = arith.constant 0 : i32
    return %c0_i32, %c0_i32_0 : i32, i32
  }
  func.func @transform_2(%arg0: i32) -> (i32, i32) {
    %c0_i32 = arith.constant 0 : i32
    %c0_i32_0 = arith.constant 0 : i32
    %c0_i32_1 = arith.constant 0 : i32
    return %c0_i32, %c0_i32_0 : i32, i32
  }
  func.func @transform_3(%arg0: i32) -> (i32, i32, i32) {
    %c0_i32 = arith.constant 0 : i32
    %c0_i32_0 = arith.constant 0 : i32
    %c0_i32_1 = arith.constant 0 : i32
    %c0_i32_2 = arith.constant 0 : i32
    return %c0_i32, %c0_i32_0, %c0_i32_1 : i32, i32, i32
  }
  func.func @transform_4(%arg0: i32) -> (i32, i32) {
    %c0_i32 = arith.constant 0 : i32
    %c0_i32_0 = arith.constant 0 : i32
    %c0_i32_1 = arith.constant 0 : i32
    return %c0_i32, %c0_i32_0 : i32, i32
  }
  func.func @transform_5(%arg0: i32) -> (i32, i32, i32, i32) {
    %c0_i32 = arith.constant 0 : i32
    %c0_i32_0 = arith.constant 0 : i32
    %c0_i32_1 = arith.constant 0 : i32
    %c0_i32_2 = arith.constant 0 : i32
    return %arg0, %c0_i32, %c0_i32_0, %c0_i32_1 : i32, i32, i32, i32
  }
}

</mosaic_0001>

<llo_original>
// kernel: tpu_custom_call.1
$region0: #{tpu_custom_call.1}
  #allocation0 [shape = 'u32[]', space=smem, size = 0x4, offset = 0x4, fixed_abs, tag = 'smem constant byte address 0x4 - core index']
  #allocation1 [shape = 'u32[144,128]{1,0:T(1,128)}', space=vmem, size = 0x12000, scoped, tag = 'internal scratch']
  %s0 = inlined_call_operand.vmem [shape: f32[2,16,16,4], index: 0, kind: input, shape index: {}]
  %s1 = inlined_call_operand.vmem [shape: bf16[4,128], index: 1, kind: input, shape index: {}]
  %s2 = inlined_call_operand.vmem [shape: f32[1,128], index: 2, kind: input, shape index: {}]
  %s3 = inlined_call_operand.vmem [shape: bf16[3,384,128], index: 3, kind: input, shape index: {}]
  %s4 = inlined_call_operand.vmem [shape: f32[1,128], index: 4, kind: input, shape index: {}]
  %s5 = inlined_call_operand.vmem [shape: f32[2,16,16,4], index: 5, kind: output, shape index: {}]
  %s6 = sld [smem:[#allocation0]]
  $region30: #{tpu_custom_call.1} parent=0
    _
  %s8 = ssub.s32 1, %s6
  %s9 = scalar_select 0, %s8, %s6
  // Predicated region
  $region2: #{tpu_custom_call.1} parent=0 // pred_check
    _
  $region3: #{tpu_custom_call.1} parent=0 // pred_check_branch
    %11 = sbr.rel (0) target = $region5
  $region4: #{tpu_custom_call.1} parent=0 // pred_region
    _
  $region5: #{tpu_custom_call.1} parent=0 // pred_fallthru
    _
  // Predicated region
  $region6: #{tpu_custom_call.1} parent=0 // pred_check
    _
  $region7: #{tpu_custom_call.1} parent=0 // pred_check_branch
    %13 = sbr.rel (0) target = $region9
  $region8: #{tpu_custom_call.1} parent=0 // pred_region
    _
  $region9: #{tpu_custom_call.1} parent=0 // pred_fallthru
    _
  // Predicated region
  $region10: #{tpu_custom_call.1} parent=0 // pred_check
    _
  $region11: #{tpu_custom_call.1} parent=0 // pred_check_branch
    %15 = sbr.rel (0) target = $region13
  $region12: #{tpu_custom_call.1} parent=0 // pred_region
    _
  $region13: #{tpu_custom_call.1} parent=0 // pred_fallthru
    _
  // Predicated region
  $region14: #{tpu_custom_call.1} parent=0 // pred_check
    _
  $region15: #{tpu_custom_call.1} parent=0 // pred_check_branch
    %17 = sbr.rel (0) target = $region17
  $region16: #{tpu_custom_call.1} parent=0 // pred_region
    _
  $region17: #{tpu_custom_call.1} parent=0 // pred_fallthru
    _
  // Predicated region
  $region18: #{tpu_custom_call.1} parent=0 // pred_check
    _
  $region19: #{tpu_custom_call.1} parent=0 // pred_check_branch
    %19 = sbr.rel (0) target = $region21
  $region20: #{tpu_custom_call.1} parent=0 // pred_region
    _
  $region21: #{tpu_custom_call.1} parent=0 // pred_fallthru
    _
  %v21 = vld [vmem:[%s0] sm:$0xff]
  %v22 = vld [vmem:[%s0 + $0x8] sm:$0xff]
  %v23 = vld [vmem:[%s0 + $0x10] sm:$0xff]
  %v24 = vld [vmem:[%s0 + $0x18] sm:$0xff]
  %v25 = vld [vmem:[%s0 + $0x20] sm:$0xff]
  %v26 = vld [vmem:[%s0 + $0x28] sm:$0xff]
  %v27 = vld [vmem:[%s0 + $0x30] sm:$0xff]
  %v28 = vld [vmem:[%s0 + $0x38] sm:$0xff]
  %v29 = vld [vmem:[%s0 + $0x40] sm:$0xff]
  %v30 = vld [vmem:[%s0 + $0x48] sm:$0xff]
  %v31 = vld [vmem:[%s0 + $0x50] sm:$0xff]
  %v32 = vld [vmem:[%s0 + $0x58] sm:$0xff]
  %v33 = vld [vmem:[%s0 + $0x60] sm:$0xff]
  %v34 = vld [vmem:[%s0 + $0x68] sm:$0xff]
  %v35 = vld [vmem:[%s0 + $0x70] sm:$0xff]
  %v36 = vld [vmem:[%s0 + $0x78] sm:$0xff]
  %v37 = vld [vmem:[%s0 + $0x80] sm:$0xff]
  %v38 = vld [vmem:[%s0 + $0x88] sm:$0xff]
  %v39 = vld [vmem:[%s0 + $0x90] sm:$0xff]
  %v40 = vld [vmem:[%s0 + $0x98] sm:$0xff]
  %v41 = vld [vmem:[%s0 + $0xa0] sm:$0xff]
  %v42 = vld [vmem:[%s0 + $0xa8] sm:$0xff]
  %v43 = vld [vmem:[%s0 + $0xb0] sm:$0xff]
  %v44 = vld [vmem:[%s0 + $0xb8] sm:$0xff]
  %v45 = vld [vmem:[%s0 + $0xc0] sm:$0xff]
  %v46 = vld [vmem:[%s0 + $0xc8] sm:$0xff]
  %v47 = vld [vmem:[%s0 + $0xd0] sm:$0xff]
  %v48 = vld [vmem:[%s0 + $0xd8] sm:$0xff]
  %v49 = vld [vmem:[%s0 + $0xe0] sm:$0xff]
  %v50 = vld [vmem:[%s0 + $0xe8] sm:$0xff]
  %v51 = vld [vmem:[%s0 + $0xf0] sm:$0xff]
  %v52 = vld [vmem:[%s0 + $0xf8] sm:$0xff]
  %v53 = vld [vmem:[%s0 + $0x100] sm:$0xff]
  %v54 = vld [vmem:[%s0 + $0x108] sm:$0xff]
  %v55 = vld [vmem:[%s0 + $0x110] sm:$0xff]
  %v56 = vld [vmem:[%s0 + $0x118] sm:$0xff]
  %v57 = vld [vmem:[%s0 + $0x120] sm:$0xff]
  %v58 = vld [vmem:[%s0 + $0x128] sm:$0xff]
  %v59 = vld [vmem:[%s0 + $0x130] sm:$0xff]
  %v60 = vld [vmem:[%s0 + $0x138] sm:$0xff]
  %v61 = vld [vmem:[%s0 + $0x140] sm:$0xff]
  %v62 = vld [vmem:[%s0 + $0x148] sm:$0xff]
  %v63 = vld [vmem:[%s0 + $0x150] sm:$0xff]
  %v64 = vld [vmem:[%s0 + $0x158] sm:$0xff]
  %v65 = vld [vmem:[%s0 + $0x160] sm:$0xff]
  %v66 = vld [vmem:[%s0 + $0x168] sm:$0xff]
  %v67 = vld [vmem:[%s0 + $0x170] sm:$0xff]
  %v68 = vld [vmem:[%s0 + $0x178] sm:$0xff]
  %v69 = vld [vmem:[%s0 + $0x180] sm:$0xff]
  %v70 = vld [vmem:[%s0 + $0x188] sm:$0xff]
  %v71 = vld [vmem:[%s0 + $0x190] sm:$0xff]
  %v72 = vld [vmem:[%s0 + $0x198] sm:$0xff]
  %v73 = vld [vmem:[%s0 + $0x1a0] sm:$0xff]
  %v74 = vld [vmem:[%s0 + $0x1a8] sm:$0xff]
  %v75 = vld [vmem:[%s0 + $0x1b0] sm:$0xff]
  %v76 = vld [vmem:[%s0 + $0x1b8] sm:$0xff]
  %v77 = vld [vmem:[%s0 + $0x1c0] sm:$0xff]
  %v78 = vld [vmem:[%s0 + $0x1c8] sm:$0xff]
  %v79 = vld [vmem:[%s0 + $0x1d0] sm:$0xff]
  %v80 = vld [vmem:[%s0 + $0x1d8] sm:$0xff]
  %v81 = vld [vmem:[%s0 + $0x1e0] sm:$0xff]
  %v82 = vld [vmem:[%s0 + $0x1e8] sm:$0xff]
  %v83 = vld [vmem:[%s0 + $0x1f0] sm:$0xff]
  %v84 = vld [vmem:[%s0 + $0x1f8] sm:$0xff]
  %v85 = vpack.c.bf16 %v22, %v21
  %v86 = vpack.c.bf16 %v24, %v23
  %v87 = vpack.c.bf16 %v26, %v25
  %v88 = vpack.c.bf16 %v28, %v27
  %v89 = vpack.c.bf16 %v30, %v29
  %v90 = vpack.c.bf16 %v32, %v31
  %v91 = vpack.c.bf16 %v34, %v33
  %v92 = vpack.c.bf16 %v36, %v35
  %v93 = vpack.c.bf16 %v38, %v37
  %v94 = vpack.c.bf16 %v40, %v39
  %v95 = vpack.c.bf16 %v42, %v41
  %v96 = vpack.c.bf16 %v44, %v43
  %v97 = vpack.c.bf16 %v46, %v45
  %v98 = vpack.c.bf16 %v48, %v47
  %v99 = vpack.c.bf16 %v50, %v49
  %v100 = vpack.c.bf16 %v52, %v51
  %v101 = vpack.c.bf16 %v54, %v53
  %v102 = vpack.c.bf16 %v56, %v55
  %v103 = vpack.c.bf16 %v58, %v57
  %v104 = vpack.c.bf16 %v60, %v59
  %v105 = vpack.c.bf16 %v62, %v61
  %v106 = vpack.c.bf16 %v64, %v63
  %v107 = vpack.c.bf16 %v66, %v65
  %v108 = vpack.c.bf16 %v68, %v67
  %v109 = vpack.c.bf16 %v70, %v69
  %v110 = vpack.c.bf16 %v72, %v71
  %v111 = vpack.c.bf16 %v74, %v73
  %v112 = vpack.c.bf16 %v76, %v75
  %v113 = vpack.c.bf16 %v78, %v77
  %v114 = vpack.c.bf16 %v80, %v79
  %v115 = vpack.c.bf16 %v82, %v81
  %v116 = vpack.c.bf16 %v84, %v83
  %v117 = vld [vmem:[%s1] sm:$0x3]
  %v118 = vld [vmem:[%s2] sm:$0x1]
  %v120 = vlaneseq
  %v121 = vshrl.u32 %v120, 7
  %v122 = vsub.s32 0, %v121
  %v123 = vrot.slane %v118, %v122
  %vm125 = vcmask 31744
  %v127 = vsel %vm125, %v85, 0
  %v130 = vsel %vm125, %v86, 0
  %v133 = vsel %vm125, %v87, 0
  %v136 = vsel %vm125, %v88, 0
  %v139 = vsel %vm125, %v89, 0
  %v142 = vsel %vm125, %v90, 0
  %v145 = vsel %vm125, %v91, 0
  %v148 = vsel %vm125, %v92, 0
  %v151 = vsel %vm125, %v93, 0
  %v154 = vsel %vm125, %v94, 0
  %v157 = vsel %vm125, %v95, 0
  %v160 = vsel %vm125, %v96, 0
  %v163 = vsel %vm125, %v97, 0
  %v166 = vsel %vm125, %v98, 0
  %v169 = vsel %vm125, %v99, 0
  %v172 = vsel %vm125, %v100, 0
  %v175 = vsel %vm125, %v101, 0
  %v178 = vsel %vm125, %v102, 0
  %v181 = vsel %vm125, %v103, 0
  %v184 = vsel %vm125, %v104, 0
  %v187 = vsel %vm125, %v105, 0
  %v190 = vsel %vm125, %v106, 0
  %v193 = vsel %vm125, %v107, 0
  %v196 = vsel %vm125, %v108, 0
  %v199 = vsel %vm125, %v109, 0
  %v202 = vsel %vm125, %v110, 0
  %v205 = vsel %vm125, %v111, 0
  %v208 = vsel %vm125, %v112, 0
  %v211 = vsel %vm125, %v113, 0
  %v214 = vsel %vm125, %v114, 0
  %v217 = vsel %vm125, %v115, 0
  %v220 = vsel %vm125, %v116, 0
  %vm222 = vcmask 1041408
  %v224 = vsel %vm222, %v117, 0
  %226 = vmatprep.subr.bf16.mxu0 0
  %227 = vmatpush1.bf16.msra.mxu0 %v224
  %228 = vmatprep.subr.bf16.mxu0 0
  %229 = vmatpush1.bf16.msra.mxu0 0
  %230 = vmatprep.subr.bf16.mxu0 0
  %231 = vmatpush1.bf16.msra.mxu0 0
  %232 = vmatprep.subr.bf16.mxu0 0
  %233 = vmatpush1.bf16.msra.mxu0 0
  %234 = vmatprep.subr.bf16.mxu0 0
  %235 = vmatpush1.bf16.msra.mxu0 0
  %236 = vmatprep.subr.bf16.mxu0 0
  %237 = vmatpush1.bf16.msra.mxu0 0
  %238 = vmatprep.subr.bf16.mxu0 0
  %239 = vmatpush1.bf16.msra.mxu0 0
  %240 = vmatprep.subr.bf16.mxu0 0
  %241 = vmatpush1.bf16.msra.mxu0 0
  %242 = vmatprep.subr.bf16.mxu0 0
  %243 = vmatpush1.bf16.msra.mxu0 0
  %244 = vmatprep.subr.bf16.mxu0 0
  %245 = vmatpush1.bf16.msra.mxu0 0
  %246 = vmatprep.subr.bf16.mxu0 0
  %247 = vmatpush1.bf16.msra.mxu0 0
  %248 = vmatprep.subr.bf16.mxu0 0
  %249 = vmatpush1.bf16.msra.mxu0 0
  %250 = vmatprep.subr.bf16.mxu0 0
  %251 = vmatpush1.bf16.msra.mxu0 0
  %252 = vmatprep.subr.bf16.mxu0 0
  %253 = vmatpush1.bf16.msra.mxu0 0
  %254 = vmatprep.subr.bf16.mxu0 0
  %255 = vmatpush1.bf16.msra.mxu0 0
  %256 = vmatprep.subr.bf16.mxu0 0
  %257 = vmatpush1.bf16.msra.mxu0 0
  %258 = vmatprep.mubr.bf16.mxu0 0
  %259 = vmatmul.mubr.bf16.gmra.mrb[0].mxu0 %v127
  %v260 = vpop.f32.mrb[0].mxu0
  %v261 = vadd.f32 %v123, %v260
  %v262 = vpop.f32.mrb[0].mxu0
  %v263 = vpop.f32.mrb[0].mxu0
  %v264 = vadd.f32 %v123, %v263
  %v265 = vpop.f32.mrb[0].mxu0
  %266 = vmatprep.mubr.bf16.mxu0 0
  %267 = vmatmul.mubr.bf16.gmra.mrb[0].mxu0 %v130
  %v268 = vpop.f32.mrb[0].mxu0
  %v269 = vadd.f32 %v123, %v268
  %v270 = vpop.f32.mrb[0].mxu0
  %v271 = vpop.f32.mrb[0].mxu0
  %v272 = vadd.f32 %v123, %v271
  %v273 = vpop.f32.mrb[0].mxu0
  %274 = vmatprep.mubr.bf16.mxu0 0
  %275 = vmatmul.mubr.bf16.gmra.mrb[0].mxu0 %v133
  %v276 = vpop.f32.mrb[0].mxu0
  %v277 = vadd.f32 %v123, %v276
  %v278 = vpop.f32.mrb[0].mxu0
  %v279 = vpop.f32.mrb[0].mxu0
  %v280 = vadd.f32 %v123, %v279
  %v281 = vpop.f32.mrb[0].mxu0
  %282 = vmatprep.mubr.bf16.mxu0 0
  %283 = vmatmul.mubr.bf16.gmra.mrb[0].mxu0 %v136
  %v284 = vpop.f32.mrb[0].mxu0
  %v285 = vadd.f32 %v123, %v284
  %v286 = vpop.f32.mrb[0].mxu0
  %v287 = vpop.f32.mrb[0].mxu0
  %v288 = vadd.f32 %v123, %v287
  %v289 = vpop.f32.mrb[0].mxu0
  %290 = vmatprep.mubr.bf16.mxu0 0
  %291 = vmatmul.mubr.bf16.gmra.mrb[0].mxu0 %v139
  %v292 = vpop.f32.mrb[0].mxu0
  %v293 = vadd.f32 %v123, %v292
  %v294 = vpop.f32.mrb[0].mxu0
  %v295 = vpop.f32.mrb[0].mxu0
  %v296 = vadd.f32 %v123, %v295
  %v297 = vpop.f32.mrb[0].mxu0
  %298 = vmatprep.mubr.bf16.mxu0 0
  %299 = vmatmul.mubr.bf16.gmra.mrb[0].mxu0 %v142
  %v300 = vpop.f32.mrb[0].mxu0
  %v301 = vadd.f32 %v123, %v300
  %v302 = vpop.f32.mrb[0].mxu0
  %v303 = vpop.f32.mrb[0].mxu0
  %v304 = vadd.f32 %v123, %v303
  %v305 = vpop.f32.mrb[0].mxu0
  %306 = vmatprep.mubr.bf16.mxu0 0
  %307 = vmatmul.mubr.bf16.gmra.mrb[0].mxu0 %v145
  %v308 = vpop.f32.mrb[0].mxu0
  %v309 = vadd.f32 %v123, %v308
  %v310 = vpop.f32.mrb[0].mxu0
  %v311 = vpop.f32.mrb[0].mxu0
  %v312 = vadd.f32 %v123, %v311
  %v313 = vpop.f32.mrb[0].mxu0
  %314 = vmatprep.mubr.bf16.mxu0 0
  %315 = vmatmul.mubr.bf16.gmra.mrb[0].mxu0 %v148
  %v316 = vpop.f32.mrb[0].mxu0
  %v317 = vadd.f32 %v123, %v316
  %v318 = vpop.f32.mrb[0].mxu0
  %v319 = vpop.f32.mrb[0].mxu0
  %v320 = vadd.f32 %v123, %v319
  %v321 = vpop.f32.mrb[0].mxu0
  %322 = vmatprep.mubr.bf16.mxu0 0
  %323 = vmatmul.mubr.bf16.gmra.mrb[0].mxu0 %v151
  %v324 = vpop.f32.mrb[0].mxu0
  %v325 = vadd.f32 %v123, %v324
  %v326 = vpop.f32.mrb[0].mxu0
  %v327 = vpop.f32.mrb[0].mxu0
  %v328 = vadd.f32 %v123, %v327
  %v329 = vpop.f32.mrb[0].mxu0
  %330 = vmatprep.mubr.bf16.mxu0 0
  %331 = vmatmul.mubr.bf16.gmra.mrb[0].mxu0 %v154
  %v332 = vpop.f32.mrb[0].mxu0
  %v333 = vadd.f32 %v123, %v332
  %v334 = vpop.f32.mrb[0].mxu0
  %v335 = vpop.f32.mrb[0].mxu0
  %v336 = vadd.f32 %v123, %v335
  %v337 = vpop.f32.mrb[0].mxu0
  %338 = vmatprep.mubr.bf16.mxu0 0
  %339 = vmatmul.mubr.bf16.gmra.mrb[0].mxu0 %v157
  %v340 = vpop.f32.mrb[0].mxu0
  %v341 = vadd.f32 %v123, %v340
  %v342 = vpop.f32.mrb[0].mxu0
  %v343 = vpop.f32.mrb[0].mxu0
  %v344 = vadd.f32 %v123, %v343
  %v345 = vpop.f32.mrb[0].mxu0
  %346 = vmatprep.mubr.bf16.mxu0 0
  %347 = vmatmul.mubr.bf16.gmra.mrb[0].mxu0 %v160
  %v348 = vpop.f32.mrb[0].mxu0
  %v349 = vadd.f32 %v123, %v348
  %v350 = vpop.f32.mrb[0].mxu0
  %v351 = vpop.f32.mrb[0].mxu0
  %v352 = vadd.f32 %v123, %v351
  %v353 = vpop.f32.mrb[0].mxu0
  %354 = vmatprep.mubr.bf16.mxu0 0
  %355 = vmatmul.mubr.bf16.gmra.mrb[0].mxu0 %v163
  %v356 = vpop.f32.mrb[0].mxu0
  %v357 = vadd.f32 %v123, %v356
  %v358 = vpop.f32.mrb[0].mxu0
  %v359 = vpop.f32.mrb[0].mxu0
  %v360 = vadd.f32 %v123, %v359
  %v361 = vpop.f32.mrb[0].mxu0
  %362 = vmatprep.mubr.bf16.mxu0 0
  %363 = vmatmul.mubr.bf16.gmra.mrb[0].mxu0 %v166
  %v364 = vpop.f32.mrb[0].mxu0
  %v365 = vadd.f32 %v123, %v364
  %v366 = vpop.f32.mrb[0].mxu0
  %v367 = vpop.f32.mrb[0].mxu0
  %v368 = vadd.f32 %v123, %v367
  %v369 = vpop.f32.mrb[0].mxu0
  %370 = vmatprep.mubr.bf16.mxu0 0
  %371 = vmatmul.mubr.bf16.gmra.mrb[0].mxu0 %v169
  %v372 = vpop.f32.mrb[0].mxu0
  %v373 = vadd.f32 %v123, %v372
  %v374 = vpop.f32.mrb[0].mxu0
  %v375 = vpop.f32.mrb[0].mxu0
  %v376 = vadd.f32 %v123, %v375
  %v377 = vpop.f32.mrb[0].mxu0
  %378 = vmatprep.mubr.bf16.mxu0 0
  %379 = vmatmul.mubr.bf16.gmra.mrb[0].mxu0 %v172
  %v380 = vpop.f32.mrb[0].mxu0
  %v381 = vadd.f32 %v123, %v380
  %v382 = vpop.f32.mrb[0].mxu0
  %v383 = vpop.f32.mrb[0].mxu0
  %v384 = vadd.f32 %v123, %v383
  %v385 = vpop.f32.mrb[0].mxu0
  %386 = vmatprep.mubr.bf16.mxu0 0
  %387 = vmatmul.mubr.bf16.gmra.mrb[0].mxu0 %v175
  %v388 = vpop.f32.mrb[0].mxu0
  %v389 = vadd.f32 %v123, %v388
  %v390 = vpop.f32.mrb[0].mxu0
  %v391 = vpop.f32.mrb[0].mxu0
  %v392 = vadd.f32 %v123, %v391
  %v393 = vpop.f32.mrb[0].mxu0
  %394 = vmatprep.mubr.bf16.mxu0 0
  %395 = vmatmul.mubr.bf16.gmra.mrb[0].mxu0 %v178
  %v396 = vpop.f32.mrb[0].mxu0
  %v397 = vadd.f32 %v123, %v396
  %v398 = vpop.f32.mrb[0].mxu0
  %v399 = vpop.f32.mrb[0].mxu0
  %v400 = vadd.f32 %v123, %v399
  %v401 = vpop.f32.mrb[0].mxu0
  %402 = vmatprep.mubr.bf16.mxu0 0
  %403 = vmatmul.mubr.bf16.gmra.mrb[0].mxu0 %v181
  %v404 = vpop.f32.mrb[0].mxu0
  %v405 = vadd.f32 %v123, %v404
  %v406 = vpop.f32.mrb[0].mxu0
  %v407 = vpop.f32.mrb[0].mxu0
  %v408 = vadd.f32 %v123, %v407
  %v409 = vpop.f32.mrb[0].mxu0
  %410 = vmatprep.mubr.bf16.mxu0 0
  %411 = vmatmul.mubr.bf16.gmra.mrb[0].mxu0 %v184
  %v412 = vpop.f32.mrb[0].mxu0
  %v413 = vadd.f32 %v123, %v412
  %v414 = vpop.f32.mrb[0].mxu0
  %v415 = vpop.f32.mrb[0].mxu0
  %v416 = vadd.f32 %v123, %v415
  %v417 = vpop.f32.mrb[0].mxu0
  %418 = vmatprep.mubr.bf16.mxu0 0
  %419 = vmatmul.mubr.bf16.gmra.mrb[0].mxu0 %v187
  %v420 = vpop.f32.mrb[0].mxu0
  %v421 = vadd.f32 %v123, %v420
  %v422 = vpop.f32.mrb[0].mxu0
  %v423 = vpop.f32.mrb[0].mxu0
  %v424 = vadd.f32 %v123, %v423
  %v425 = vpop.f32.mrb[0].mxu0
  %426 = vmatprep.mubr.bf16.mxu0 0
  %427 = vmatmul.mubr.bf16.gmra.mrb[0].mxu0 %v190
  %v428 = vpop.f32.mrb[0].mxu0
  %v429 = vadd.f32 %v123, %v428
  %v430 = vpop.f32.mrb[0].mxu0
  %v431 = vpop.f32.mrb[0].mxu0
  %v432 = vadd.f32 %v123, %v431
  %v433 = vpop.f32.mrb[0].mxu0
  %434 = vmatprep.mubr.bf16.mxu0 0
  %435 = vmatmul.mubr.bf16.gmra.mrb[0].mxu0 %v193
  %v436 = vpop.f32.mrb[0].mxu0
  %v437 = vadd.f32 %v123, %v436
  %v438 = vpop.f32.mrb[0].mxu0
  %v439 = vpop.f32.mrb[0].mxu0
  %v440 = vadd.f32 %v123, %v439
  %v441 = vpop.f32.mrb[0].mxu0
  %442 = vmatprep.mubr.bf16.mxu0 0
  %443 = vmatmul.mubr.bf16.gmra.mrb[0].mxu0 %v196
  %v444 = vpop.f32.mrb[0].mxu0
  %v445 = vadd.f32 %v123, %v444
  %v446 = vpop.f32.mrb[0].mxu0
  %v447 = vpop.f32.mrb[0].mxu0
  %v448 = vadd.f32 %v123, %v447
  %v449 = vpop.f32.mrb[0].mxu0
  %450 = vmatprep.mubr.bf16.mxu0 0
  %451 = vmatmul.mubr.bf16.gmra.mrb[0].mxu0 %v199
  %v452 = vpop.f32.mrb[0].mxu0
  %v453 = vadd.f32 %v123, %v452
  %v454 = vpop.f32.mrb[0].mxu0
  %v455 = vpop.f32.mrb[0].mxu0
  %v456 = vadd.f32 %v123, %v455
  %v457 = vpop.f32.mrb[0].mxu0
  %458 = vmatprep.mubr.bf16.mxu0 0
  %459 = vmatmul.mubr.bf16.gmra.mrb[0].mxu0 %v202
  %v460 = vpop.f32.mrb[0].mxu0
  %v461 = vadd.f32 %v123, %v460
  %v462 = vpop.f32.mrb[0].mxu0
  %v463 = vpop.f32.mrb[0].mxu0
  %v464 = vadd.f32 %v123, %v463
  %v465 = vpop.f32.mrb[0].mxu0
  %466 = vmatprep.mubr.bf16.mxu0 0
  %467 = vmatmul.mubr.bf16.gmra.mrb[0].mxu0 %v205
  %v468 = vpop.f32.mrb[0].mxu0
  %v469 = vadd.f32 %v123, %v468
  %v470 = vpop.f32.mrb[0].mxu0
  %v471 = vpop.f32.mrb[0].mxu0
  %v472 = vadd.f32 %v123, %v471
  %v473 = vpop.f32.mrb[0].mxu0
  %474 = vmatprep.mubr.bf16.mxu0 0
  %475 = vmatmul.mubr.bf16.gmra.mrb[0].mxu0 %v208
  %v476 = vpop.f32.mrb[0].mxu0
  %v477 = vadd.f32 %v123, %v476
  %v478 = vpop.f32.mrb[0].mxu0
  %v479 = vpop.f32.mrb[0].mxu0
  %v480 = vadd.f32 %v123, %v479
  %v481 = vpop.f32.mrb[0].mxu0
  %482 = vmatprep.mubr.bf16.mxu0 0
  %483 = vmatmul.mubr.bf16.gmra.mrb[0].mxu0 %v211
  %v484 = vpop.f32.mrb[0].mxu0
  %v485 = vadd.f32 %v123, %v484
  %v486 = vpop.f32.mrb[0].mxu0
  %v487 = vpop.f32.mrb[0].mxu0
  %v488 = vadd.f32 %v123, %v487
  %v489 = vpop.f32.mrb[0].mxu0
  %490 = vmatprep.mubr.bf16.mxu0 0
  %491 = vmatmul.mubr.bf16.gmra.mrb[0].mxu0 %v214
  %v492 = vpop.f32.mrb[0].mxu0
  %v493 = vadd.f32 %v123, %v492
  %v494 = vpop.f32.mrb[0].mxu0
  %v495 = vpop.f32.mrb[0].mxu0
  %v496 = vadd.f32 %v123, %v495
  %v497 = vpop.f32.mrb[0].mxu0
  %498 = vmatprep.mubr.bf16.mxu0 0
  %499 = vmatmul.mubr.bf16.gmra.mrb[0].mxu0 %v217
  %v500 = vpop.f32.mrb[0].mxu0
  %v501 = vadd.f32 %v123, %v500
  %v502 = vpop.f32.mrb[0].mxu0
  %v503 = vpop.f32.mrb[0].mxu0
  %v504 = vadd.f32 %v123, %v503
  %v505 = vpop.f32.mrb[0].mxu0
  %506 = vmatprep.mubr.bf16.mxu0 0
  %507 = vmatmul.mubr.bf16.gmra.mrb[0].mxu0 %v220
  %v508 = vpop.f32.mrb[0].mxu0
  %v509 = vadd.f32 %v123, %v508
  %v510 = vpop.f32.mrb[0].mxu0
  %v511 = vpop.f32.mrb[0].mxu0
  %v512 = vadd.f32 %v123, %v511
  %v513 = vpop.f32.mrb[0].mxu0
  %514 = vdwg.mxu0
  %v515 = vmax.f32 %v261, 0.0
  %v516 = vmax.f32 %v264, 0.0
  %v517 = vmax.f32 %v269, 0.0
  %v518 = vmax.f32 %v272, 0.0
  %v519 = vmax.f32 %v277, 0.0
  %v520 = vmax.f32 %v280, 0.0
  %v521 = vmax.f32 %v285, 0.0
  %v522 = vmax.f32 %v288, 0.0
  %v523 = vmax.f32 %v293, 0.0
  %v524 = vmax.f32 %v296, 0.0
  %v525 = vmax.f32 %v301, 0.0
  %v526 = vmax.f32 %v304, 0.0
  %v527 = vmax.f32 %v309, 0.0
  %v528 = vmax.f32 %v312, 0.0
  %v529 = vmax.f32 %v317, 0.0
  %v530 = vmax.f32 %v320, 0.0
  %v531 = vmax.f32 %v325, 0.0
  %v532 = vmax.f32 %v328, 0.0
  %v533 = vmax.f32 %v333, 0.0
  %v534 = vmax.f32 %v336, 0.0
  %v535 = vmax.f32 %v341, 0.0
  %v536 = vmax.f32 %v344, 0.0
  %v537 = vmax.f32 %v349, 0.0
  %v538 = vmax.f32 %v352, 0.0
  %v539 = vmax.f32 %v357, 0.0
  %v540 = vmax.f32 %v360, 0.0
  %v541 = vmax.f32 %v365, 0.0
  %v542 = vmax.f32 %v368, 0.0
  %v543 = vmax.f32 %v373, 0.0
  %v544 = vmax.f32 %v376, 0.0
  %v545 = vmax.f32 %v381, 0.0
  %v546 = vmax.f32 %v384, 0.0
  %v547 = vmax.f32 %v389, 0.0
  %v548 = vmax.f32 %v392, 0.0
  %v549 = vmax.f32 %v397, 0.0
  %v550 = vmax.f32 %v400, 0.0
  %v551 = vmax.f32 %v405, 0.0
  %v552 = vmax.f32 %v408, 0.0
  %v553 = vmax.f32 %v413, 0.0
  %v554 = vmax.f32 %v416, 0.0
  %v555 = vmax.f32 %v421, 0.0
  %v556 = vmax.f32 %v424, 0.0
  %v557 = vmax.f32 %v429, 0.0
  %v558 = vmax.f32 %v432, 0.0
  %v559 = vmax.f32 %v437, 0.0
  %v560 = vmax.f32 %v440, 0.0
  %v561 = vmax.f32 %v445, 0.0
  %v562 = vmax.f32 %v448, 0.0
  %v563 = vmax.f32 %v453, 0.0
  %v564 = vmax.f32 %v456, 0.0
  %v565 = vmax.f32 %v461, 0.0
  %v566 = vmax.f32 %v464, 0.0
  %v567 = vmax.f32 %v469, 0.0
  %v568 = vmax.f32 %v472, 0.0
  %v569 = vmax.f32 %v477, 0.0
  %v570 = vmax.f32 %v480, 0.0
  %v571 = vmax.f32 %v485, 0.0
  %v572 = vmax.f32 %v488, 0.0
  %v573 = vmax.f32 %v493, 0.0
  %v574 = vmax.f32 %v496, 0.0
  %v575 = vmax.f32 %v501, 0.0
  %v576 = vmax.f32 %v504, 0.0
  %v577 = vmax.f32 %v509, 0.0
  %v578 = vmax.f32 %v512, 0.0
  %v579 = vlaneseq
  %v580 = vshrl.u32 %v579, 7
  %v581 = vadd.s32 %v580, 8
  %vm582 = vcmp.ge.s32.totalorder %v580, 1
  %vm583 = vcmp.ge.s32.totalorder %v581, 1
  %vm584 = vcmp.le.s32.totalorder %v580, 14
  %vm585 = vcmp.le.s32.totalorder %v581, 14
  %v586 = vrot.slane %v515, 7
  %v587 = vrot.slane %v516, 7
  %v588 = vrot.slane %v517, 7
  %v589 = vrot.slane %v518, 7
  %v590 = vrot.slane %v519, 7
  %v591 = vrot.slane %v520, 7
  %v592 = vrot.slane %v521, 7
  %v593 = vrot.slane %v522, 7
  %v594 = vrot.slane %v523, 7
  %v595 = vrot.slane %v524, 7
  %v596 = vrot.slane %v525, 7
  %v597 = vrot.slane %v526, 7
  %v598 = vrot.slane %v527, 7
  %v599 = vrot.slane %v528, 7
  %v600 = vrot.slane %v529, 7
  %v601 = vrot.slane %v530, 7
  %v602 = vrot.slane %v531, 7
  %v603 = vrot.slane %v532, 7
  %v604 = vrot.slane %v533, 7
  %v605 = vrot.slane %v534, 7
  %v606 = vrot.slane %v535, 7
  %v607 = vrot.slane %v536, 7
  %v608 = vrot.slane %v537, 7
  %v609 = vrot.slane %v538, 7
  %v610 = vrot.slane %v539, 7
  %v611 = vrot.slane %v540, 7
  %v612 = vrot.slane %v541, 7
  %v613 = vrot.slane %v542, 7
  %v614 = vrot.slane %v543, 7
  %v615 = vrot.slane %v544, 7
  %v616 = vrot.slane %v547, 7
  %v617 = vrot.slane %v548, 7
  %v618 = vrot.slane %v549, 7
  %v619 = vrot.slane %v550, 7
  %v620 = vrot.slane %v551, 7
  %v621 = vrot.slane %v552, 7
  %v622 = vrot.slane %v553, 7
  %v623 = vrot.slane %v554, 7
  %v624 = vrot.slane %v555, 7
  %v625 = vrot.slane %v556, 7
  %v626 = vrot.slane %v557, 7
  %v627 = vrot.slane %v558, 7
  %v628 = vrot.slane %v559, 7
  %v629 = vrot.slane %v560, 7
  %v630 = vrot.slane %v561, 7
  %v631 = vrot.slane %v562, 7
  %v632 = vrot.slane %v563, 7
  %v633 = vrot.slane %v564, 7
  %v634 = vrot.slane %v565, 7
  %v635 = vrot.slane %v566, 7
  %v636 = vrot.slane %v567, 7
  %v637 = vrot.slane %v568, 7
  %v638 = vrot.slane %v569, 7
  %v639 = vrot.slane %v570, 7
  %v640 = vrot.slane %v571, 7
  %v641 = vrot.slane %v572, 7
  %v642 = vrot.slane %v573, 7
  %v643 = vrot.slane %v574, 7
  %v644 = vrot.slane %v575, 7
  %v645 = vrot.slane %v576, 7
  %vm646 = vcmp.lt.s32.totalorder %v580, 1
  %v647 = vsel %vm646, %v644, %v645
  %v648 = vsel %vm646, %v643, %v644
  %v649 = vsel %vm646, %v642, %v643
  %v650 = vsel %vm646, %v641, %v642
  %v651 = vsel %vm646, %v640, %v641
  %v652 = vsel %vm646, %v639, %v640
  %v653 = vsel %vm646, %v638, %v639
  %v654 = vsel %vm646, %v637, %v638
  %v655 = vsel %vm646, %v636, %v637
  %v656 = vsel %vm646, %v635, %v636
  %v657 = vsel %vm646, %v634, %v635
  %v658 = vsel %vm646, %v633, %v634
  %v659 = vsel %vm646, %v632, %v633
  %v660 = vsel %vm646, %v631, %v632
  %v661 = vsel %vm646, %v630, %v631
  %v662 = vsel %vm646, %v629, %v630
  %v663 = vsel %vm646, %v628, %v629
  %v664 = vsel %vm646, %v627, %v628
  %v665 = vsel %vm646, %v626, %v627
  %v666 = vsel %vm646, %v625, %v626
  %v667 = vsel %vm646, %v624, %v625
  %v668 = vsel %vm646, %v623, %v624
  %v669 = vsel %vm646, %v622, %v623
  %v670 = vsel %vm646, %v621, %v622
  %v671 = vsel %vm646, %v620, %v621
  %v672 = vsel %vm646, %v619, %v620
  %v673 = vsel %vm646, %v618, %v619
  %v674 = vsel %vm646, %v617, %v618
  %v675 = vsel %vm646, %v616, %v617
  %v676 = vsel %vm646, 0.0, %v616
  %v677 = vsel %vm646, %v615, 0.0
  %v678 = vsel %vm646, %v614, %v615
  %v679 = vsel %vm646, %v613, %v614
  %v680 = vsel %vm646, %v612, %v613
  %v681 = vsel %vm646, %v611, %v612
  %v682 = vsel %vm646, %v610, %v611
  %v683 = vsel %vm646, %v609, %v610
  %v684 = vsel %vm646, %v608, %v609
  %v685 = vsel %vm646, %v607, %v608
  %v686 = vsel %vm646, %v606, %v607
  %v687 = vsel %vm646, %v605, %v606
  %v688 = vsel %vm646, %v604, %v605
  %v689 = vsel %vm646, %v603, %v604
  %v690 = vsel %vm646, %v602, %v603
  %v691 = vsel %vm646, %v601, %v602
  %v692 = vsel %vm646, %v600, %v601
  %v693 = vsel %vm646, %v599, %v600
  %v694 = vsel %vm646, %v598, %v599
  %v695 = vsel %vm646, %v597, %v598
  %v696 = vsel %vm646, %v596, %v597
  %v697 = vsel %vm646, %v595, %v596
  %v698 = vsel %vm646, %v594, %v595
  %v699 = vsel %vm646, %v593, %v594
  %v700 = vsel %vm646, %v592, %v593
  %v701 = vsel %vm646, %v591, %v592
  %v702 = vsel %vm646, %v590, %v591
  %v703 = vsel %vm646, %v589, %v590
  %v704 = vsel %vm646, %v588, %v589
  %v705 = vsel %vm646, %v587, %v588
  %v706 = vsel %vm646, %v586, %v587
  %v707 = vsel %vm646, 0.0, %v586
  %v708 = vsel %vm646, %v645, 0.0
  %v709 = vsel %vm582, %v708, 0.0
  %v710 = vsel %vm583, 0.0, 0.0
  %v711 = vsel %vm582, %v707, 0.0
  %v712 = vsel %vm583, %v706, 0.0
  %v713 = vsel %vm582, %v705, 0.0
  %v714 = vsel %vm583, %v704, 0.0
  %v715 = vsel %vm582, %v703, 0.0
  %v716 = vsel %vm583, %v702, 0.0
  %v717 = vsel %vm582, %v701, 0.0
  %v718 = vsel %vm583, %v700, 0.0
  %v719 = vsel %vm582, %v699, 0.0
  %v720 = vsel %vm583, %v698, 0.0
  %v721 = vsel %vm582, %v697, 0.0
  %v722 = vsel %vm583, %v696, 0.0
  %v723 = vsel %vm582, %v695, 0.0
  %v724 = vsel %vm583, %v694, 0.0
  %v725 = vsel %vm582, %v693, 0.0
  %v726 = vsel %vm583, %v692, 0.0
  %v727 = vsel %vm582, %v691, 0.0
  %v728 = vsel %vm583, %v690, 0.0
  %v729 = vsel %vm582, %v689, 0.0
  %v730 = vsel %vm583, %v688, 0.0
  %v731 = vsel %vm582, %v687, 0.0
  %v732 = vsel %vm583, %v686, 0.0
  %v733 = vsel %vm582, %v685, 0.0
  %v734 = vsel %vm583, %v684, 0.0
  %v735 = vsel %vm582, %v683, 0.0
  %v736 = vsel %vm583, %v682, 0.0
  %v737 = vsel %vm582, %v681, 0.0
  %v738 = vsel %vm583, %v680, 0.0
  %v739 = vsel %vm582, %v679, 0.0
  %v740 = vsel %vm583, %v678, 0.0
  %v741 = vsel %vm582, %v677, 0.0
  %v742 = vsel %vm582, %v676, 0.0
  %v743 = vsel %vm583, %v675, 0.0
  %v744 = vsel %vm582, %v674, 0.0
  %v745 = vsel %vm583, %v673, 0.0
  %v746 = vsel %vm582, %v672, 0.0
  %v747 = vsel %vm583, %v671, 0.0
  %v748 = vsel %vm582, %v670, 0.0
  %v749 = vsel %vm583, %v669, 0.0
  %v750 = vsel %vm582, %v668, 0.0
  %v751 = vsel %vm583, %v667, 0.0
  %v752 = vsel %vm582, %v666, 0.0
  %v753 = vsel %vm583, %v665, 0.0
  %v754 = vsel %vm582, %v664, 0.0
  %v755 = vsel %vm583, %v663, 0.0
  %v756 = vsel %vm582, %v662, 0.0
  %v757 = vsel %vm583, %v661, 0.0
  %v758 = vsel %vm582, %v660, 0.0
  %v759 = vsel %vm583, %v659, 0.0
  %v760 = vsel %vm582, %v658, 0.0
  %v761 = vsel %vm583, %v657, 0.0
  %v762 = vsel %vm582, %v656, 0.0
  %v763 = vsel %vm583, %v655, 0.0
  %v764 = vsel %vm582, %v654, 0.0
  %v765 = vsel %vm583, %v653, 0.0
  %v766 = vsel %vm582, %v652, 0.0
  %v767 = vsel %vm583, %v651, 0.0
  %v768 = vsel %vm582, %v650, 0.0
  %v769 = vsel %vm583, %v649, 0.0
  %v770 = vsel %vm582, %v648, 0.0
  %v771 = vsel %vm583, %v647, 0.0
  %v772 = vrot.slane %v515, 1
  %v773 = vrot.slane %v516, 1
  %v774 = vrot.slane %v517, 1
  %v775 = vrot.slane %v518, 1
  %v776 = vrot.slane %v519, 1
  %v777 = vrot.slane %v520, 1
  %v778 = vrot.slane %v521, 1
  %v779 = vrot.slane %v522, 1
  %v780 = vrot.slane %v523, 1
  %v781 = vrot.slane %v524, 1
  %v782 = vrot.slane %v525, 1
  %v783 = vrot.slane %v526, 1
  %v784 = vrot.slane %v527, 1
  %v785 = vrot.slane %v528, 1
  %v786 = vrot.slane %v529, 1
  %v787 = vrot.slane %v530, 1
  %v788 = vrot.slane %v531, 1
  %v789 = vrot.slane %v532, 1
  %v790 = vrot.slane %v533, 1
  %v791 = vrot.slane %v534, 1
  %v792 = vrot.slane %v535, 1
  %v793 = vrot.slane %v536, 1
  %v794 = vrot.slane %v537, 1
  %v795 = vrot.slane %v538, 1
  %v796 = vrot.slane %v539, 1
  %v797 = vrot.slane %v540, 1
  %v798 = vrot.slane %v541, 1
  %v799 = vrot.slane %v542, 1
  %v800 = vrot.slane %v543, 1
  %v801 = vrot.slane %v544, 1
  %v802 = vrot.slane %v547, 1
  %v803 = vrot.slane %v548, 1
  %v804 = vrot.slane %v549, 1
  %v805 = vrot.slane %v550, 1
  %v806 = vrot.slane %v551, 1
  %v807 = vrot.slane %v552, 1
  %v808 = vrot.slane %v553, 1
  %v809 = vrot.slane %v554, 1
  %v810 = vrot.slane %v555, 1
  %v811 = vrot.slane %v556, 1
  %v812 = vrot.slane %v557, 1
  %v813 = vrot.slane %v558, 1
  %v814 = vrot.slane %v559, 1
  %v815 = vrot.slane %v560, 1
  %v816 = vrot.slane %v561, 1
  %v817 = vrot.slane %v562, 1
  %v818 = vrot.slane %v563, 1
  %v819 = vrot.slane %v564, 1
  %v820 = vrot.slane %v565, 1
  %v821 = vrot.slane %v566, 1
  %v822 = vrot.slane %v567, 1
  %v823 = vrot.slane %v568, 1
  %v824 = vrot.slane %v569, 1
  %v825 = vrot.slane %v570, 1
  %v826 = vrot.slane %v571, 1
  %v827 = vrot.slane %v572, 1
  %v828 = vrot.slane %v573, 1
  %v829 = vrot.slane %v574, 1
  %v830 = vrot.slane %v575, 1
  %v831 = vrot.slane %v576, 1
  %vm832 = vcmp.lt.s32.totalorder %v580, 7
  %v833 = vsel %vm832, %v830, %v831
  %v834 = vsel %vm832, %v829, %v830
  %v835 = vsel %vm832, %v828, %v829
  %v836 = vsel %vm832, %v827, %v828
  %v837 = vsel %vm832, %v826, %v827
  %v838 = vsel %vm832, %v825, %v826
  %v839 = vsel %vm832, %v824, %v825
  %v840 = vsel %vm832, %v823, %v824
  %v841 = vsel %vm832, %v822, %v823
  %v842 = vsel %vm832, %v821, %v822
  %v843 = vsel %vm832, %v820, %v821
  %v844 = vsel %vm832, %v819, %v820
  %v845 = vsel %vm832, %v818, %v819
  %v846 = vsel %vm832, %v817, %v818
  %v847 = vsel %vm832, %v816, %v817
  %v848 = vsel %vm832, %v815, %v816
  %v849 = vsel %vm832, %v814, %v815
  %v850 = vsel %vm832, %v813, %v814
  %v851 = vsel %vm832, %v812, %v813
  %v852 = vsel %vm832, %v811, %v812
  %v853 = vsel %vm832, %v810, %v811
  %v854 = vsel %vm832, %v809, %v810
  %v855 = vsel %vm832, %v808, %v809
  %v856 = vsel %vm832, %v807, %v808
  %v857 = vsel %vm832, %v806, %v807
  %v858 = vsel %vm832, %v805, %v806
  %v859 = vsel %vm832, %v804, %v805
  %v860 = vsel %vm832, %v803, %v804
  %v861 = vsel %vm832, %v802, %v803
  %v862 = vsel %vm832, 0.0, %v802
  %v863 = vsel %vm832, %v801, 0.0
  %v864 = vsel %vm832, %v800, %v801
  %v865 = vsel %vm832, %v799, %v800
  %v866 = vsel %vm832, %v798, %v799
  %v867 = vsel %vm832, %v797, %v798
  %v868 = vsel %vm832, %v796, %v797
  %v869 = vsel %vm832, %v795, %v796
  %v870 = vsel %vm832, %v794, %v795
  %v871 = vsel %vm832, %v793, %v794
  %v872 = vsel %vm832, %v792, %v793
  %v873 = vsel %vm832, %v791, %v792
  %v874 = vsel %vm832, %v790, %v791
  %v875 = vsel %vm832, %v789, %v790
  %v876 = vsel %vm832, %v788, %v789
  %v877 = vsel %vm832, %v787, %v788
  %v878 = vsel %vm832, %v786, %v787
  %v879 = vsel %vm832, %v785, %v786
  %v880 = vsel %vm832, %v784, %v785
  %v881 = vsel %vm832, %v783, %v784
  %v882 = vsel %vm832, %v782, %v783
  %v883 = vsel %vm832, %v781, %v782
  %v884 = vsel %vm832, %v780, %v781
  %v885 = vsel %vm832, %v779, %v780
  %v886 = vsel %vm832, %v778, %v779
  %v887 = vsel %vm832, %v777, %v778
  %v888 = vsel %vm832, %v776, %v777
  %v889 = vsel %vm832, %v775, %v776
  %v890 = vsel %vm832, %v774, %v775
  %v891 = vsel %vm832, %v773, %v774
  %v892 = vsel %vm832, %v772, %v773
  %v893 = vsel %vm832, 0.0, %v772
  %v894 = vsel %vm832, %v831, 0.0
  %v895 = vsel %vm584, 0.0, 0.0
  %v896 = vsel %vm585, %v893, 0.0
  %v897 = vsel %vm584, %v892, 0.0
  %v898 = vsel %vm585, %v891, 0.0
  %v899 = vsel %vm584, %v890, 0.0
  %v900 = vsel %vm585, %v889, 0.0
  %v901 = vsel %vm584, %v888, 0.0
  %v902 = vsel %vm585, %v887, 0.0
  %v903 = vsel %vm584, %v886, 0.0
  %v904 = vsel %vm585, %v885, 0.0
  %v905 = vsel %vm584, %v884, 0.0
  %v906 = vsel %vm585, %v883, 0.0
  %v907 = vsel %vm584, %v882, 0.0
  %v908 = vsel %vm585, %v881, 0.0
  %v909 = vsel %vm584, %v880, 0.0
  %v910 = vsel %vm585, %v879, 0.0
  %v911 = vsel %vm584, %v878, 0.0
  %v912 = vsel %vm585, %v877, 0.0
  %v913 = vsel %vm584, %v876, 0.0
  %v914 = vsel %vm585, %v875, 0.0
  %v915 = vsel %vm584, %v874, 0.0
  %v916 = vsel %vm585, %v873, 0.0
  %v917 = vsel %vm584, %v872, 0.0
  %v918 = vsel %vm585, %v871, 0.0
  %v919 = vsel %vm584, %v870, 0.0
  %v920 = vsel %vm585, %v869, 0.0
  %v921 = vsel %vm584, %v868, 0.0
  %v922 = vsel %vm585, %v867, 0.0
  %v923 = vsel %vm584, %v866, 0.0
  %v924 = vsel %vm585, %v865, 0.0
  %v925 = vsel %vm584, %v864, 0.0
  %v926 = vsel %vm585, %v863, 0.0
  %v927 = vsel %vm585, %v862, 0.0
  %v928 = vsel %vm584, %v861, 0.0
  %v929 = vsel %vm585, %v860, 0.0
  %v930 = vsel %vm584, %v859, 0.0
  %v931 = vsel %vm585, %v858, 0.0
  %v932 = vsel %vm584, %v857, 0.0
  %v933 = vsel %vm585, %v856, 0.0
  %v934 = vsel %vm584, %v855, 0.0
  %v935 = vsel %vm585, %v854, 0.0
  %v936 = vsel %vm584, %v853, 0.0
  %v937 = vsel %vm585, %v852, 0.0
  %v938 = vsel %vm584, %v851, 0.0
  %v939 = vsel %vm585, %v850, 0.0
  %v940 = vsel %vm584, %v849, 0.0
  %v941 = vsel %vm585, %v848, 0.0
  %v942 = vsel %vm584, %v847, 0.0
  %v943 = vsel %vm585, %v846, 0.0
  %v944 = vsel %vm584, %v845, 0.0
  %v945 = vsel %vm585, %v844, 0.0
  %v946 = vsel %vm584, %v843, 0.0
  %v947 = vsel %vm585, %v842, 0.0
  %v948 = vsel %vm584, %v841, 0.0
  %v949 = vsel %vm585, %v840, 0.0
  %v950 = vsel %vm584, %v839, 0.0
  %v951 = vsel %vm585, %v838, 0.0
  %v952 = vsel %vm584, %v837, 0.0
  %v953 = vsel %vm585, %v836, 0.0
  %v954 = vsel %vm584, %v835, 0.0
  %v955 = vsel %vm585, %v834, 0.0
  %v956 = vsel %vm584, %v833, 0.0
  %v957 = vsel %vm585, %v894, 0.0
  %v958 = vpack.c.bf16 %v710, %v709
  %v959 = vpack.c.bf16 0.0, 0.0
  %v960 = vpack.c.bf16 %v896, %v895
  %v961 = vpack.c.bf16 %v712, %v711
  %v962 = vpack.c.bf16 %v516, %v515
  %v963 = vpack.c.bf16 %v898, %v897
  %v964 = vpack.c.bf16 %v714, %v713
  %v965 = vpack.c.bf16 %v518, %v517
  %v966 = vpack.c.bf16 %v900, %v899
  %v967 = vpack.c.bf16 %v716, %v715
  %v968 = vpack.c.bf16 %v520, %v519
  %v969 = vpack.c.bf16 %v902, %v901
  %v970 = vpack.c.bf16 %v718, %v717
  %v971 = vpack.c.bf16 %v522, %v521
  %v972 = vpack.c.bf16 %v904, %v903
  %v973 = vpack.c.bf16 %v720, %v719
  %v974 = vpack.c.bf16 %v524, %v523
  %v975 = vpack.c.bf16 %v906, %v905
  %v976 = vpack.c.bf16 %v722, %v721
  %v977 = vpack.c.bf16 %v526, %v525
  %v978 = vpack.c.bf16 %v908, %v907
  %v979 = vpack.c.bf16 %v724, %v723
  %v980 = vpack.c.bf16 %v528, %v527
  %v981 = vpack.c.bf16 %v910, %v909
  %v982 = vpack.c.bf16 %v726, %v725
  %v983 = vpack.c.bf16 %v530, %v529
  %v984 = vpack.c.bf16 %v912, %v911
  %v985 = vpack.c.bf16 %v728, %v727
  %v986 = vpack.c.bf16 %v532, %v531
  %v987 = vpack.c.bf16 %v914, %v913
  %v988 = vpack.c.bf16 %v730, %v729
  %v989 = vpack.c.bf16 %v534, %v533
  %v990 = vpack.c.bf16 %v916, %v915
  %v991 = vpack.c.bf16 %v732, %v731
  %v992 = vpack.c.bf16 %v536, %v535
  %v993 = vpack.c.bf16 %v918, %v917
  %v994 = vpack.c.bf16 %v734, %v733
  %v995 = vpack.c.bf16 %v538, %v537
  %v996 = vpack.c.bf16 %v920, %v919
  %v997 = vpack.c.bf16 %v736, %v735
  %v998 = vpack.c.bf16 %v540, %v539
  %v999 = vpack.c.bf16 %v922, %v921
  %v1000 = vpack.c.bf16 %v738, %v737
  %v1001 = vpack.c.bf16 %v542, %v541
  %v1002 = vpack.c.bf16 %v924, %v923
  %v1003 = vpack.c.bf16 %v740, %v739
  %v1004 = vpack.c.bf16 %v544, %v543
  %v1005 = vpack.c.bf16 %v926, %v925
  %v1006 = vpack.c.bf16 %v710, %v741
  %v1007 = vpack.c.bf16 %v927, %v895
  %v1008 = vpack.c.bf16 %v743, %v742
  %v1009 = vpack.c.bf16 %v548, %v547
  %v1010 = vpack.c.bf16 %v929, %v928
  %v1011 = vpack.c.bf16 %v745, %v744
  %v1012 = vpack.c.bf16 %v550, %v549
  %v1013 = vpack.c.bf16 %v931, %v930
  %v1014 = vpack.c.bf16 %v747, %v746
  %v1015 = vpack.c.bf16 %v552, %v551
  %v1016 = vpack.c.bf16 %v933, %v932
  %v1017 = vpack.c.bf16 %v749, %v748
  %v1018 = vpack.c.bf16 %v554, %v553
  %v1019 = vpack.c.bf16 %v935, %v934
  %v1020 = vpack.c.bf16 %v751, %v750
  %v1021 = vpack.c.bf16 %v556, %v555
  %v1022 = vpack.c.bf16 %v937, %v936
  %v1023 = vpack.c.bf16 %v753, %v752
  %v1024 = vpack.c.bf16 %v558, %v557
  %v1025 = vpack.c.bf16 %v939, %v938
  %v1026 = vpack.c.bf16 %v755, %v754
  %v1027 = vpack.c.bf16 %v560, %v559
  %v1028 = vpack.c.bf16 %v941, %v940
  %v1029 = vpack.c.bf16 %v757, %v756
  %v1030 = vpack.c.bf16 %v562, %v561
  %v1031 = vpack.c.bf16 %v943, %v942
  %v1032 = vpack.c.bf16 %v759, %v758
  %v1033 = vpack.c.bf16 %v564, %v563
  %v1034 = vpack.c.bf16 %v945, %v944
  %v1035 = vpack.c.bf16 %v761, %v760
  %v1036 = vpack.c.bf16 %v566, %v565
  %v1037 = vpack.c.bf16 %v947, %v946
  %v1038 = vpack.c.bf16 %v763, %v762
  %v1039 = vpack.c.bf16 %v568, %v567
  %v1040 = vpack.c.bf16 %v949, %v948
  %v1041 = vpack.c.bf16 %v765, %v764
  %v1042 = vpack.c.bf16 %v570, %v569
  %v1043 = vpack.c.bf16 %v951, %v950
  %v1044 = vpack.c.bf16 %v767, %v766
  %v1045 = vpack.c.bf16 %v572, %v571
  %v1046 = vpack.c.bf16 %v953, %v952
  %v1047 = vpack.c.bf16 %v769, %v768
  %v1048 = vpack.c.bf16 %v574, %v573
  %v1049 = vpack.c.bf16 %v955, %v954
  %v1050 = vpack.c.bf16 %v771, %v770
  %v1051 = vpack.c.bf16 %v576, %v575
  %v1052 = vpack.c.bf16 %v957, %v956
  %v1053 = vld [vmem:[%s3] sm:$0xf]
  %v1054 = vld [vmem:[%s3 + $0x4] sm:$0xf]
  %v1055 = vld [vmem:[%s3 + $0x8] sm:$0xf]
  %v1056 = vld [vmem:[%s3 + $0xc] sm:$0xf]
  %v1057 = vld [vmem:[%s3 + $0x10] sm:$0xf]
  %v1058 = vld [vmem:[%s3 + $0x14] sm:$0xf]
  %v1059 = vld [vmem:[%s3 + $0x18] sm:$0xf]
  %v1060 = vld [vmem:[%s3 + $0x1c] sm:$0xf]
  %v1061 = vld [vmem:[%s3 + $0x20] sm:$0xf]
  %v1062 = vld [vmem:[%s3 + $0x24] sm:$0xf]
  %v1063 = vld [vmem:[%s3 + $0x28] sm:$0xf]
  %v1064 = vld [vmem:[%s3 + $0x2c] sm:$0xf]
  %v1065 = vld [vmem:[%s3 + $0x30] sm:$0xf]
  %v1066 = vld [vmem:[%s3 + $0x34] sm:$0xf]
  %v1067 = vld [vmem:[%s3 + $0x38] sm:$0xf]
  %v1068 = vld [vmem:[%s3 + $0x3c] sm:$0xf]
  %v1069 = vld [vmem:[%s3 + $0x40] sm:$0xf]
  %v1070 = vld [vmem:[%s3 + $0x44] sm:$0xf]
  %v1071 = vld [vmem:[%s3 + $0x48] sm:$0xf]
  %v1072 = vld [vmem:[%s3 + $0x4c] sm:$0xf]
  %v1073 = vld [vmem:[%s3 + $0x50] sm:$0xf]
  %v1074 = vld [vmem:[%s3 + $0x54] sm:$0xf]
  %v1075 = vld [vmem:[%s3 + $0x58] sm:$0xf]
  %v1076 = vld [vmem:[%s3 + $0x5c] sm:$0xf]
  %v1077 = vld [vmem:[%s3 + $0x60] sm:$0xf]
  %v1078 = vld [vmem:[%s3 + $0x64] sm:$0xf]
  %v1079 = vld [vmem:[%s3 + $0x68] sm:$0xf]
  %v1080 = vld [vmem:[%s3 + $0x6c] sm:$0xf]
  %v1081 = vld [vmem:[%s3 + $0x70] sm:$0xf]
  %v1082 = vld [vmem:[%s3 + $0x74] sm:$0xf]
  %v1083 = vld [vmem:[%s3 + $0x78] sm:$0xf]
  %v1084 = vld [vmem:[%s3 + $0x7c] sm:$0xf]
  %v1085 = vld [vmem:[%s3 + $0x80] sm:$0xf]
  %v1086 = vld [vmem:[%s3 + $0x84] sm:$0xf]
  %v1087 = vld [vmem:[%s3 + $0x88] sm:$0xf]
  %v1088 = vld [vmem:[%s3 + $0x8c] sm:$0xf]
  %v1089 = vld [vmem:[%s3 + $0x90] sm:$0xf]
  %v1090 = vld [vmem:[%s3 + $0x94] sm:$0xf]
  %v1091 = vld [vmem:[%s3 + $0x98] sm:$0xf]
  %v1092 = vld [vmem:[%s3 + $0x9c] sm:$0xf]
  %v1093 = vld [vmem:[%s3 + $0xa0] sm:$0xf]
  %v1094 = vld [vmem:[%s3 + $0xa4] sm:$0xf]
  %v1095 = vld [vmem:[%s3 + $0xa8] sm:$0xf]
  %v1096 = vld [vmem:[%s3 + $0xac] sm:$0xf]
  %v1097 = vld [vmem:[%s3 + $0xb0] sm:$0xf]
  %v1098 = vld [vmem:[%s3 + $0xb4] sm:$0xf]
  %v1099 = vld [vmem:[%s3 + $0xb8] sm:$0xf]
  %v1100 = vld [vmem:[%s3 + $0xbc] sm:$0xf]
  %v1101 = vrot.slane %v545, 7
  %v1102 = vrot.slane %v546, 7
  %v1103 = vrot.slane %v577, 7
  %v1104 = vrot.slane %v578, 7
  %v1105 = vsel %vm646, %v1103, %v1104
  %v1106 = vsel %vm646, %v645, %v1103
  %v1107 = vsel %vm646, %v1102, %v616
  %v1108 = vsel %vm646, %v1101, %v1102
  %v1109 = vsel %vm646, %v615, %v1101
  %v1110 = vsel %vm646, %v1104, %v586
  %v1111 = vsel %vm582, %v1110, 0.0
  %v1112 = vsel %vm582, %v1109, 0.0
  %v1113 = vsel %vm583, %v1108, 0.0
  %v1114 = vsel %vm582, %v1107, 0.0
  %v1115 = vsel %vm582, %v1106, 0.0
  %v1116 = vsel %vm583, %v1105, 0.0
  %v1117 = vrot.slane %v545, 1
  %v1118 = vrot.slane %v546, 1
  %v1119 = vrot.slane %v577, 1
  %v1120 = vrot.slane %v578, 1
  %v1121 = vsel %vm832, %v1119, %v1120
  %v1122 = vsel %vm832, %v831, %v1119
  %v1123 = vsel %vm832, %v1118, %v802
  %v1124 = vsel %vm832, %v1117, %v1118
  %v1125 = vsel %vm832, %v801, %v1117
  %v1126 = vsel %vm832, %v1120, %v772
  %v1127 = vsel %vm585, %v1125, 0.0
  %v1128 = vsel %vm584, %v1124, 0.0
  %v1129 = vsel %vm585, %v1123, 0.0
  %v1130 = vsel %vm585, %v1122, 0.0
  %v1131 = vsel %vm584, %v1121, 0.0
  %v1132 = vsel %vm585, %v1126, 0.0
  %v1133 = vpack.c.bf16 %v712, %v1111
  %v1134 = vpack.c.bf16 %v1127, %v925
  %v1135 = vpack.c.bf16 %v1113, %v1112
  %v1136 = vpack.c.bf16 %v546, %v545
  %v1137 = vpack.c.bf16 %v1129, %v1128
  %v1138 = vpack.c.bf16 %v743, %v1114
  %v1139 = vpack.c.bf16 %v1130, %v956
  %v1140 = vpack.c.bf16 %v1116, %v1115
  %v1141 = vpack.c.bf16 %v578, %v577
  %v1142 = vpack.c.bf16 %v1132, %v1131
  %s1143 = scalar_lea.vmem %s3, 192
  %v1144 = vld [vmem:[%s1143] sm:$0xf]
  %v1145 = vld [vmem:[%s1143 + $0x4] sm:$0xf]
  %v1146 = vld [vmem:[%s1143 + $0x8] sm:$0xf]
  %v1147 = vld [vmem:[%s1143 + $0xc] sm:$0xf]
  %v1148 = vld [vmem:[%s1143 + $0x10] sm:$0xf]
  %v1149 = vld [vmem:[%s1143 + $0x14] sm:$0xf]
  %v1150 = vld [vmem:[%s1143 + $0x18] sm:$0xf]
  %v1151 = vld [vmem:[%s1143 + $0x1c] sm:$0xf]
  %v1152 = vld [vmem:[%s1143 + $0x20] sm:$0xf]
  %v1153 = vld [vmem:[%s1143 + $0x24] sm:$0xf]
  %v1154 = vld [vmem:[%s1143 + $0x28] sm:$0xf]
  %v1155 = vld [vmem:[%s1143 + $0x2c] sm:$0xf]
  %v1156 = vld [vmem:[%s1143 + $0x30] sm:$0xf]
  %v1157 = vld [vmem:[%s1143 + $0x34] sm:$0xf]
  %v1158 = vld [vmem:[%s1143 + $0x38] sm:$0xf]
  %v1159 = vld [vmem:[%s1143 + $0x3c] sm:$0xf]
  %v1160 = vld [vmem:[%s1143 + $0x40] sm:$0xf]
  %v1161 = vld [vmem:[%s1143 + $0x44] sm:$0xf]
  %v1162 = vld [vmem:[%s1143 + $0x48] sm:$0xf]
  %v1163 = vld [vmem:[%s1143 + $0x4c] sm:$0xf]
  %v1164 = vld [vmem:[%s1143 + $0x50] sm:$0xf]
  %v1165 = vld [vmem:[%s1143 + $0x54] sm:$0xf]
  %v1166 = vld [vmem:[%s1143 + $0x58] sm:$0xf]
  %v1167 = vld [vmem:[%s1143 + $0x5c] sm:$0xf]
  %v1168 = vld [vmem:[%s1143 + $0x60] sm:$0xf]
  %v1169 = vld [vmem:[%s1143 + $0x64] sm:$0xf]
  %v1170 = vld [vmem:[%s1143 + $0x68] sm:$0xf]
  %v1171 = vld [vmem:[%s1143 + $0x6c] sm:$0xf]
  %v1172 = vld [vmem:[%s1143 + $0x70] sm:$0xf]
  %v1173 = vld [vmem:[%s1143 + $0x74] sm:$0xf]
  %v1174 = vld [vmem:[%s1143 + $0x78] sm:$0xf]
  %v1175 = vld [vmem:[%s1143 + $0x7c] sm:$0xf]
  %v1176 = vld [vmem:[%s1143 + $0x80] sm:$0xf]
  %v1177 = vld [vmem:[%s1143 + $0x84] sm:$0xf]
  %v1178 = vld [vmem:[%s1143 + $0x88] sm:$0xf]
  %v1179 = vld [vmem:[%s1143 + $0x8c] sm:$0xf]
  %v1180 = vld [vmem:[%s1143 + $0x90] sm:$0xf]
  %v1181 = vld [vmem:[%s1143 + $0x94] sm:$0xf]
  %v1182 = vld [vmem:[%s1143 + $0x98] sm:$0xf]
  %v1183 = vld [vmem:[%s1143 + $0x9c] sm:$0xf]
  %v1184 = vld [vmem:[%s1143 + $0xa0] sm:$0xf]
  %v1185 = vld [vmem:[%s1143 + $0xa4] sm:$0xf]
  %v1186 = vld [vmem:[%s1143 + $0xa8] sm:$0xf]
  %v1187 = vld [vmem:[%s1143 + $0xac] sm:$0xf]
  %v1188 = vld [vmem:[%s1143 + $0xb0] sm:$0xf]
  %v1189 = vld [vmem:[%s1143 + $0xb4] sm:$0xf]
  %v1190 = vld [vmem:[%s1143 + $0xb8] sm:$0xf]
  %v1191 = vld [vmem:[%s1143 + $0xbc] sm:$0xf]
  %v1240 = vunpack.c.l.b16 %v1144
  %v1241 = vunpack.c.l.b16 %v1145
  %v1242 = vunpack.c.l.b16 %v1146
  %v1243 = vunpack.c.l.b16 %v1147
  %v1244 = vunpack.c.l.b16 %v1148
  %v1245 = vunpack.c.l.b16 %v1149
  %v1246 = vunpack.c.l.b16 %v1150
  %v1247 = vunpack.c.l.b16 %v1151
  %v1248 = vunpack.c.l.b16 %v1152
  %v1249 = vunpack.c.l.b16 %v1153
  %v1250 = vunpack.c.l.b16 %v1154
  %v1251 = vunpack.c.l.b16 %v1155
  %v1252 = vunpack.c.l.b16 %v1156
  %v1253 = vunpack.c.l.b16 %v1157
  %v1254 = vunpack.c.l.b16 %v1158
  %v1255 = vunpack.c.l.b16 %v1159
  %v1256 = vunpack.c.l.b16 %v1160
  %v1257 = vunpack.c.l.b16 %v1161
  %v1258 = vunpack.c.l.b16 %v1162
  %v1259 = vunpack.c.l.b16 %v1163
  %v1260 = vunpack.c.l.b16 %v1164
  %v1261 = vunpack.c.l.b16 %v1165
  %v1262 = vunpack.c.l.b16 %v1166
  %v1263 = vunpack.c.l.b16 %v1167
  %v1264 = vunpack.c.l.b16 %v1168
  %v1265 = vunpack.c.l.b16 %v1169
  %v1266 = vunpack.c.l.b16 %v1170
  %v1267 = vunpack.c.l.b16 %v1171
  %v1268 = vunpack.c.l.b16 %v1172
  %v1269 = vunpack.c.l.b16 %v1173
  %v1270 = vunpack.c.l.b16 %v1174
  %v1271 = vunpack.c.l.b16 %v1175
  %v1272 = vunpack.c.l.b16 %v1176
  %v1273 = vunpack.c.l.b16 %v1177
  %v1274 = vunpack.c.l.b16 %v1178
  %v1275 = vunpack.c.l.b16 %v1179
  %v1276 = vunpack.c.l.b16 %v1180
  %v1277 = vunpack.c.l.b16 %v1181
  %v1278 = vunpack.c.l.b16 %v1182
  %v1279 = vunpack.c.l.b16 %v1183
  %v1280 = vunpack.c.l.b16 %v1184
  %v1281 = vunpack.c.l.b16 %v1185
  %v1282 = vunpack.c.l.b16 %v1186
  %v1283 = vunpack.c.l.b16 %v1187
  %v1284 = vunpack.c.l.b16 %v1188
  %v1285 = vunpack.c.l.b16 %v1189
  %v1286 = vunpack.c.l.b16 %v1190
  %v1287 = vunpack.c.l.b16 %v1191
  %v1288 = vpack.c.b16 %v1241, %v1240
  %v1289 = vpack.c.b16 %v1243, %v1242
  %v1290 = vpack.c.b16 %v1245, %v1244
  %v1291 = vpack.c.b16 %v1247, %v1246
  %v1292 = vpack.c.b16 %v1249, %v1248
  %v1293 = vpack.c.b16 %v1251, %v1250
  %v1294 = vpack.c.b16 %v1253, %v1252
  %v1295 = vpack.c.b16 %v1255, %v1254
  %v1296 = vpack.c.b16 %v1257, %v1256
  %v1297 = vpack.c.b16 %v1259, %v1258
  %v1298 = vpack.c.b16 %v1261, %v1260
  %v1299 = vpack.c.b16 %v1263, %v1262
  %v1300 = vpack.c.b16 %v1265, %v1264
  %v1301 = vpack.c.b16 %v1267, %v1266
  %v1302 = vpack.c.b16 %v1269, %v1268
  %v1303 = vpack.c.b16 %v1271, %v1270
  %v1304 = vpack.c.b16 %v1273, %v1272
  %v1305 = vpack.c.b16 %v1275, %v1274
  %v1306 = vpack.c.b16 %v1277, %v1276
  %v1307 = vpack.c.b16 %v1279, %v1278
  %v1308 = vpack.c.b16 %v1281, %v1280
  %v1309 = vpack.c.b16 %v1283, %v1282
  %v1310 = vpack.c.b16 %v1285, %v1284
  %v1311 = vpack.c.b16 %v1287, %v1286
  %1336 = vmatprep.subr.bf16.mxu0 0
  %1337 = vmatpush1.bf16.msra.mxu0 %v1288
  %1338 = vmatprep.subr.bf16.mxu0 0
  %1339 = vmatpush1.bf16.msra.mxu0 %v1289
  %1340 = vmatprep.subr.bf16.mxu0 0
  %1341 = vmatpush1.bf16.msra.mxu0 %v1290
  %1342 = vmatprep.subr.bf16.mxu0 0
  %1343 = vmatpush1.bf16.msra.mxu0 %v1291
  %1344 = vmatprep.subr.bf16.mxu0 0
  %1345 = vmatpush1.bf16.msra.mxu0 %v1292
  %1346 = vmatprep.subr.bf16.mxu0 0
  %1347 = vmatpush1.bf16.msra.mxu0 %v1293
  %1348 = vmatprep.subr.bf16.mxu0 0
  %1349 = vmatpush1.bf16.msra.mxu0 %v1294
  %1350 = vmatprep.subr.bf16.mxu0 0
  %1351 = vmatpush1.bf16.msra.mxu0 %v1295
  %1352 = vmatprep.subr.bf16.mxu0 0
  %1353 = vmatpush1.bf16.msra.mxu0 %v1296
  %1354 = vmatprep.subr.bf16.mxu0 0
  %1355 = vmatpush1.bf16.msra.mxu0 %v1297
  %1356 = vmatprep.subr.bf16.mxu0 0
  %1357 = vmatpush1.bf16.msra.mxu0 %v1298
  %1358 = vmatprep.subr.bf16.mxu0 0
  %1359 = vmatpush1.bf16.msra.mxu0 %v1299
  %1360 = vmatprep.subr.bf16.mxu0 0
  %1361 = vmatpush1.bf16.msra.mxu0 %v1300
  %1362 = vmatprep.subr.bf16.mxu0 0
  %1363 = vmatpush1.bf16.msra.mxu0 %v1301
  %1364 = vmatprep.subr.bf16.mxu0 0
  %1365 = vmatpush1.bf16.msra.mxu0 %v1302
  %1366 = vmatprep.subr.bf16.mxu0 0
  %1367 = vmatpush1.bf16.msra.mxu0 %v1303
  %1368 = vmatprep.mubr.bf16.mxu0 %v962
  %1369 = vmatmul.mubr.bf16.gmra.mrb[0].mxu0 %v1133
  %v1370 = vpop.f32.mrb[0].mxu0
  %v1371 = vadd.f32 0.0, %v1370
  %v1372 = vpop.f32.mrb[0].mxu0
  %v1373 = vpop.f32.mrb[0].mxu0
  %v1374 = vadd.f32 0.0, %v1373
  %v1375 = vpop.f32.mrb[0].mxu0
  %1376 = vmatprep.mubr.bf16.mxu0 %v965
  %1377 = vmatmul.mubr.bf16.gmra.mrb[0].mxu0 %v964
  %v1378 = vpop.f32.mrb[0].mxu0
  %v1379 = vadd.f32 0.0, %v1378
  %v1380 = vpop.f32.mrb[0].mxu0
  %v1381 = vpop.f32.mrb[0].mxu0
  %v1382 = vadd.f32 0.0, %v1381
  %v1383 = vpop.f32.mrb[0].mxu0
  %1384 = vmatprep.mubr.bf16.mxu0 %v968
  %1385 = vmatmul.mubr.bf16.gmra.mrb[0].mxu0 %v967
  %v1386 = vpop.f32.mrb[0].mxu0
  %v1387 = vadd.f32 0.0, %v1386
  %v1388 = vpop.f32.mrb[0].mxu0
  %v1389 = vpop.f32.mrb[0].mxu0
  %v1390 = vadd.f32 0.0, %v1389
  %v1391 = vpop.f32.mrb[0].mxu0
  %1392 = vmatprep.mubr.bf16.mxu0 %v971
  %1393 = vmatmul.mubr.bf16.gmra.mrb[0].mxu0 %v970
  %v1394 = vpop.f32.mrb[0].mxu0
  %v1395 = vadd.f32 0.0, %v1394
  %v1396 = vpop.f32.mrb[0].mxu0
  %v1397 = vpop.f32.mrb[0].mxu0
  %v1398 = vadd.f32 0.0, %v1397
  %v1399 = vpop.f32.mrb[0].mxu0
  %1400 = vmatprep.mubr.bf16.mxu0 %v974
  %1401 = vmatmul.mubr.bf16.gmra.mrb[0].mxu0 %v973
  %v1402 = vpop.f32.mrb[0].mxu0
  %v1403 = vadd.f32 0.0, %v1402
  %v1404 = vpop.f32.mrb[0].mxu0
  %v1405 = vpop.f32.mrb[0].mxu0
  %v1406 = vadd.f32 0.0, %v1405
  %v1407 = vpop.f32.mrb[0].mxu0
  %1408 = vmatprep.mubr.bf16.mxu0 %v977
  %1409 = vmatmul.mubr.bf16.gmra.mrb[0].mxu0 %v976
  %v1410 = vpop.f32.mrb[0].mxu0
  %v1411 = vadd.f32 0.0, %v1410
  %v1412 = vpop.f32.mrb[0].mxu0
  %v1413 = vpop.f32.mrb[0].mxu0
  %v1414 = vadd.f32 0.0, %v1413
  %v1415 = vpop.f32.mrb[0].mxu0
  %1416 = vmatprep.mubr.bf16.mxu0 %v980
  %1417 = vmatmul.mubr.bf16.gmra.mrb[0].mxu0 %v979
  %v1418 = vpop.f32.mrb[0].mxu0
  %v1419 = vadd.f32 0.0, %v1418
  %v1420 = vpop.f32.mrb[0].mxu0
  %v1421 = vpop.f32.mrb[0].mxu0
  %v1422 = vadd.f32 0.0, %v1421
  %v1423 = vpop.f32.mrb[0].mxu0
  %1424 = vmatprep.mubr.bf16.mxu0 %v983
  %1425 = vmatmul.mubr.bf16.gmra.mrb[0].mxu0 %v982
  %v1426 = vpop.f32.mrb[0].mxu0
  %v1427 = vadd.f32 0.0, %v1426
  %v1428 = vpop.f32.mrb[0].mxu0
  %v1429 = vpop.f32.mrb[0].mxu0
  %v1430 = vadd.f32 0.0, %v1429
  %v1431 = vpop.f32.mrb[0].mxu0
  %1432 = vmatprep.mubr.bf16.mxu0 %v986
  %1433 = vmatmul.mubr.bf16.gmra.mrb[0].mxu0 %v985
  %v1434 = vpop.f32.mrb[0].mxu0
  %v1435 = vadd.f32 0.0, %v1434
  %v1436 = vpop.f32.mrb[0].mxu0
  %v1437 = vpop.f32.mrb[0].mxu0
  %v1438 = vadd.f32 0.0, %v1437
  %v1439 = vpop.f32.mrb[0].mxu0
  %1440 = vmatprep.mubr.bf16.mxu0 %v989
  %1441 = vmatmul.mubr.bf16.gmra.mrb[0].mxu0 %v988
  %v1442 = vpop.f32.mrb[0].mxu0
  %v1443 = vadd.f32 0.0, %v1442
  %v1444 = vpop.f32.mrb[0].mxu0
  %v1445 = vpop.f32.mrb[0].mxu0
  %v1446 = vadd.f32 0.0, %v1445
  %v1447 = vpop.f32.mrb[0].mxu0
  %1448 = vmatprep.mubr.bf16.mxu0 %v992
  %1449 = vmatmul.mubr.bf16.gmra.mrb[0].mxu0 %v991
  %v1450 = vpop.f32.mrb[0].mxu0
  %v1451 = vadd.f32 0.0, %v1450
  %v1452 = vpop.f32.mrb[0].mxu0
  %v1453 = vpop.f32.mrb[0].mxu0
  %v1454 = vadd.f32 0.0, %v1453
  %v1455 = vpop.f32.mrb[0].mxu0
  %1456 = vmatprep.mubr.bf16.mxu0 %v995
  %1457 = vmatmul.mubr.bf16.gmra.mrb[0].mxu0 %v994
  %v1458 = vpop.f32.mrb[0].mxu0
  %v1459 = vadd.f32 0.0, %v1458
  %v1460 = vpop.f32.mrb[0].mxu0
  %v1461 = vpop.f32.mrb[0].mxu0
  %v1462 = vadd.f32 0.0, %v1461
  %v1463 = vpop.f32.mrb[0].mxu0
  %1464 = vmatprep.mubr.bf16.mxu0 %v998
  %1465 = vmatmul.mubr.bf16.gmra.mrb[0].mxu0 %v997
  %v1466 = vpop.f32.mrb[0].mxu0
  %v1467 = vadd.f32 0.0, %v1466
  %v1468 = vpop.f32.mrb[0].mxu0
  %v1469 = vpop.f32.mrb[0].mxu0
  %v1470 = vadd.f32 0.0, %v1469
  %v1471 = vpop.f32.mrb[0].mxu0
  %1472 = vmatprep.mubr.bf16.mxu0 %v1001
  %1473 = vmatmul.mubr.bf16.gmra.mrb[0].mxu0 %v1000
  %v1474 = vpop.f32.mrb[0].mxu0
  %v1475 = vadd.f32 0.0, %v1474
  %v1476 = vpop.f32.mrb[0].mxu0
  %v1477 = vpop.f32.mrb[0].mxu0
  %v1478 = vadd.f32 0.0, %v1477
  %v1479 = vpop.f32.mrb[0].mxu0
  %1480 = vmatprep.mubr.bf16.mxu0 %v1004
  %1481 = vmatmul.mubr.bf16.gmra.mrb[0].mxu0 %v1003
  %v1482 = vpop.f32.mrb[0].mxu0
  %v1483 = vadd.f32 0.0, %v1482
  %v1484 = vpop.f32.mrb[0].mxu0
  %v1485 = vpop.f32.mrb[0].mxu0
  %v1486 = vadd.f32 0.0, %v1485
  %v1487 = vpop.f32.mrb[0].mxu0
  %1488 = vmatprep.mubr.bf16.mxu0 %v1136
  %1489 = vmatmul.mubr.bf16.gmra.mrb[0].mxu0 %v1135
  %v1490 = vpop.f32.mrb[0].mxu0
  %v1491 = vadd.f32 0.0, %v1490
  %v1492 = vpop.f32.mrb[0].mxu0
  %v1493 = vpop.f32.mrb[0].mxu0
  %v1494 = vadd.f32 0.0, %v1493
  %v1495 = vpop.f32.mrb[0].mxu0
  %1496 = vmatprep.mubr.bf16.mxu0 %v1009
  %1497 = vmatmul.mubr.bf16.gmra.mrb[0].mxu0 %v1138
  %v1498 = vpop.f32.mrb[0].mxu0
  %v1499 = vadd.f32 0.0, %v1498
  %v1500 = vpop.f32.mrb[0].mxu0
  %v1501 = vpop.f32.mrb[0].mxu0
  %v1502 = vadd.f32 0.0, %v1501
  %v1503 = vpop.f32.mrb[0].mxu0
  %1504 = vmatprep.mubr.bf16.mxu0 %v1012
  %1505 = vmatmul.mubr.bf16.gmra.mrb[0].mxu0 %v1011
  %v1506 = vpop.f32.mrb[0].mxu0
  %v1507 = vadd.f32 0.0, %v1506
  %v1508 = vpop.f32.mrb[0].mxu0
  %v1509 = vpop.f32.mrb[0].mxu0
  %v1510 = vadd.f32 0.0, %v1509
  %v1511 = vpop.f32.mrb[0].mxu0
  %1512 = vmatprep.mubr.bf16.mxu0 %v1015
  %1513 = vmatmul.mubr.bf16.gmra.mrb[0].mxu0 %v1014
  %v1514 = vpop.f32.mrb[0].mxu0
  %v1515 = vadd.f32 0.0, %v1514
  %v1516 = vpop.f32.mrb[0].mxu0
  %v1517 = vpop.f32.mrb[0].mxu0
  %v1518 = vadd.f32 0.0, %v1517
  %v1519 = vpop.f32.mrb[0].mxu0
  %1520 = vmatprep.mubr.bf16.mxu0 %v1018
  %1521 = vmatmul.mubr.bf16.gmra.mrb[0].mxu0 %v1017
  %v1522 = vpop.f32.mrb[0].mxu0
  %v1523 = vadd.f32 0.0, %v1522
  %v1524 = vpop.f32.mrb[0].mxu0
  %v1525 = vpop.f32.mrb[0].mxu0
  %v1526 = vadd.f32 0.0, %v1525
  %v1527 = vpop.f32.mrb[0].mxu0
  %1528 = vmatprep.mubr.bf16.mxu0 %v1021
  %1529 = vmatmul.mubr.bf16.gmra.mrb[0].mxu0 %v1020
  %v1530 = vpop.f32.mrb[0].mxu0
  %v1531 = vadd.f32 0.0, %v1530
  %v1532 = vpop.f32.mrb[0].mxu0
  %v1533 = vpop.f32.mrb[0].mxu0
  %v1534 = vadd.f32 0.0, %v1533
  %v1535 = vpop.f32.mrb[0].mxu0
  %1536 = vmatprep.mubr.bf16.mxu0 %v1024
  %1537 = vmatmul.mubr.bf16.gmra.mrb[0].mxu0 %v1023
  %v1538 = vpop.f32.mrb[0].mxu0
  %v1539 = vadd.f32 0.0, %v1538
  %v1540 = vpop.f32.mrb[0].mxu0
  %v1541 = vpop.f32.mrb[0].mxu0
  %v1542 = vadd.f32 0.0, %v1541
  %v1543 = vpop.f32.mrb[0].mxu0
  %1544 = vmatprep.mubr.bf16.mxu0 %v1027
  %1545 = vmatmul.mubr.bf16.gmra.mrb[0].mxu0 %v1026
  %v1546 = vpop.f32.mrb[0].mxu0
  %v1547 = vadd.f32 0.0, %v1546
  %v1548 = vpop.f32.mrb[0].mxu0
  %v1549 = vpop.f32.mrb[0].mxu0
  %v1550 = vadd.f32 0.0, %v1549
  %v1551 = vpop.f32.mrb[0].mxu0
  %1552 = vmatprep.mubr.bf16.mxu0 %v1030
  %1553 = vmatmul.mubr.bf16.gmra.mrb[0].mxu0 %v1029
  %v1554 = vpop.f32.mrb[0].mxu0
  %v1555 = vadd.f32 0.0, %v1554
  %v1556 = vpop.f32.mrb[0].mxu0
  %v1557 = vpop.f32.mrb[0].mxu0
  %v1558 = vadd.f32 0.0, %v1557
  %v1559 = vpop.f32.mrb[0].mxu0
  %1560 = vmatprep.mubr.bf16.mxu0 %v1033
  %1561 = vmatmul.mubr.bf16.gmra.mrb[0].mxu0 %v1032
  %v1562 = vpop.f32.mrb[0].mxu0
  %v1563 = vadd.f32 0.0, %v1562
  %v1564 = vpop.f32.mrb[0].mxu0
  %v1565 = vpop.f32.mrb[0].mxu0
  %v1566 = vadd.f32 0.0, %v1565
  %v1567 = vpop.f32.mrb[0].mxu0
  %1568 = vmatprep.mubr.bf16.mxu0 %v1036
  %1569 = vmatmul.mubr.bf16.gmra.mrb[0].mxu0 %v1035
  %v1570 = vpop.f32.mrb[0].mxu0
  %v1571 = vadd.f32 0.0, %v1570
  %v1572 = vpop.f32.mrb[0].mxu0
  %v1573 = vpop.f32.mrb[0].mxu0
  %v1574 = vadd.f32 0.0, %v1573
  %v1575 = vpop.f32.mrb[0].mxu0
  %1576 = vmatprep.mubr.bf16.mxu0 %v1039
  %1577 = vmatmul.mubr.bf16.gmra.mrb[0].mxu0 %v1038
  %v1578 = vpop.f32.mrb[0].mxu0
  %v1579 = vadd.f32 0.0, %v1578
  %v1580 = vpop.f32.mrb[0].mxu0
  %v1581 = vpop.f32.mrb[0].mxu0
  %v1582 = vadd.f32 0.0, %v1581
  %v1583 = vpop.f32.mrb[0].mxu0
  %1584 = vmatprep.mubr.bf16.mxu0 %v1042
  %1585 = vmatmul.mubr.bf16.gmra.mrb[0].mxu0 %v1041
  %v1586 = vpop.f32.mrb[0].mxu0
  %v1587 = vadd.f32 0.0, %v1586
  %v1588 = vpop.f32.mrb[0].mxu0
  %v1589 = vpop.f32.mrb[0].mxu0
  %v1590 = vadd.f32 0.0, %v1589
  %v1591 = vpop.f32.mrb[0].mxu0
  %1592 = vmatprep.mubr.bf16.mxu0 %v1045
  %1593 = vmatmul.mubr.bf16.gmra.mrb[0].mxu0 %v1044
  %v1594 = vpop.f32.mrb[0].mxu0
  %v1595 = vadd.f32 0.0, %v1594
  %v1596 = vpop.f32.mrb[0].mxu0
  %v1597 = vpop.f32.mrb[0].mxu0
  %v1598 = vadd.f32 0.0, %v1597
  %v1599 = vpop.f32.mrb[0].mxu0
  %1600 = vmatprep.mubr.bf16.mxu0 %v1048
  %1601 = vmatmul.mubr.bf16.gmra.mrb[0].mxu0 %v1047
  %v1602 = vpop.f32.mrb[0].mxu0
  %v1603 = vadd.f32 0.0, %v1602
  %v1604 = vpop.f32.mrb[0].mxu0
  %v1605 = vpop.f32.mrb[0].mxu0
  %v1606 = vadd.f32 0.0, %v1605
  %v1607 = vpop.f32.mrb[0].mxu0
  %1608 = vmatprep.mubr.bf16.mxu0 %v1051
  %1609 = vmatmul.mubr.bf16.gmra.mrb[0].mxu0 %v1050
  %v1610 = vpop.f32.mrb[0].mxu0
  %v1611 = vadd.f32 0.0, %v1610
  %v1612 = vpop.f32.mrb[0].mxu0
  %v1613 = vpop.f32.mrb[0].mxu0
  %v1614 = vadd.f32 0.0, %v1613
  %v1615 = vpop.f32.mrb[0].mxu0
  %1616 = vmatprep.mubr.bf16.mxu0 %v1141
  %1617 = vmatmul.mubr.bf16.gmra.mrb[0].mxu0 %v1140
  %v1618 = vpop.f32.mrb[0].mxu0
  %v1619 = vadd.f32 0.0, %v1618
  %v1620 = vpop.f32.mrb[0].mxu0
  %v1621 = vpop.f32.mrb[0].mxu0
  %v1622 = vadd.f32 0.0, %v1621
  %v1623 = vpop.f32.mrb[0].mxu0
  %1624 = vdwg.mxu0
  %1625 = vmatprep.subr.bf16.mxu0 0
  %1626 = vmatpush1.bf16.msra.mxu0 %v1304
  %1627 = vmatprep.subr.bf16.mxu0 0
  %1628 = vmatpush1.bf16.msra.mxu0 %v1305
  %1629 = vmatprep.subr.bf16.mxu0 0
  %1630 = vmatpush1.bf16.msra.mxu0 %v1306
  %1631 = vmatprep.subr.bf16.mxu0 0
  %1632 = vmatpush1.bf16.msra.mxu0 %v1307
  %1633 = vmatprep.subr.bf16.mxu0 0
  %1634 = vmatpush1.bf16.msra.mxu0 %v1308
  %1635 = vmatprep.subr.bf16.mxu0 0
  %1636 = vmatpush1.bf16.msra.mxu0 %v1309
  %1637 = vmatprep.subr.bf16.mxu0 0
  %1638 = vmatpush1.bf16.msra.mxu0 %v1310
  %1639 = vmatprep.subr.bf16.mxu0 0
  %1640 = vmatpush1.bf16.msra.mxu0 %v1311
  %1641 = vmatprep.subr.bf16.mxu0 0
  %1642 = vmatpush1.bf16.msra.mxu0 0
  %1643 = vmatprep.subr.bf16.mxu0 0
  %1644 = vmatpush1.bf16.msra.mxu0 0
  %1645 = vmatprep.subr.bf16.mxu0 0
  %1646 = vmatpush1.bf16.msra.mxu0 0
  %1647 = vmatprep.subr.bf16.mxu0 0
  %1648 = vmatpush1.bf16.msra.mxu0 0
  %1649 = vmatprep.subr.bf16.mxu0 0
  %1650 = vmatpush1.bf16.msra.mxu0 0
  %1651 = vmatprep.subr.bf16.mxu0 0
  %1652 = vmatpush1.bf16.msra.mxu0 0
  %1653 = vmatprep.subr.bf16.mxu0 0
  %1654 = vmatpush1.bf16.msra.mxu0 0
  %1655 = vmatprep.subr.bf16.mxu0 0
  %1656 = vmatpush1.bf16.msra.mxu0 0
  %1657 = vmatprep.mubr.bf16.mxu0 0
  %1658 = vmatmul.mubr.bf16.gmra.mrb[0].mxu0 %v963
  %v1659 = vpop.f32.mrb[0].mxu0
  %v1660 = vadd.f32 %v1371, %v1659
  %v1661 = vpop.f32.mrb[0].mxu0
  %v1662 = vpop.f32.mrb[0].mxu0
  %v1663 = vadd.f32 %v1374, %v1662
  %v1664 = vpop.f32.mrb[0].mxu0
  %1665 = vmatprep.mubr.bf16.mxu0 0
  %1666 = vmatmul.mubr.bf16.gmra.mrb[0].mxu0 %v966
  %v1667 = vpop.f32.mrb[0].mxu0
  %v1668 = vadd.f32 %v1379, %v1667
  %v1669 = vpop.f32.mrb[0].mxu0
  %v1670 = vpop.f32.mrb[0].mxu0
  %v1671 = vadd.f32 %v1382, %v1670
  %v1672 = vpop.f32.mrb[0].mxu0
  %1673 = vmatprep.mubr.bf16.mxu0 0
  %1674 = vmatmul.mubr.bf16.gmra.mrb[0].mxu0 %v969
  %v1675 = vpop.f32.mrb[0].mxu0
  %v1676 = vadd.f32 %v1387, %v1675
  %v1677 = vpop.f32.mrb[0].mxu0
  %v1678 = vpop.f32.mrb[0].mxu0
  %v1679 = vadd.f32 %v1390, %v1678
  %v1680 = vpop.f32.mrb[0].mxu0
  %1681 = vmatprep.mubr.bf16.mxu0 0
  %1682 = vmatmul.mubr.bf16.gmra.mrb[0].mxu0 %v972
  %v1683 = vpop.f32.mrb[0].mxu0
  %v1684 = vadd.f32 %v1395, %v1683
  %v1685 = vpop.f32.mrb[0].mxu0
  %v1686 = vpop.f32.mrb[0].mxu0
  %v1687 = vadd.f32 %v1398, %v1686
  %v1688 = vpop.f32.mrb[0].mxu0
  %1689 = vmatprep.mubr.bf16.mxu0 0
  %1690 = vmatmul.mubr.bf16.gmra.mrb[0].mxu0 %v975
  %v1691 = vpop.f32.mrb[0].mxu0
  %v1692 = vadd.f32 %v1403, %v1691
  %v1693 = vpop.f32.mrb[0].mxu0
  %v1694 = vpop.f32.mrb[0].mxu0
  %v1695 = vadd.f32 %v1406, %v1694
  %v1696 = vpop.f32.mrb[0].mxu0
  %1697 = vmatprep.mubr.bf16.mxu0 0
  %1698 = vmatmul.mubr.bf16.gmra.mrb[0].mxu0 %v978
  %v1699 = vpop.f32.mrb[0].mxu0
  %v1700 = vadd.f32 %v1411, %v1699
  %v1701 = vpop.f32.mrb[0].mxu0
  %v1702 = vpop.f32.mrb[0].mxu0
  %v1703 = vadd.f32 %v1414, %v1702
  %v1704 = vpop.f32.mrb[0].mxu0
  %1705 = vmatprep.mubr.bf16.mxu0 0
  %1706 = vmatmul.mubr.bf16.gmra.mrb[0].mxu0 %v981
  %v1707 = vpop.f32.mrb[0].mxu0
  %v1708 = vadd.f32 %v1419, %v1707
  %v1709 = vpop.f32.mrb[0].mxu0
  %v1710 = vpop.f32.mrb[0].mxu0
  %v1711 = vadd.f32 %v1422, %v1710
  %v1712 = vpop.f32.mrb[0].mxu0
  %1713 = vmatprep.mubr.bf16.mxu0 0
  %1714 = vmatmul.mubr.bf16.gmra.mrb[0].mxu0 %v984
  %v1715 = vpop.f32.mrb[0].mxu0
  %v1716 = vadd.f32 %v1427, %v1715
  %v1717 = vpop.f32.mrb[0].mxu0
  %v1718 = vpop.f32.mrb[0].mxu0
  %v1719 = vadd.f32 %v1430, %v1718
  %v1720 = vpop.f32.mrb[0].mxu0
  %1721 = vmatprep.mubr.bf16.mxu0 0
  %1722 = vmatmul.mubr.bf16.gmra.mrb[0].mxu0 %v987
  %v1723 = vpop.f32.mrb[0].mxu0
  %v1724 = vadd.f32 %v1435, %v1723
  %v1725 = vpop.f32.mrb[0].mxu0
  %v1726 = vpop.f32.mrb[0].mxu0
  %v1727 = vadd.f32 %v1438, %v1726
  %v1728 = vpop.f32.mrb[0].mxu0
  %1729 = vmatprep.mubr.bf16.mxu0 0
  %1730 = vmatmul.mubr.bf16.gmra.mrb[0].mxu0 %v990
  %v1731 = vpop.f32.mrb[0].mxu0
  %v1732 = vadd.f32 %v1443, %v1731
  %v1733 = vpop.f32.mrb[0].mxu0
  %v1734 = vpop.f32.mrb[0].mxu0
  %v1735 = vadd.f32 %v1446, %v1734
  %v1736 = vpop.f32.mrb[0].mxu0
  %1737 = vmatprep.mubr.bf16.mxu0 0
  %1738 = vmatmul.mubr.bf16.gmra.mrb[0].mxu0 %v993
  %v1739 = vpop.f32.mrb[0].mxu0
  %v1740 = vadd.f32 %v1451, %v1739
  %v1741 = vpop.f32.mrb[0].mxu0
  %v1742 = vpop.f32.mrb[0].mxu0
  %v1743 = vadd.f32 %v1454, %v1742
  %v1744 = vpop.f32.mrb[0].mxu0
  %1745 = vmatprep.mubr.bf16.mxu0 0
  %1746 = vmatmul.mubr.bf16.gmra.mrb[0].mxu0 %v996
  %v1747 = vpop.f32.mrb[0].mxu0
  %v1748 = vadd.f32 %v1459, %v1747
  %v1749 = vpop.f32.mrb[0].mxu0
  %v1750 = vpop.f32.mrb[0].mxu0
  %v1751 = vadd.f32 %v1462, %v1750
  %v1752 = vpop.f32.mrb[0].mxu0
  %1753 = vmatprep.mubr.bf16.mxu0 0
  %1754 = vmatmul.mubr.bf16.gmra.mrb[0].mxu0 %v999
  %v1755 = vpop.f32.mrb[0].mxu0
  %v1756 = vadd.f32 %v1467, %v1755
  %v1757 = vpop.f32.mrb[0].mxu0
  %v1758 = vpop.f32.mrb[0].mxu0
  %v1759 = vadd.f32 %v1470, %v1758
  %v1760 = vpop.f32.mrb[0].mxu0
  %1761 = vmatprep.mubr.bf16.mxu0 0
  %1762 = vmatmul.mubr.bf16.gmra.mrb[0].mxu0 %v1002
  %v1763 = vpop.f32.mrb[0].mxu0
  %v1764 = vadd.f32 %v1475, %v1763
  %v1765 = vpop.f32.mrb[0].mxu0
  %v1766 = vpop.f32.mrb[0].mxu0
  %v1767 = vadd.f32 %v1478, %v1766
  %v1768 = vpop.f32.mrb[0].mxu0
  %1769 = vmatprep.mubr.bf16.mxu0 0
  %1770 = vmatmul.mubr.bf16.gmra.mrb[0].mxu0 %v1134
  %v1771 = vpop.f32.mrb[0].mxu0
  %v1772 = vadd.f32 %v1483, %v1771
  %v1773 = vpop.f32.mrb[0].mxu0
  %v1774 = vpop.f32.mrb[0].mxu0
  %v1775 = vadd.f32 %v1486, %v1774
  %v1776 = vpop.f32.mrb[0].mxu0
  %1777 = vmatprep.mubr.bf16.mxu0 0
  %1778 = vmatmul.mubr.bf16.gmra.mrb[0].mxu0 %v1137
  %v1779 = vpop.f32.mrb[0].mxu0
  %v1780 = vadd.f32 %v1491, %v1779
  %v1781 = vpop.f32.mrb[0].mxu0
  %v1782 = vpop.f32.mrb[0].mxu0
  %v1783 = vadd.f32 %v1494, %v1782
  %v1784 = vpop.f32.mrb[0].mxu0
  %1785 = vmatprep.mubr.bf16.mxu0 0
  %1786 = vmatmul.mubr.bf16.gmra.mrb[0].mxu0 %v1010
  %v1787 = vpop.f32.mrb[0].mxu0
  %v1788 = vadd.f32 %v1499, %v1787
  %v1789 = vpop.f32.mrb[0].mxu0
  %v1790 = vpop.f32.mrb[0].mxu0
  %v1791 = vadd.f32 %v1502, %v1790
  %v1792 = vpop.f32.mrb[0].mxu0
  %1793 = vmatprep.mubr.bf16.mxu0 0
  %1794 = vmatmul.mubr.bf16.gmra.mrb[0].mxu0 %v1013
  %v1795 = vpop.f32.mrb[0].mxu0
  %v1796 = vadd.f32 %v1507, %v1795
  %v1797 = vpop.f32.mrb[0].mxu0
  %v1798 = vpop.f32.mrb[0].mxu0
  %v1799 = vadd.f32 %v1510, %v1798
  %v1800 = vpop.f32.mrb[0].mxu0
  %1801 = vmatprep.mubr.bf16.mxu0 0
  %1802 = vmatmul.mubr.bf16.gmra.mrb[0].mxu0 %v1016
  %v1803 = vpop.f32.mrb[0].mxu0
  %v1804 = vadd.f32 %v1515, %v1803
  %v1805 = vpop.f32.mrb[0].mxu0
  %v1806 = vpop.f32.mrb[0].mxu0
  %v1807 = vadd.f32 %v1518, %v1806
  %v1808 = vpop.f32.mrb[0].mxu0
  %1809 = vmatprep.mubr.bf16.mxu0 0
  %1810 = vmatmul.mubr.bf16.gmra.mrb[0].mxu0 %v1019
  %v1811 = vpop.f32.mrb[0].mxu0
  %v1812 = vadd.f32 %v1523, %v1811
  %v1813 = vpop.f32.mrb[0].mxu0
  %v1814 = vpop.f32.mrb[0].mxu0
  %v1815 = vadd.f32 %v1526, %v1814
  %v1816 = vpop.f32.mrb[0].mxu0
  %1817 = vmatprep.mubr.bf16.mxu0 0
  %1818 = vmatmul.mubr.bf16.gmra.mrb[0].mxu0 %v1022
  %v1819 = vpop.f32.mrb[0].mxu0
  %v1820 = vadd.f32 %v1531, %v1819
  %v1821 = vpop.f32.mrb[0].mxu0
  %v1822 = vpop.f32.mrb[0].mxu0
  %v1823 = vadd.f32 %v1534, %v1822
  %v1824 = vpop.f32.mrb[0].mxu0
  %1825 = vmatprep.mubr.bf16.mxu0 0
  %1826 = vmatmul.mubr.bf16.gmra.mrb[0].mxu0 %v1025
  %v1827 = vpop.f32.mrb[0].mxu0
  %v1828 = vadd.f32 %v1539, %v1827
  %v1829 = vpop.f32.mrb[0].mxu0
  %v1830 = vpop.f32.mrb[0].mxu0
  %v1831 = vadd.f32 %v1542, %v1830
  %v1832 = vpop.f32.mrb[0].mxu0
  %1833 = vmatprep.mubr.bf16.mxu0 0
  %1834 = vmatmul.mubr.bf16.gmra.mrb[0].mxu0 %v1028
  %v1835 = vpop.f32.mrb[0].mxu0
  %v1836 = vadd.f32 %v1547, %v1835
  %v1837 = vpop.f32.mrb[0].mxu0
  %v1838 = vpop.f32.mrb[0].mxu0
  %v1839 = vadd.f32 %v1550, %v1838
  %v1840 = vpop.f32.mrb[0].mxu0
  %1841 = vmatprep.mubr.bf16.mxu0 0
  %1842 = vmatmul.mubr.bf16.gmra.mrb[0].mxu0 %v1031
  %v1843 = vpop.f32.mrb[0].mxu0
  %v1844 = vadd.f32 %v1555, %v1843
  %v1845 = vpop.f32.mrb[0].mxu0
  %v1846 = vpop.f32.mrb[0].mxu0
  %v1847 = vadd.f32 %v1558, %v1846
  %v1848 = vpop.f32.mrb[0].mxu0
  %1849 = vmatprep.mubr.bf16.mxu0 0
  %1850 = vmatmul.mubr.bf16.gmra.mrb[0].mxu0 %v1034
  %v1851 = vpop.f32.mrb[0].mxu0
  %v1852 = vadd.f32 %v1563, %v1851
  %v1853 = vpop.f32.mrb[0].mxu0
  %v1854 = vpop.f32.mrb[0].mxu0
  %v1855 = vadd.f32 %v1566, %v1854
  %v1856 = vpop.f32.mrb[0].mxu0
  %1857 = vmatprep.mubr.bf16.mxu0 0
  %1858 = vmatmul.mubr.bf16.gmra.mrb[0].mxu0 %v1037
  %v1859 = vpop.f32.mrb[0].mxu0
  %v1860 = vadd.f32 %v1571, %v1859
  %v1861 = vpop.f32.mrb[0].mxu0
  %v1862 = vpop.f32.mrb[0].mxu0
  %v1863 = vadd.f32 %v1574, %v1862
  %v1864 = vpop.f32.mrb[0].mxu0
  %1865 = vmatprep.mubr.bf16.mxu0 0
  %1866 = vmatmul.mubr.bf16.gmra.mrb[0].mxu0 %v1040
  %v1867 = vpop.f32.mrb[0].mxu0
  %v1868 = vadd.f32 %v1579, %v1867
  %v1869 = vpop.f32.mrb[0].mxu0
  %v1870 = vpop.f32.mrb[0].mxu0
  %v1871 = vadd.f32 %v1582, %v1870
  %v1872 = vpop.f32.mrb[0].mxu0
  %1873 = vmatprep.mubr.bf16.mxu0 0
  %1874 = vmatmul.mubr.bf16.gmra.mrb[0].mxu0 %v1043
  %v1875 = vpop.f32.mrb[0].mxu0
  %v1876 = vadd.f32 %v1587, %v1875
  %v1877 = vpop.f32.mrb[0].mxu0
  %v1878 = vpop.f32.mrb[0].mxu0
  %v1879 = vadd.f32 %v1590, %v1878
  %v1880 = vpop.f32.mrb[0].mxu0
  %1881 = vmatprep.mubr.bf16.mxu0 0
  %1882 = vmatmul.mubr.bf16.gmra.mrb[0].mxu0 %v1046
  %v1883 = vpop.f32.mrb[0].mxu0
  %v1884 = vadd.f32 %v1595, %v1883
  %v1885 = vpop.f32.mrb[0].mxu0
  %v1886 = vpop.f32.mrb[0].mxu0
  %v1887 = vadd.f32 %v1598, %v1886
  %v1888 = vpop.f32.mrb[0].mxu0
  %1889 = vmatprep.mubr.bf16.mxu0 0
  %1890 = vmatmul.mubr.bf16.gmra.mrb[0].mxu0 %v1049
  %v1891 = vpop.f32.mrb[0].mxu0
  %v1892 = vadd.f32 %v1603, %v1891
  %v1893 = vpop.f32.mrb[0].mxu0
  %v1894 = vpop.f32.mrb[0].mxu0
  %v1895 = vadd.f32 %v1606, %v1894
  %v1896 = vpop.f32.mrb[0].mxu0
  %1897 = vmatprep.mubr.bf16.mxu0 0
  %1898 = vmatmul.mubr.bf16.gmra.mrb[0].mxu0 %v1139
  %v1899 = vpop.f32.mrb[0].mxu0
  %v1900 = vadd.f32 %v1611, %v1899
  %v1901 = vpop.f32.mrb[0].mxu0
  %v1902 = vpop.f32.mrb[0].mxu0
  %v1903 = vadd.f32 %v1614, %v1902
  %v1904 = vpop.f32.mrb[0].mxu0
  %1905 = vmatprep.mubr.bf16.mxu0 0
  %1906 = vmatmul.mubr.bf16.gmra.mrb[0].mxu0 %v1142
  %v1907 = vpop.f32.mrb[0].mxu0
  %v1908 = vadd.f32 %v1619, %v1907
  %v1909 = vpop.f32.mrb[0].mxu0
  %v1910 = vpop.f32.mrb[0].mxu0
  %v1911 = vadd.f32 %v1622, %v1910
  %v1912 = vpop.f32.mrb[0].mxu0
  %1913 = vdwg.mxu0
  %v1962 = vunpack.c.l.b16 %v1053
  %v1963 = vunpack.c.l.b16 %v1054
  %v1964 = vunpack.c.l.b16 %v1055
  %v1965 = vunpack.c.l.b16 %v1056
  %v1966 = vunpack.c.l.b16 %v1057
  %v1967 = vunpack.c.l.b16 %v1058
  %v1968 = vunpack.c.l.b16 %v1059
  %v1969 = vunpack.c.l.b16 %v1060
  %v1970 = vunpack.c.l.b16 %v1061
  %v1971 = vunpack.c.l.b16 %v1062
  %v1972 = vunpack.c.l.b16 %v1063
  %v1973 = vunpack.c.l.b16 %v1064
  %v1974 = vunpack.c.l.b16 %v1065
  %v1975 = vunpack.c.l.b16 %v1066
  %v1976 = vunpack.c.l.b16 %v1067
  %v1977 = vunpack.c.l.b16 %v1068
  %v1978 = vunpack.c.l.b16 %v1069
  %v1979 = vunpack.c.l.b16 %v1070
  %v1980 = vunpack.c.l.b16 %v1071
  %v1981 = vunpack.c.l.b16 %v1072
  %v1982 = vunpack.c.l.b16 %v1073
  %v1983 = vunpack.c.l.b16 %v1074
  %v1984 = vunpack.c.l.b16 %v1075
  %v1985 = vunpack.c.l.b16 %v1076
  %v1986 = vunpack.c.l.b16 %v1077
  %v1987 = vunpack.c.l.b16 %v1078
  %v1988 = vunpack.c.l.b16 %v1079
  %v1989 = vunpack.c.l.b16 %v1080
  %v1990 = vunpack.c.l.b16 %v1081
  %v1991 = vunpack.c.l.b16 %v1082
  %v1992 = vunpack.c.l.b16 %v1083
  %v1993 = vunpack.c.l.b16 %v1084
  %v1994 = vunpack.c.l.b16 %v1085
  %v1995 = vunpack.c.l.b16 %v1086
  %v1996 = vunpack.c.l.b16 %v1087
  %v1997 = vunpack.c.l.b16 %v1088
  %v1998 = vunpack.c.l.b16 %v1089
  %v1999 = vunpack.c.l.b16 %v1090
  %v2000 = vunpack.c.l.b16 %v1091
  %v2001 = vunpack.c.l.b16 %v1092
  %v2002 = vunpack.c.l.b16 %v1093
  %v2003 = vunpack.c.l.b16 %v1094
  %v2004 = vunpack.c.l.b16 %v1095
  %v2005 = vunpack.c.l.b16 %v1096
  %v2006 = vunpack.c.l.b16 %v1097
  %v2007 = vunpack.c.l.b16 %v1098
  %v2008 = vunpack.c.l.b16 %v1099
  %v2009 = vunpack.c.l.b16 %v1100
  %v2010 = vpack.c.b16 %v1963, %v1962
  %v2011 = vpack.c.b16 %v1965, %v1964
  %v2012 = vpack.c.b16 %v1967, %v1966
  %v2013 = vpack.c.b16 %v1969, %v1968
  %v2014 = vpack.c.b16 %v1971, %v1970
  %v2015 = vpack.c.b16 %v1973, %v1972
  %v2016 = vpack.c.b16 %v1975, %v1974
  %v2017 = vpack.c.b16 %v1977, %v1976
  %v2018 = vpack.c.b16 %v1979, %v1978
  %v2019 = vpack.c.b16 %v1981, %v1980
  %v2020 = vpack.c.b16 %v1983, %v1982
  %v2021 = vpack.c.b16 %v1985, %v1984
  %v2022 = vpack.c.b16 %v1987, %v1986
  %v2023 = vpack.c.b16 %v1989, %v1988
  %v2024 = vpack.c.b16 %v1991, %v1990
  %v2025 = vpack.c.b16 %v1993, %v1992
  %v2026 = vpack.c.b16 %v1995, %v1994
  %v2027 = vpack.c.b16 %v1997, %v1996
  %v2028 = vpack.c.b16 %v1999, %v1998
  %v2029 = vpack.c.b16 %v2001, %v2000
  %v2030 = vpack.c.b16 %v2003, %v2002
  %v2031 = vpack.c.b16 %v2005, %v2004
  %v2032 = vpack.c.b16 %v2007, %v2006
  %v2033 = vpack.c.b16 %v2009, %v2008
  %2058 = vmatprep.subr.bf16.mxu0 0
  %2059 = vmatpush1.bf16.msra.mxu0 %v2010
  %2060 = vmatprep.subr.bf16.mxu0 0
  %2061 = vmatpush1.bf16.msra.mxu0 %v2011
  %2062 = vmatprep.subr.bf16.mxu0 0
  %2063 = vmatpush1.bf16.msra.mxu0 %v2012
  %2064 = vmatprep.subr.bf16.mxu0 0
  %2065 = vmatpush1.bf16.msra.mxu0 %v2013
  %2066 = vmatprep.subr.bf16.mxu0 0
  %2067 = vmatpush1.bf16.msra.mxu0 %v2014
  %2068 = vmatprep.subr.bf16.mxu0 0
  %2069 = vmatpush1.bf16.msra.mxu0 %v2015
  %2070 = vmatprep.subr.bf16.mxu0 0
  %2071 = vmatpush1.bf16.msra.mxu0 %v2016
  %2072 = vmatprep.subr.bf16.mxu0 0
  %2073 = vmatpush1.bf16.msra.mxu0 %v2017
  %2074 = vmatprep.subr.bf16.mxu0 0
  %2075 = vmatpush1.bf16.msra.mxu0 %v2018
  %2076 = vmatprep.subr.bf16.mxu0 0
  %2077 = vmatpush1.bf16.msra.mxu0 %v2019
  %2078 = vmatprep.subr.bf16.mxu0 0
  %2079 = vmatpush1.bf16.msra.mxu0 %v2020
  %2080 = vmatprep.subr.bf16.mxu0 0
  %2081 = vmatpush1.bf16.msra.mxu0 %v2021
  %2082 = vmatprep.subr.bf16.mxu0 0
  %2083 = vmatpush1.bf16.msra.mxu0 %v2022
  %2084 = vmatprep.subr.bf16.mxu0 0
  %2085 = vmatpush1.bf16.msra.mxu0 %v2023
  %2086 = vmatprep.subr.bf16.mxu0 0
  %2087 = vmatpush1.bf16.msra.mxu0 %v2024
  %2088 = vmatprep.subr.bf16.mxu0 0
  %2089 = vmatpush1.bf16.msra.mxu0 %v2025
  %2090 = vmatprep.mubr.bf16.mxu0 %v959
  %2091 = vmatmul.mubr.bf16.gmra.mrb[0].mxu0 %v958
  %v2092 = vpop.f32.mrb[0].mxu0
  %v2093 = vadd.f32 %v1660, %v2092
  %v2094 = vpop.f32.mrb[0].mxu0
  %v2095 = vpop.f32.mrb[0].mxu0
  %v2096 = vadd.f32 %v1663, %v2095
  %v2097 = vpop.f32.mrb[0].mxu0
  %2098 = vmatprep.mubr.bf16.mxu0 %v962
  %2099 = vmatmul.mubr.bf16.gmra.mrb[0].mxu0 %v961
  %v2100 = vpop.f32.mrb[0].mxu0
  %v2101 = vadd.f32 %v1668, %v2100
  %v2102 = vpop.f32.mrb[0].mxu0
  %v2103 = vpop.f32.mrb[0].mxu0
  %v2104 = vadd.f32 %v1671, %v2103
  %v2105 = vpop.f32.mrb[0].mxu0
  %2106 = vmatprep.mubr.bf16.mxu0 %v965
  %2107 = vmatmul.mubr.bf16.gmra.mrb[0].mxu0 %v964
  %v2108 = vpop.f32.mrb[0].mxu0
  %v2109 = vadd.f32 %v1676, %v2108
  %v2110 = vpop.f32.mrb[0].mxu0
  %v2111 = vpop.f32.mrb[0].mxu0
  %v2112 = vadd.f32 %v1679, %v2111
  %v2113 = vpop.f32.mrb[0].mxu0
  %2114 = vmatprep.mubr.bf16.mxu0 %v968
  %2115 = vmatmul.mubr.bf16.gmra.mrb[0].mxu0 %v967
  %v2116 = vpop.f32.mrb[0].mxu0
  %v2117 = vadd.f32 %v1684, %v2116
  %v2118 = vpop.f32.mrb[0].mxu0
  %v2119 = vpop.f32.mrb[0].mxu0
  %v2120 = vadd.f32 %v1687, %v2119
  %v2121 = vpop.f32.mrb[0].mxu0
  %2122 = vmatprep.mubr.bf16.mxu0 %v971
  %2123 = vmatmul.mubr.bf16.gmra.mrb[0].mxu0 %v970
  %v2124 = vpop.f32.mrb[0].mxu0
  %v2125 = vadd.f32 %v1692, %v2124
  %v2126 = vpop.f32.mrb[0].mxu0
  %v2127 = vpop.f32.mrb[0].mxu0
  %v2128 = vadd.f32 %v1695, %v2127
  %v2129 = vpop.f32.mrb[0].mxu0
  %2130 = vmatprep.mubr.bf16.mxu0 %v974
  %2131 = vmatmul.mubr.bf16.gmra.mrb[0].mxu0 %v973
  %v2132 = vpop.f32.mrb[0].mxu0
  %v2133 = vadd.f32 %v1700, %v2132
  %v2134 = vpop.f32.mrb[0].mxu0
  %v2135 = vpop.f32.mrb[0].mxu0
  %v2136 = vadd.f32 %v1703, %v2135
  %v2137 = vpop.f32.mrb[0].mxu0
  %2138 = vmatprep.mubr.bf16.mxu0 %v977
  %2139 = vmatmul.mubr.bf16.gmra.mrb[0].mxu0 %v976
  %v2140 = vpop.f32.mrb[0].mxu0
  %v2141 = vadd.f32 %v1708, %v2140
  %v2142 = vpop.f32.mrb[0].mxu0
  %v2143 = vpop.f32.mrb[0].mxu0
  %v2144 = vadd.f32 %v1711, %v2143
  %v2145 = vpop.f32.mrb[0].mxu0
  %2146 = vmatprep.mubr.bf16.mxu0 %v980
  %2147 = vmatmul.mubr.bf16.gmra.mrb[0].mxu0 %v979
  %v2148 = vpop.f32.mrb[0].mxu0
  %v2149 = vadd.f32 %v1716, %v2148
  %v2150 = vpop.f32.mrb[0].mxu0
  %v2151 = vpop.f32.mrb[0].mxu0
  %v2152 = vadd.f32 %v1719, %v2151
  %v2153 = vpop.f32.mrb[0].mxu0
  %2154 = vmatprep.mubr.bf16.mxu0 %v983
  %2155 = vmatmul.mubr.bf16.gmra.mrb[0].mxu0 %v982
  %v2156 = vpop.f32.mrb[0].mxu0
  %v2157 = vadd.f32 %v1724, %v2156
  %v2158 = vpop.f32.mrb[0].mxu0
  %v2159 = vpop.f32.mrb[0].mxu0
  %v2160 = vadd.f32 %v1727, %v2159
  %v2161 = vpop.f32.mrb[0].mxu0
  %2162 = vmatprep.mubr.bf16.mxu0 %v986
  %2163 = vmatmul.mubr.bf16.gmra.mrb[0].mxu0 %v985
  %v2164 = vpop.f32.mrb[0].mxu0
  %v2165 = vadd.f32 %v1732, %v2164
  %v2166 = vpop.f32.mrb[0].mxu0
  %v2167 = vpop.f32.mrb[0].mxu0
  %v2168 = vadd.f32 %v1735, %v2167
  %v2169 = vpop.f32.mrb[0].mxu0
  %2170 = vmatprep.mubr.bf16.mxu0 %v989
  %2171 = vmatmul.mubr.bf16.gmra.mrb[0].mxu0 %v988
  %v2172 = vpop.f32.mrb[0].mxu0
  %v2173 = vadd.f32 %v1740, %v2172
  %v2174 = vpop.f32.mrb[0].mxu0
  %v2175 = vpop.f32.mrb[0].mxu0
  %v2176 = vadd.f32 %v1743, %v2175
  %v2177 = vpop.f32.mrb[0].mxu0
  %2178 = vmatprep.mubr.bf16.mxu0 %v992
  %2179 = vmatmul.mubr.bf16.gmra.mrb[0].mxu0 %v991
  %v2180 = vpop.f32.mrb[0].mxu0
  %v2181 = vadd.f32 %v1748, %v2180
  %v2182 = vpop.f32.mrb[0].mxu0
  %v2183 = vpop.f32.mrb[0].mxu0
  %v2184 = vadd.f32 %v1751, %v2183
  %v2185 = vpop.f32.mrb[0].mxu0
  %2186 = vmatprep.mubr.bf16.mxu0 %v995
  %2187 = vmatmul.mubr.bf16.gmra.mrb[0].mxu0 %v994
  %v2188 = vpop.f32.mrb[0].mxu0
  %v2189 = vadd.f32 %v1756, %v2188
  %v2190 = vpop.f32.mrb[0].mxu0
  %v2191 = vpop.f32.mrb[0].mxu0
  %v2192 = vadd.f32 %v1759, %v2191
  %v2193 = vpop.f32.mrb[0].mxu0
  %2194 = vmatprep.mubr.bf16.mxu0 %v998
  %2195 = vmatmul.mubr.bf16.gmra.mrb[0].mxu0 %v997
  %v2196 = vpop.f32.mrb[0].mxu0
  %v2197 = vadd.f32 %v1764, %v2196
  %v2198 = vpop.f32.mrb[0].mxu0
  %v2199 = vpop.f32.mrb[0].mxu0
  %v2200 = vadd.f32 %v1767, %v2199
  %v2201 = vpop.f32.mrb[0].mxu0
  %2202 = vmatprep.mubr.bf16.mxu0 %v1001
  %2203 = vmatmul.mubr.bf16.gmra.mrb[0].mxu0 %v1000
  %v2204 = vpop.f32.mrb[0].mxu0
  %v2205 = vadd.f32 %v1772, %v2204
  %v2206 = vpop.f32.mrb[0].mxu0
  %v2207 = vpop.f32.mrb[0].mxu0
  %v2208 = vadd.f32 %v1775, %v2207
  %v2209 = vpop.f32.mrb[0].mxu0
  %2210 = vmatprep.mubr.bf16.mxu0 %v1004
  %2211 = vmatmul.mubr.bf16.gmra.mrb[0].mxu0 %v1003
  %v2212 = vpop.f32.mrb[0].mxu0
  %v2213 = vadd.f32 %v1780, %v2212
  %v2214 = vpop.f32.mrb[0].mxu0
  %v2215 = vpop.f32.mrb[0].mxu0
  %v2216 = vadd.f32 %v1783, %v2215
  %v2217 = vpop.f32.mrb[0].mxu0
  %2218 = vmatprep.mubr.bf16.mxu0 %v959
  %2219 = vmatmul.mubr.bf16.gmra.mrb[0].mxu0 %v1006
  %v2220 = vpop.f32.mrb[0].mxu0
  %v2221 = vadd.f32 %v1788, %v2220
  %v2222 = vpop.f32.mrb[0].mxu0
  %v2223 = vpop.f32.mrb[0].mxu0
  %v2224 = vadd.f32 %v1791, %v2223
  %v2225 = vpop.f32.mrb[0].mxu0
  %2226 = vmatprep.mubr.bf16.mxu0 %v1009
  %2227 = vmatmul.mubr.bf16.gmra.mrb[0].mxu0 %v1008
  %v2228 = vpop.f32.mrb[0].mxu0
  %v2229 = vadd.f32 %v1796, %v2228
  %v2230 = vpop.f32.mrb[0].mxu0
  %v2231 = vpop.f32.mrb[0].mxu0
  %v2232 = vadd.f32 %v1799, %v2231
  %v2233 = vpop.f32.mrb[0].mxu0
  %2234 = vmatprep.mubr.bf16.mxu0 %v1012
  %2235 = vmatmul.mubr.bf16.gmra.mrb[0].mxu0 %v1011
  %v2236 = vpop.f32.mrb[0].mxu0
  %v2237 = vadd.f32 %v1804, %v2236
  %v2238 = vpop.f32.mrb[0].mxu0
  %v2239 = vpop.f32.mrb[0].mxu0
  %v2240 = vadd.f32 %v1807, %v2239
  %v2241 = vpop.f32.mrb[0].mxu0
  %2242 = vmatprep.mubr.bf16.mxu0 %v1015
  %2243 = vmatmul.mubr.bf16.gmra.mrb[0].mxu0 %v1014
  %v2244 = vpop.f32.mrb[0].mxu0
  %v2245 = vadd.f32 %v1812, %v2244
  %v2246 = vpop.f32.mrb[0].mxu0
  %v2247 = vpop.f32.mrb[0].mxu0
  %v2248 = vadd.f32 %v1815, %v2247
  %v2249 = vpop.f32.mrb[0].mxu0
  %2250 = vmatprep.mubr.bf16.mxu0 %v1018
  %2251 = vmatmul.mubr.bf16.gmra.mrb[0].mxu0 %v1017
  %v2252 = vpop.f32.mrb[0].mxu0
  %v2253 = vadd.f32 %v1820, %v2252
  %v2254 = vpop.f32.mrb[0].mxu0
  %v2255 = vpop.f32.mrb[0].mxu0
  %v2256 = vadd.f32 %v1823, %v2255
  %v2257 = vpop.f32.mrb[0].mxu0
  %2258 = vmatprep.mubr.bf16.mxu0 %v1021
  %2259 = vmatmul.mubr.bf16.gmra.mrb[0].mxu0 %v1020
  %v2260 = vpop.f32.mrb[0].mxu0
  %v2261 = vadd.f32 %v1828, %v2260
  %v2262 = vpop.f32.mrb[0].mxu0
  %v2263 = vpop.f32.mrb[0].mxu0
  %v2264 = vadd.f32 %v1831, %v2263
  %v2265 = vpop.f32.mrb[0].mxu0
  %2266 = vmatprep.mubr.bf16.mxu0 %v1024
  %2267 = vmatmul.mubr.bf16.gmra.mrb[0].mxu0 %v1023
  %v2268 = vpop.f32.mrb[0].mxu0
  %v2269 = vadd.f32 %v1836, %v2268
  %v2270 = vpop.f32.mrb[0].mxu0
  %v2271 = vpop.f32.mrb[0].mxu0
  %v2272 = vadd.f32 %v1839, %v2271
  %v2273 = vpop.f32.mrb[0].mxu0
  %2274 = vmatprep.mubr.bf16.mxu0 %v1027
  %2275 = vmatmul.mubr.bf16.gmra.mrb[0].mxu0 %v1026
  %v2276 = vpop.f32.mrb[0].mxu0
  %v2277 = vadd.f32 %v1844, %v2276
  %v2278 = vpop.f32.mrb[0].mxu0
  %v2279 = vpop.f32.mrb[0].mxu0
  %v2280 = vadd.f32 %v1847, %v2279
  %v2281 = vpop.f32.mrb[0].mxu0
  %2282 = vmatprep.mubr.bf16.mxu0 %v1030
  %2283 = vmatmul.mubr.bf16.gmra.mrb[0].mxu0 %v1029
  %v2284 = vpop.f32.mrb[0].mxu0
  %v2285 = vadd.f32 %v1852, %v2284
  %v2286 = vpop.f32.mrb[0].mxu0
  %v2287 = vpop.f32.mrb[0].mxu0
  %v2288 = vadd.f32 %v1855, %v2287
  %v2289 = vpop.f32.mrb[0].mxu0
  %2290 = vmatprep.mubr.bf16.mxu0 %v1033
  %2291 = vmatmul.mubr.bf16.gmra.mrb[0].mxu0 %v1032
  %v2292 = vpop.f32.mrb[0].mxu0
  %v2293 = vadd.f32 %v1860, %v2292
  %v2294 = vpop.f32.mrb[0].mxu0
  %v2295 = vpop.f32.mrb[0].mxu0
  %v2296 = vadd.f32 %v1863, %v2295
  %v2297 = vpop.f32.mrb[0].mxu0
  %2298 = vmatprep.mubr.bf16.mxu0 %v1036
  %2299 = vmatmul.mubr.bf16.gmra.mrb[0].mxu0 %v1035
  %v2300 = vpop.f32.mrb[0].mxu0
  %v2301 = vadd.f32 %v1868, %v2300
  %v2302 = vpop.f32.mrb[0].mxu0
  %v2303 = vpop.f32.mrb[0].mxu0
  %v2304 = vadd.f32 %v1871, %v2303
  %v2305 = vpop.f32.mrb[0].mxu0
  %2306 = vmatprep.mubr.bf16.mxu0 %v1039
  %2307 = vmatmul.mubr.bf16.gmra.mrb[0].mxu0 %v1038
  %v2308 = vpop.f32.mrb[0].mxu0
  %v2309 = vadd.f32 %v1876, %v2308
  %v2310 = vpop.f32.mrb[0].mxu0
  %v2311 = vpop.f32.mrb[0].mxu0
  %v2312 = vadd.f32 %v1879, %v2311
  %v2313 = vpop.f32.mrb[0].mxu0
  %2314 = vmatprep.mubr.bf16.mxu0 %v1042
  %2315 = vmatmul.mubr.bf16.gmra.mrb[0].mxu0 %v1041
  %v2316 = vpop.f32.mrb[0].mxu0
  %v2317 = vadd.f32 %v1884, %v2316
  %v2318 = vpop.f32.mrb[0].mxu0
  %v2319 = vpop.f32.mrb[0].mxu0
  %v2320 = vadd.f32 %v1887, %v2319
  %v2321 = vpop.f32.mrb[0].mxu0
  %2322 = vmatprep.mubr.bf16.mxu0 %v1045
  %2323 = vmatmul.mubr.bf16.gmra.mrb[0].mxu0 %v1044
  %v2324 = vpop.f32.mrb[0].mxu0
  %v2325 = vadd.f32 %v1892, %v2324
  %v2326 = vpop.f32.mrb[0].mxu0
  %v2327 = vpop.f32.mrb[0].mxu0
  %v2328 = vadd.f32 %v1895, %v2327
  %v2329 = vpop.f32.mrb[0].mxu0
  %2330 = vmatprep.mubr.bf16.mxu0 %v1048
  %2331 = vmatmul.mubr.bf16.gmra.mrb[0].mxu0 %v1047
  %v2332 = vpop.f32.mrb[0].mxu0
  %v2333 = vadd.f32 %v1900, %v2332
  %v2334 = vpop.f32.mrb[0].mxu0
  %v2335 = vpop.f32.mrb[0].mxu0
  %v2336 = vadd.f32 %v1903, %v2335
  %v2337 = vpop.f32.mrb[0].mxu0
  %2338 = vmatprep.mubr.bf16.mxu0 %v1051
  %2339 = vmatmul.mubr.bf16.gmra.mrb[0].mxu0 %v1050
  %v2340 = vpop.f32.mrb[0].mxu0
  %v2341 = vadd.f32 %v1908, %v2340
  %v2342 = vpop.f32.mrb[0].mxu0
  %v2343 = vpop.f32.mrb[0].mxu0
  %v2344 = vadd.f32 %v1911, %v2343
  %v2345 = vpop.f32.mrb[0].mxu0
  %2346 = vdwg.mxu0
  %2347 = vmatprep.subr.bf16.mxu0 0
  %2348 = vmatpush1.bf16.msra.mxu0 %v2026
  %2349 = vmatprep.subr.bf16.mxu0 0
  %2350 = vmatpush1.bf16.msra.mxu0 %v2027
  %2351 = vmatprep.subr.bf16.mxu0 0
  %2352 = vmatpush1.bf16.msra.mxu0 %v2028
  %2353 = vmatprep.subr.bf16.mxu0 0
  %2354 = vmatpush1.bf16.msra.mxu0 %v2029
  %2355 = vmatprep.subr.bf16.mxu0 0
  %2356 = vmatpush1.bf16.msra.mxu0 %v2030
  %2357 = vmatprep.subr.bf16.mxu0 0
  %2358 = vmatpush1.bf16.msra.mxu0 %v2031
  %2359 = vmatprep.subr.bf16.mxu0 0
  %2360 = vmatpush1.bf16.msra.mxu0 %v2032
  %2361 = vmatprep.subr.bf16.mxu0 0
  %2362 = vmatpush1.bf16.msra.mxu0 %v2033
  %2363 = vmatprep.subr.bf16.mxu0 0
  %2364 = vmatpush1.bf16.msra.mxu0 0
  %2365 = vmatprep.subr.bf16.mxu0 0
  %2366 = vmatpush1.bf16.msra.mxu0 0
  %2367 = vmatprep.subr.bf16.mxu0 0
  %2368 = vmatpush1.bf16.msra.mxu0 0
  %2369 = vmatprep.subr.bf16.mxu0 0
  %2370 = vmatpush1.bf16.msra.mxu0 0
  %2371 = vmatprep.subr.bf16.mxu0 0
  %2372 = vmatpush1.bf16.msra.mxu0 0
  %2373 = vmatprep.subr.bf16.mxu0 0
  %2374 = vmatpush1.bf16.msra.mxu0 0
  %2375 = vmatprep.subr.bf16.mxu0 0
  %2376 = vmatpush1.bf16.msra.mxu0 0
  %2377 = vmatprep.subr.bf16.mxu0 0
  %2378 = vmatpush1.bf16.msra.mxu0 0
  %2379 = vmatprep.mubr.bf16.mxu0 0
  %2380 = vmatmul.mubr.bf16.gmra.mrb[0].mxu0 %v960
  %v2381 = vpop.f32.mrb[0].mxu0
  %v2382 = vadd.f32 %v2093, %v2381
  %v2383 = vpop.f32.mrb[0].mxu0
  %v2384 = vpop.f32.mrb[0].mxu0
  %v2385 = vadd.f32 %v2096, %v2384
  %v2386 = vpop.f32.mrb[0].mxu0
  %2387 = vmatprep.mubr.bf16.mxu0 0
  %2388 = vmatmul.mubr.bf16.gmra.mrb[0].mxu0 %v963
  %v2389 = vpop.f32.mrb[0].mxu0
  %v2390 = vadd.f32 %v2101, %v2389
  %v2391 = vpop.f32.mrb[0].mxu0
  %v2392 = vpop.f32.mrb[0].mxu0
  %v2393 = vadd.f32 %v2104, %v2392
  %v2394 = vpop.f32.mrb[0].mxu0
  %2395 = vmatprep.mubr.bf16.mxu0 0
  %2396 = vmatmul.mubr.bf16.gmra.mrb[0].mxu0 %v966
  %v2397 = vpop.f32.mrb[0].mxu0
  %v2398 = vadd.f32 %v2109, %v2397
  %v2399 = vpop.f32.mrb[0].mxu0
  %v2400 = vpop.f32.mrb[0].mxu0
  %v2401 = vadd.f32 %v2112, %v2400
  %v2402 = vpop.f32.mrb[0].mxu0
  %2403 = vmatprep.mubr.bf16.mxu0 0
  %2404 = vmatmul.mubr.bf16.gmra.mrb[0].mxu0 %v969
  %v2405 = vpop.f32.mrb[0].mxu0
  %v2406 = vadd.f32 %v2117, %v2405
  %v2407 = vpop.f32.mrb[0].mxu0
  %v2408 = vpop.f32.mrb[0].mxu0
  %v2409 = vadd.f32 %v2120, %v2408
  %v2410 = vpop.f32.mrb[0].mxu0
  %2411 = vmatprep.mubr.bf16.mxu0 0
  %2412 = vmatmul.mubr.bf16.gmra.mrb[0].mxu0 %v972
  %v2413 = vpop.f32.mrb[0].mxu0
  %v2414 = vadd.f32 %v2125, %v2413
  %v2415 = vpop.f32.mrb[0].mxu0
  %v2416 = vpop.f32.mrb[0].mxu0
  %v2417 = vadd.f32 %v2128, %v2416
  %v2418 = vpop.f32.mrb[0].mxu0
  %2419 = vmatprep.mubr.bf16.mxu0 0
  %2420 = vmatmul.mubr.bf16.gmra.mrb[0].mxu0 %v975
  %v2421 = vpop.f32.mrb[0].mxu0
  %v2422 = vadd.f32 %v2133, %v2421
  %v2423 = vpop.f32.mrb[0].mxu0
  %v2424 = vpop.f32.mrb[0].mxu0
  %v2425 = vadd.f32 %v2136, %v2424
  %v2426 = vpop.f32.mrb[0].mxu0
  %2427 = vmatprep.mubr.bf16.mxu0 0
  %2428 = vmatmul.mubr.bf16.gmra.mrb[0].mxu0 %v978
  %v2429 = vpop.f32.mrb[0].mxu0
  %v2430 = vadd.f32 %v2141, %v2429
  %v2431 = vpop.f32.mrb[0].mxu0
  %v2432 = vpop.f32.mrb[0].mxu0
  %v2433 = vadd.f32 %v2144, %v2432
  %v2434 = vpop.f32.mrb[0].mxu0
  %2435 = vmatprep.mubr.bf16.mxu0 0
  %2436 = vmatmul.mubr.bf16.gmra.mrb[0].mxu0 %v981
  %v2437 = vpop.f32.mrb[0].mxu0
  %v2438 = vadd.f32 %v2149, %v2437
  %v2439 = vpop.f32.mrb[0].mxu0
  %v2440 = vpop.f32.mrb[0].mxu0
  %v2441 = vadd.f32 %v2152, %v2440
  %v2442 = vpop.f32.mrb[0].mxu0
  %2443 = vmatprep.mubr.bf16.mxu0 0
  %2444 = vmatmul.mubr.bf16.gmra.mrb[0].mxu0 %v984
  %v2445 = vpop.f32.mrb[0].mxu0
  %v2446 = vadd.f32 %v2157, %v2445
  %v2447 = vpop.f32.mrb[0].mxu0
  %v2448 = vpop.f32.mrb[0].mxu0
  %v2449 = vadd.f32 %v2160, %v2448
  %v2450 = vpop.f32.mrb[0].mxu0
  %2451 = vmatprep.mubr.bf16.mxu0 0
  %2452 = vmatmul.mubr.bf16.gmra.mrb[0].mxu0 %v987
  %v2453 = vpop.f32.mrb[0].mxu0
  %v2454 = vadd.f32 %v2165, %v2453
  %v2455 = vpop.f32.mrb[0].mxu0
  %v2456 = vpop.f32.mrb[0].mxu0
  %v2457 = vadd.f32 %v2168, %v2456
  %v2458 = vpop.f32.mrb[0].mxu0
  %2459 = vmatprep.mubr.bf16.mxu0 0
  %2460 = vmatmul.mubr.bf16.gmra.mrb[0].mxu0 %v990
  %v2461 = vpop.f32.mrb[0].mxu0
  %v2462 = vadd.f32 %v2173, %v2461
  %v2463 = vpop.f32.mrb[0].mxu0
  %v2464 = vpop.f32.mrb[0].mxu0
  %v2465 = vadd.f32 %v2176, %v2464
  %v2466 = vpop.f32.mrb[0].mxu0
  %2467 = vmatprep.mubr.bf16.mxu0 0
  %2468 = vmatmul.mubr.bf16.gmra.mrb[0].mxu0 %v993
  %v2469 = vpop.f32.mrb[0].mxu0
  %v2470 = vadd.f32 %v2181, %v2469
  %v2471 = vpop.f32.mrb[0].mxu0
  %v2472 = vpop.f32.mrb[0].mxu0
  %v2473 = vadd.f32 %v2184, %v2472
  %v2474 = vpop.f32.mrb[0].mxu0
  %2475 = vmatprep.mubr.bf16.mxu0 0
  %2476 = vmatmul.mubr.bf16.gmra.mrb[0].mxu0 %v996
  %v2477 = vpop.f32.mrb[0].mxu0
  %v2478 = vadd.f32 %v2189, %v2477
  %v2479 = vpop.f32.mrb[0].mxu0
  %v2480 = vpop.f32.mrb[0].mxu0
  %v2481 = vadd.f32 %v2192, %v2480
  %v2482 = vpop.f32.mrb[0].mxu0
  %2483 = vmatprep.mubr.bf16.mxu0 0
  %2484 = vmatmul.mubr.bf16.gmra.mrb[0].mxu0 %v999
  %v2485 = vpop.f32.mrb[0].mxu0
  %v2486 = vadd.f32 %v2197, %v2485
  %v2487 = vpop.f32.mrb[0].mxu0
  %v2488 = vpop.f32.mrb[0].mxu0
  %v2489 = vadd.f32 %v2200, %v2488
  %v2490 = vpop.f32.mrb[0].mxu0
  %2491 = vmatprep.mubr.bf16.mxu0 0
  %2492 = vmatmul.mubr.bf16.gmra.mrb[0].mxu0 %v1002
  %v2493 = vpop.f32.mrb[0].mxu0
  %v2494 = vadd.f32 %v2205, %v2493
  %v2495 = vpop.f32.mrb[0].mxu0
  %v2496 = vpop.f32.mrb[0].mxu0
  %v2497 = vadd.f32 %v2208, %v2496
  %v2498 = vpop.f32.mrb[0].mxu0
  %2499 = vmatprep.mubr.bf16.mxu0 0
  %2500 = vmatmul.mubr.bf16.gmra.mrb[0].mxu0 %v1005
  %v2501 = vpop.f32.mrb[0].mxu0
  %v2502 = vadd.f32 %v2213, %v2501
  %v2503 = vpop.f32.mrb[0].mxu0
  %v2504 = vpop.f32.mrb[0].mxu0
  %v2505 = vadd.f32 %v2216, %v2504
  %v2506 = vpop.f32.mrb[0].mxu0
  %2507 = vmatprep.mubr.bf16.mxu0 0
  %2508 = vmatmul.mubr.bf16.gmra.mrb[0].mxu0 %v1007
  %v2509 = vpop.f32.mrb[0].mxu0
  %v2510 = vadd.f32 %v2221, %v2509
  %v2511 = vpop.f32.mrb[0].mxu0
  %v2512 = vpop.f32.mrb[0].mxu0
  %v2513 = vadd.f32 %v2224, %v2512
  %v2514 = vpop.f32.mrb[0].mxu0
  %2515 = vmatprep.mubr.bf16.mxu0 0
  %2516 = vmatmul.mubr.bf16.gmra.mrb[0].mxu0 %v1010
  %v2517 = vpop.f32.mrb[0].mxu0
  %v2518 = vadd.f32 %v2229, %v2517
  %v2519 = vpop.f32.mrb[0].mxu0
  %v2520 = vpop.f32.mrb[0].mxu0
  %v2521 = vadd.f32 %v2232, %v2520
  %v2522 = vpop.f32.mrb[0].mxu0
  %2523 = vmatprep.mubr.bf16.mxu0 0
  %2524 = vmatmul.mubr.bf16.gmra.mrb[0].mxu0 %v1013
  %v2525 = vpop.f32.mrb[0].mxu0
  %v2526 = vadd.f32 %v2237, %v2525
  %v2527 = vpop.f32.mrb[0].mxu0
  %v2528 = vpop.f32.mrb[0].mxu0
  %v2529 = vadd.f32 %v2240, %v2528
  %v2530 = vpop.f32.mrb[0].mxu0
  %2531 = vmatprep.mubr.bf16.mxu0 0
  %2532 = vmatmul.mubr.bf16.gmra.mrb[0].mxu0 %v1016
  %v2533 = vpop.f32.mrb[0].mxu0
  %v2534 = vadd.f32 %v2245, %v2533
  %v2535 = vpop.f32.mrb[0].mxu0
  %v2536 = vpop.f32.mrb[0].mxu0
  %v2537 = vadd.f32 %v2248, %v2536
  %v2538 = vpop.f32.mrb[0].mxu0
  %2539 = vmatprep.mubr.bf16.mxu0 0
  %2540 = vmatmul.mubr.bf16.gmra.mrb[0].mxu0 %v1019
  %v2541 = vpop.f32.mrb[0].mxu0
  %v2542 = vadd.f32 %v2253, %v2541
  %v2543 = vpop.f32.mrb[0].mxu0
  %v2544 = vpop.f32.mrb[0].mxu0
  %v2545 = vadd.f32 %v2256, %v2544
  %v2546 = vpop.f32.mrb[0].mxu0
  %2547 = vmatprep.mubr.bf16.mxu0 0
  %2548 = vmatmul.mubr.bf16.gmra.mrb[0].mxu0 %v1022
  %v2549 = vpop.f32.mrb[0].mxu0
  %v2550 = vadd.f32 %v2261, %v2549
  %v2551 = vpop.f32.mrb[0].mxu0
  %v2552 = vpop.f32.mrb[0].mxu0
  %v2553 = vadd.f32 %v2264, %v2552
  %v2554 = vpop.f32.mrb[0].mxu0
  %2555 = vmatprep.mubr.bf16.mxu0 0
  %2556 = vmatmul.mubr.bf16.gmra.mrb[0].mxu0 %v1025
  %v2557 = vpop.f32.mrb[0].mxu0
  %v2558 = vadd.f32 %v2269, %v2557
  %v2559 = vpop.f32.mrb[0].mxu0
  %v2560 = vpop.f32.mrb[0].mxu0
  %v2561 = vadd.f32 %v2272, %v2560
  %v2562 = vpop.f32.mrb[0].mxu0
  %2563 = vmatprep.mubr.bf16.mxu0 0
  %2564 = vmatmul.mubr.bf16.gmra.mrb[0].mxu0 %v1028
  %v2565 = vpop.f32.mrb[0].mxu0
  %v2566 = vadd.f32 %v2277, %v2565
  %v2567 = vpop.f32.mrb[0].mxu0
  %v2568 = vpop.f32.mrb[0].mxu0
  %v2569 = vadd.f32 %v2280, %v2568
  %v2570 = vpop.f32.mrb[0].mxu0
  %2571 = vmatprep.mubr.bf16.mxu0 0
  %2572 = vmatmul.mubr.bf16.gmra.mrb[0].mxu0 %v1031
  %v2573 = vpop.f32.mrb[0].mxu0
  %v2574 = vadd.f32 %v2285, %v2573
  %v2575 = vpop.f32.mrb[0].mxu0
  %v2576 = vpop.f32.mrb[0].mxu0
  %v2577 = vadd.f32 %v2288, %v2576
  %v2578 = vpop.f32.mrb[0].mxu0
  %2579 = vmatprep.mubr.bf16.mxu0 0
  %2580 = vmatmul.mubr.bf16.gmra.mrb[0].mxu0 %v1034
  %v2581 = vpop.f32.mrb[0].mxu0
  %v2582 = vadd.f32 %v2293, %v2581
  %v2583 = vpop.f32.mrb[0].mxu0
  %v2584 = vpop.f32.mrb[0].mxu0
  %v2585 = vadd.f32 %v2296, %v2584
  %v2586 = vpop.f32.mrb[0].mxu0
  %2587 = vmatprep.mubr.bf16.mxu0 0
  %2588 = vmatmul.mubr.bf16.gmra.mrb[0].mxu0 %v1037
  %v2589 = vpop.f32.mrb[0].mxu0
  %v2590 = vadd.f32 %v2301, %v2589
  %v2591 = vpop.f32.mrb[0].mxu0
  %v2592 = vpop.f32.mrb[0].mxu0
  %v2593 = vadd.f32 %v2304, %v2592
  %v2594 = vpop.f32.mrb[0].mxu0
  %2595 = vmatprep.mubr.bf16.mxu0 0
  %2596 = vmatmul.mubr.bf16.gmra.mrb[0].mxu0 %v1040
  %v2597 = vpop.f32.mrb[0].mxu0
  %v2598 = vadd.f32 %v2309, %v2597
  %v2599 = vpop.f32.mrb[0].mxu0
  %v2600 = vpop.f32.mrb[0].mxu0
  %v2601 = vadd.f32 %v2312, %v2600
  %v2602 = vpop.f32.mrb[0].mxu0
  %2603 = vmatprep.mubr.bf16.mxu0 0
  %2604 = vmatmul.mubr.bf16.gmra.mrb[0].mxu0 %v1043
  %v2605 = vpop.f32.mrb[0].mxu0
  %v2606 = vadd.f32 %v2317, %v2605
  %v2607 = vpop.f32.mrb[0].mxu0
  %v2608 = vpop.f32.mrb[0].mxu0
  %v2609 = vadd.f32 %v2320, %v2608
  %v2610 = vpop.f32.mrb[0].mxu0
  %2611 = vmatprep.mubr.bf16.mxu0 0
  %2612 = vmatmul.mubr.bf16.gmra.mrb[0].mxu0 %v1046
  %v2613 = vpop.f32.mrb[0].mxu0
  %v2614 = vadd.f32 %v2325, %v2613
  %v2615 = vpop.f32.mrb[0].mxu0
  %v2616 = vpop.f32.mrb[0].mxu0
  %v2617 = vadd.f32 %v2328, %v2616
  %v2618 = vpop.f32.mrb[0].mxu0
  %2619 = vmatprep.mubr.bf16.mxu0 0
  %2620 = vmatmul.mubr.bf16.gmra.mrb[0].mxu0 %v1049
  %v2621 = vpop.f32.mrb[0].mxu0
  %v2622 = vadd.f32 %v2333, %v2621
  %v2623 = vpop.f32.mrb[0].mxu0
  %v2624 = vpop.f32.mrb[0].mxu0
  %v2625 = vadd.f32 %v2336, %v2624
  %v2626 = vpop.f32.mrb[0].mxu0
  %2627 = vmatprep.mubr.bf16.mxu0 0
  %2628 = vmatmul.mubr.bf16.gmra.mrb[0].mxu0 %v1052
  %v2629 = vpop.f32.mrb[0].mxu0
  %v2630 = vadd.f32 %v2341, %v2629
  %v2631 = vpop.f32.mrb[0].mxu0
  %v2632 = vpop.f32.mrb[0].mxu0
  %v2633 = vadd.f32 %v2344, %v2632
  %v2634 = vpop.f32.mrb[0].mxu0
  %2635 = vdwg.mxu0
  %v2636 = vsel %vm646, %v1104, 0.0
  %v2637 = vsel %vm646, 0.0, %v618
  %v2638 = vsel %vm646, %v1102, 0.0
  %v2639 = vsel %vm646, 0.0, %v588
  %v2640 = vsel %vm582, %v2639, 0.0
  %v2641 = vsel %vm582, %v2638, 0.0
  %v2642 = vsel %vm582, %v2637, 0.0
  %v2643 = vsel %vm582, %v2636, 0.0
  %v2644 = vsel %vm832, %v1120, 0.0
  %v2645 = vsel %vm832, 0.0, %v804
  %v2646 = vsel %vm832, %v1118, 0.0
  %v2647 = vsel %vm832, 0.0, %v774
  %v2648 = vsel %vm585, %v2646, 0.0
  %v2649 = vsel %vm585, %v2645, 0.0
  %v2650 = vsel %vm585, %v2644, 0.0
  %v2651 = vsel %vm585, %v2647, 0.0
  %v2652 = vpack.c.bf16 %v714, %v2640
  %v2653 = vpack.c.bf16 %v2648, %v1128
  %v2654 = vpack.c.bf16 %v710, %v2641
  %v2655 = vpack.c.bf16 %v2649, %v895
  %v2656 = vpack.c.bf16 %v745, %v2642
  %v2657 = vpack.c.bf16 %v2650, %v1131
  %v2658 = vpack.c.bf16 %v710, %v2643
  %v2659 = vpack.c.bf16 %v2651, %v895
  %s2660 = scalar_lea.vmem %s3, 384
  %v2661 = vld [vmem:[%s2660] sm:$0xf]
  %v2662 = vld [vmem:[%s2660 + $0x4] sm:$0xf]
  %v2663 = vld [vmem:[%s2660 + $0x8] sm:$0xf]
  %v2664 = vld [vmem:[%s2660 + $0xc] sm:$0xf]
  %v2665 = vld [vmem:[%s2660 + $0x10] sm:$0xf]
  %v2666 = vld [vmem:[%s2660 + $0x14] sm:$0xf]
  %v2667 = vld [vmem:[%s2660 + $0x18] sm:$0xf]
  %v2668 = vld [vmem:[%s2660 + $0x1c] sm:$0xf]
  %v2669 = vld [vmem:[%s2660 + $0x20] sm:$0xf]
  %v2670 = vld [vmem:[%s2660 + $0x24] sm:$0xf]
  %v2671 = vld [vmem:[%s2660 + $0x28] sm:$0xf]
  %v2672 = vld [vmem:[%s2660 + $0x2c] sm:$0xf]
  %v2673 = vld [vmem:[%s2660 + $0x30] sm:$0xf]
  %v2674 = vld [vmem:[%s2660 + $0x34] sm:$0xf]
  %v2675 = vld [vmem:[%s2660 + $0x38] sm:$0xf]
  %v2676 = vld [vmem:[%s2660 + $0x3c] sm:$0xf]
  %v2677 = vld [vmem:[%s2660 + $0x40] sm:$0xf]
  %v2678 = vld [vmem:[%s2660 + $0x44] sm:$0xf]
  %v2679 = vld [vmem:[%s2660 + $0x48] sm:$0xf]
  %v2680 = vld [vmem:[%s2660 + $0x4c] sm:$0xf]
  %v2681 = vld [vmem:[%s2660 + $0x50] sm:$0xf]
  %v2682 = vld [vmem:[%s2660 + $0x54] sm:$0xf]
  %v2683 = vld [vmem:[%s2660 + $0x58] sm:$0xf]
  %v2684 = vld [vmem:[%s2660 + $0x5c] sm:$0xf]
  %v2685 = vld [vmem:[%s2660 + $0x60] sm:$0xf]
  %v2686 = vld [vmem:[%s2660 + $0x64] sm:$0xf]
  %v2687 = vld [vmem:[%s2660 + $0x68] sm:$0xf]
  %v2688 = vld [vmem:[%s2660 + $0x6c] sm:$0xf]
  %v2689 = vld [vmem:[%s2660 + $0x70] sm:$0xf]
  %v2690 = vld [vmem:[%s2660 + $0x74] sm:$0xf]
  %v2691 = vld [vmem:[%s2660 + $0x78] sm:$0xf]
  %v2692 = vld [vmem:[%s2660 + $0x7c] sm:$0xf]
  %v2693 = vld [vmem:[%s2660 + $0x80] sm:$0xf]
  %v2694 = vld [vmem:[%s2660 + $0x84] sm:$0xf]
  %v2695 = vld [vmem:[%s2660 + $0x88] sm:$0xf]
  %v2696 = vld [vmem:[%s2660 + $0x8c] sm:$0xf]
  %v2697 = vld [vmem:[%s2660 + $0x90] sm:$0xf]
  %v2698 = vld [vmem:[%s2660 + $0x94] sm:$0xf]
  %v2699 = vld [vmem:[%s2660 + $0x98] sm:$0xf]
  %v2700 = vld [vmem:[%s2660 + $0x9c] sm:$0xf]
  %v2701 = vld [vmem:[%s2660 + $0xa0] sm:$0xf]
  %v2702 = vld [vmem:[%s2660 + $0xa4] sm:$0xf]
  %v2703 = vld [vmem:[%s2660 + $0xa8] sm:$0xf]
  %v2704 = vld [vmem:[%s2660 + $0xac] sm:$0xf]
  %v2705 = vld [vmem:[%s2660 + $0xb0] sm:$0xf]
  %v2706 = vld [vmem:[%s2660 + $0xb4] sm:$0xf]
  %v2707 = vld [vmem:[%s2660 + $0xb8] sm:$0xf]
  %v2708 = vld [vmem:[%s2660 + $0xbc] sm:$0xf]
  %v2757 = vunpack.c.l.b16 %v2661
  %v2758 = vunpack.c.l.b16 %v2662
  %v2759 = vunpack.c.l.b16 %v2663
  %v2760 = vunpack.c.l.b16 %v2664
  %v2761 = vunpack.c.l.b16 %v2665
  %v2762 = vunpack.c.l.b16 %v2666
  %v2763 = vunpack.c.l.b16 %v2667
  %v2764 = vunpack.c.l.b16 %v2668
  %v2765 = vunpack.c.l.b16 %v2669
  %v2766 = vunpack.c.l.b16 %v2670
  %v2767 = vunpack.c.l.b16 %v2671
  %v2768 = vunpack.c.l.b16 %v2672
  %v2769 = vunpack.c.l.b16 %v2673
  %v2770 = vunpack.c.l.b16 %v2674
  %v2771 = vunpack.c.l.b16 %v2675
  %v2772 = vunpack.c.l.b16 %v2676
  %v2773 = vunpack.c.l.b16 %v2677
  %v2774 = vunpack.c.l.b16 %v2678
  %v2775 = vunpack.c.l.b16 %v2679
  %v2776 = vunpack.c.l.b16 %v2680
  %v2777 = vunpack.c.l.b16 %v2681
  %v2778 = vunpack.c.l.b16 %v2682
  %v2779 = vunpack.c.l.b16 %v2683
  %v2780 = vunpack.c.l.b16 %v2684
  %v2781 = vunpack.c.l.b16 %v2685
  %v2782 = vunpack.c.l.b16 %v2686
  %v2783 = vunpack.c.l.b16 %v2687
  %v2784 = vunpack.c.l.b16 %v2688
  %v2785 = vunpack.c.l.b16 %v2689
  %v2786 = vunpack.c.l.b16 %v2690
  %v2787 = vunpack.c.l.b16 %v2691
  %v2788 = vunpack.c.l.b16 %v2692
  %v2789 = vunpack.c.l.b16 %v2693
  %v2790 = vunpack.c.l.b16 %v2694
  %v2791 = vunpack.c.l.b16 %v2695
  %v2792 = vunpack.c.l.b16 %v2696
  %v2793 = vunpack.c.l.b16 %v2697
  %v2794 = vunpack.c.l.b16 %v2698
  %v2795 = vunpack.c.l.b16 %v2699
  %v2796 = vunpack.c.l.b16 %v2700
  %v2797 = vunpack.c.l.b16 %v2701
  %v2798 = vunpack.c.l.b16 %v2702
  %v2799 = vunpack.c.l.b16 %v2703
  %v2800 = vunpack.c.l.b16 %v2704
  %v2801 = vunpack.c.l.b16 %v2705
  %v2802 = vunpack.c.l.b16 %v2706
  %v2803 = vunpack.c.l.b16 %v2707
  %v2804 = vunpack.c.l.b16 %v2708
  %v2805 = vpack.c.b16 %v2758, %v2757
  %v2806 = vpack.c.b16 %v2760, %v2759
  %v2807 = vpack.c.b16 %v2762, %v2761
  %v2808 = vpack.c.b16 %v2764, %v2763
  %v2809 = vpack.c.b16 %v2766, %v2765
  %v2810 = vpack.c.b16 %v2768, %v2767
  %v2811 = vpack.c.b16 %v2770, %v2769
  %v2812 = vpack.c.b16 %v2772, %v2771
  %v2813 = vpack.c.b16 %v2774, %v2773
  %v2814 = vpack.c.b16 %v2776, %v2775
  %v2815 = vpack.c.b16 %v2778, %v2777
  %v2816 = vpack.c.b16 %v2780, %v2779
  %v2817 = vpack.c.b16 %v2782, %v2781
  %v2818 = vpack.c.b16 %v2784, %v2783
  %v2819 = vpack.c.b16 %v2786, %v2785
  %v2820 = vpack.c.b16 %v2788, %v2787
  %v2821 = vpack.c.b16 %v2790, %v2789
  %v2822 = vpack.c.b16 %v2792, %v2791
  %v2823 = vpack.c.b16 %v2794, %v2793
  %v2824 = vpack.c.b16 %v2796, %v2795
  %v2825 = vpack.c.b16 %v2798, %v2797
  %v2826 = vpack.c.b16 %v2800, %v2799
  %v2827 = vpack.c.b16 %v2802, %v2801
  %v2828 = vpack.c.b16 %v2804, %v2803
  %2853 = vmatprep.subr.bf16.mxu0 0
  %2854 = vmatpush1.bf16.msra.mxu0 %v2805
  %2855 = vmatprep.subr.bf16.mxu0 0
  %2856 = vmatpush1.bf16.msra.mxu0 %v2806
  %2857 = vmatprep.subr.bf16.mxu0 0
  %2858 = vmatpush1.bf16.msra.mxu0 %v2807
  %2859 = vmatprep.subr.bf16.mxu0 0
  %2860 = vmatpush1.bf16.msra.mxu0 %v2808
  %2861 = vmatprep.subr.bf16.mxu0 0
  %2862 = vmatpush1.bf16.msra.mxu0 %v2809
  %2863 = vmatprep.subr.bf16.mxu0 0
  %2864 = vmatpush1.bf16.msra.mxu0 %v2810
  %2865 = vmatprep.subr.bf16.mxu0 0
  %2866 = vmatpush1.bf16.msra.mxu0 %v2811
  %2867 = vmatprep.subr.bf16.mxu0 0
  %2868 = vmatpush1.bf16.msra.mxu0 %v2812
  %2869 = vmatprep.subr.bf16.mxu0 0
  %2870 = vmatpush1.bf16.msra.mxu0 %v2813
  %2871 = vmatprep.subr.bf16.mxu0 0
  %2872 = vmatpush1.bf16.msra.mxu0 %v2814
  %2873 = vmatprep.subr.bf16.mxu0 0
  %2874 = vmatpush1.bf16.msra.mxu0 %v2815
  %2875 = vmatprep.subr.bf16.mxu0 0
  %2876 = vmatpush1.bf16.msra.mxu0 %v2816
  %2877 = vmatprep.subr.bf16.mxu0 0
  %2878 = vmatpush1.bf16.msra.mxu0 %v2817
  %2879 = vmatprep.subr.bf16.mxu0 0
  %2880 = vmatpush1.bf16.msra.mxu0 %v2818
  %2881 = vmatprep.subr.bf16.mxu0 0
  %2882 = vmatpush1.bf16.msra.mxu0 %v2819
  %2883 = vmatprep.subr.bf16.mxu0 0
  %2884 = vmatpush1.bf16.msra.mxu0 %v2820
  %2885 = vmatprep.mubr.bf16.mxu0 %v965
  %2886 = vmatmul.mubr.bf16.gmra.mrb[0].mxu0 %v2652
  %v2887 = vpop.f32.mrb[0].mxu0
  %v2888 = vadd.f32 0.0, %v2887
  %v2889 = vpop.f32.mrb[0].mxu0
  %v2890 = vpop.f32.mrb[0].mxu0
  %v2891 = vadd.f32 0.0, %v2890
  %v2892 = vpop.f32.mrb[0].mxu0
  %2893 = vmatprep.mubr.bf16.mxu0 %v968
  %2894 = vmatmul.mubr.bf16.gmra.mrb[0].mxu0 %v967
  %v2895 = vpop.f32.mrb[0].mxu0
  %v2896 = vadd.f32 0.0, %v2895
  %v2897 = vpop.f32.mrb[0].mxu0
  %v2898 = vpop.f32.mrb[0].mxu0
  %v2899 = vadd.f32 0.0, %v2898
  %v2900 = vpop.f32.mrb[0].mxu0
  %2901 = vmatprep.mubr.bf16.mxu0 %v971
  %2902 = vmatmul.mubr.bf16.gmra.mrb[0].mxu0 %v970
  %v2903 = vpop.f32.mrb[0].mxu0
  %v2904 = vadd.f32 0.0, %v2903
  %v2905 = vpop.f32.mrb[0].mxu0
  %v2906 = vpop.f32.mrb[0].mxu0
  %v2907 = vadd.f32 0.0, %v2906
  %v2908 = vpop.f32.mrb[0].mxu0
  %2909 = vmatprep.mubr.bf16.mxu0 %v974
  %2910 = vmatmul.mubr.bf16.gmra.mrb[0].mxu0 %v973
  %v2911 = vpop.f32.mrb[0].mxu0
  %v2912 = vadd.f32 0.0, %v2911
  %v2913 = vpop.f32.mrb[0].mxu0
  %v2914 = vpop.f32.mrb[0].mxu0
  %v2915 = vadd.f32 0.0, %v2914
  %v2916 = vpop.f32.mrb[0].mxu0
  %2917 = vmatprep.mubr.bf16.mxu0 %v977
  %2918 = vmatmul.mubr.bf16.gmra.mrb[0].mxu0 %v976
  %v2919 = vpop.f32.mrb[0].mxu0
  %v2920 = vadd.f32 0.0, %v2919
  %v2921 = vpop.f32.mrb[0].mxu0
  %v2922 = vpop.f32.mrb[0].mxu0
  %v2923 = vadd.f32 0.0, %v2922
  %v2924 = vpop.f32.mrb[0].mxu0
  %2925 = vmatprep.mubr.bf16.mxu0 %v980
  %2926 = vmatmul.mubr.bf16.gmra.mrb[0].mxu0 %v979
  %v2927 = vpop.f32.mrb[0].mxu0
  %v2928 = vadd.f32 0.0, %v2927
  %v2929 = vpop.f32.mrb[0].mxu0
  %v2930 = vpop.f32.mrb[0].mxu0
  %v2931 = vadd.f32 0.0, %v2930
  %v2932 = vpop.f32.mrb[0].mxu0
  %2933 = vmatprep.mubr.bf16.mxu0 %v983
  %2934 = vmatmul.mubr.bf16.gmra.mrb[0].mxu0 %v982
  %v2935 = vpop.f32.mrb[0].mxu0
  %v2936 = vadd.f32 0.0, %v2935
  %v2937 = vpop.f32.mrb[0].mxu0
  %v2938 = vpop.f32.mrb[0].mxu0
  %v2939 = vadd.f32 0.0, %v2938
  %v2940 = vpop.f32.mrb[0].mxu0
  %2941 = vmatprep.mubr.bf16.mxu0 %v986
  %2942 = vmatmul.mubr.bf16.gmra.mrb[0].mxu0 %v985
  %v2943 = vpop.f32.mrb[0].mxu0
  %v2944 = vadd.f32 0.0, %v2943
  %v2945 = vpop.f32.mrb[0].mxu0
  %v2946 = vpop.f32.mrb[0].mxu0
  %v2947 = vadd.f32 0.0, %v2946
  %v2948 = vpop.f32.mrb[0].mxu0
  %2949 = vmatprep.mubr.bf16.mxu0 %v989
  %2950 = vmatmul.mubr.bf16.gmra.mrb[0].mxu0 %v988
  %v2951 = vpop.f32.mrb[0].mxu0
  %v2952 = vadd.f32 0.0, %v2951
  %v2953 = vpop.f32.mrb[0].mxu0
  %v2954 = vpop.f32.mrb[0].mxu0
  %v2955 = vadd.f32 0.0, %v2954
  %v2956 = vpop.f32.mrb[0].mxu0
  %2957 = vmatprep.mubr.bf16.mxu0 %v992
  %2958 = vmatmul.mubr.bf16.gmra.mrb[0].mxu0 %v991
  %v2959 = vpop.f32.mrb[0].mxu0
  %v2960 = vadd.f32 0.0, %v2959
  %v2961 = vpop.f32.mrb[0].mxu0
  %v2962 = vpop.f32.mrb[0].mxu0
  %v2963 = vadd.f32 0.0, %v2962
  %v2964 = vpop.f32.mrb[0].mxu0
  %2965 = vmatprep.mubr.bf16.mxu0 %v995
  %2966 = vmatmul.mubr.bf16.gmra.mrb[0].mxu0 %v994
  %v2967 = vpop.f32.mrb[0].mxu0
  %v2968 = vadd.f32 0.0, %v2967
  %v2969 = vpop.f32.mrb[0].mxu0
  %v2970 = vpop.f32.mrb[0].mxu0
  %v2971 = vadd.f32 0.0, %v2970
  %v2972 = vpop.f32.mrb[0].mxu0
  %2973 = vmatprep.mubr.bf16.mxu0 %v998
  %2974 = vmatmul.mubr.bf16.gmra.mrb[0].mxu0 %v997
  %v2975 = vpop.f32.mrb[0].mxu0
  %v2976 = vadd.f32 0.0, %v2975
  %v2977 = vpop.f32.mrb[0].mxu0
  %v2978 = vpop.f32.mrb[0].mxu0
  %v2979 = vadd.f32 0.0, %v2978
  %v2980 = vpop.f32.mrb[0].mxu0
  %2981 = vmatprep.mubr.bf16.mxu0 %v1001
  %2982 = vmatmul.mubr.bf16.gmra.mrb[0].mxu0 %v1000
  %v2983 = vpop.f32.mrb[0].mxu0
  %v2984 = vadd.f32 0.0, %v2983
  %v2985 = vpop.f32.mrb[0].mxu0
  %v2986 = vpop.f32.mrb[0].mxu0
  %v2987 = vadd.f32 0.0, %v2986
  %v2988 = vpop.f32.mrb[0].mxu0
  %2989 = vmatprep.mubr.bf16.mxu0 %v1004
  %2990 = vmatmul.mubr.bf16.gmra.mrb[0].mxu0 %v1003
  %v2991 = vpop.f32.mrb[0].mxu0
  %v2992 = vadd.f32 0.0, %v2991
  %v2993 = vpop.f32.mrb[0].mxu0
  %v2994 = vpop.f32.mrb[0].mxu0
  %v2995 = vadd.f32 0.0, %v2994
  %v2996 = vpop.f32.mrb[0].mxu0
  %2997 = vmatprep.mubr.bf16.mxu0 %v1136
  %2998 = vmatmul.mubr.bf16.gmra.mrb[0].mxu0 %v1135
  %v2999 = vpop.f32.mrb[0].mxu0
  %v3000 = vadd.f32 0.0, %v2999
  %v3001 = vpop.f32.mrb[0].mxu0
  %v3002 = vpop.f32.mrb[0].mxu0
  %v3003 = vadd.f32 0.0, %v3002
  %v3004 = vpop.f32.mrb[0].mxu0
  %3005 = vmatprep.mubr.bf16.mxu0 %v959
  %3006 = vmatmul.mubr.bf16.gmra.mrb[0].mxu0 %v2654
  %v3007 = vpop.f32.mrb[0].mxu0
  %v3008 = vadd.f32 0.0, %v3007
  %v3009 = vpop.f32.mrb[0].mxu0
  %v3010 = vpop.f32.mrb[0].mxu0
  %v3011 = vadd.f32 0.0, %v3010
  %v3012 = vpop.f32.mrb[0].mxu0
  %3013 = vmatprep.mubr.bf16.mxu0 %v1012
  %3014 = vmatmul.mubr.bf16.gmra.mrb[0].mxu0 %v2656
  %v3015 = vpop.f32.mrb[0].mxu0
  %v3016 = vadd.f32 0.0, %v3015
  %v3017 = vpop.f32.mrb[0].mxu0
  %v3018 = vpop.f32.mrb[0].mxu0
  %v3019 = vadd.f32 0.0, %v3018
  %v3020 = vpop.f32.mrb[0].mxu0
  %3021 = vmatprep.mubr.bf16.mxu0 %v1015
  %3022 = vmatmul.mubr.bf16.gmra.mrb[0].mxu0 %v1014
  %v3023 = vpop.f32.mrb[0].mxu0
  %v3024 = vadd.f32 0.0, %v3023
  %v3025 = vpop.f32.mrb[0].mxu0
  %v3026 = vpop.f32.mrb[0].mxu0
  %v3027 = vadd.f32 0.0, %v3026
  %v3028 = vpop.f32.mrb[0].mxu0
  %3029 = vmatprep.mubr.bf16.mxu0 %v1018
  %3030 = vmatmul.mubr.bf16.gmra.mrb[0].mxu0 %v1017
  %v3031 = vpop.f32.mrb[0].mxu0
  %v3032 = vadd.f32 0.0, %v3031
  %v3033 = vpop.f32.mrb[0].mxu0
  %v3034 = vpop.f32.mrb[0].mxu0
  %v3035 = vadd.f32 0.0, %v3034
  %v3036 = vpop.f32.mrb[0].mxu0
  %3037 = vmatprep.mubr.bf16.mxu0 %v1021
  %3038 = vmatmul.mubr.bf16.gmra.mrb[0].mxu0 %v1020
  %v3039 = vpop.f32.mrb[0].mxu0
  %v3040 = vadd.f32 0.0, %v3039
  %v3041 = vpop.f32.mrb[0].mxu0
  %v3042 = vpop.f32.mrb[0].mxu0
  %v3043 = vadd.f32 0.0, %v3042
  %v3044 = vpop.f32.mrb[0].mxu0
  %3045 = vmatprep.mubr.bf16.mxu0 %v1024
  %3046 = vmatmul.mubr.bf16.gmra.mrb[0].mxu0 %v1023
  %v3047 = vpop.f32.mrb[0].mxu0
  %v3048 = vadd.f32 0.0, %v3047
  %v3049 = vpop.f32.mrb[0].mxu0
  %v3050 = vpop.f32.mrb[0].mxu0
  %v3051 = vadd.f32 0.0, %v3050
  %v3052 = vpop.f32.mrb[0].mxu0
  %3053 = vmatprep.mubr.bf16.mxu0 %v1027
  %3054 = vmatmul.mubr.bf16.gmra.mrb[0].mxu0 %v1026
  %v3055 = vpop.f32.mrb[0].mxu0
  %v3056 = vadd.f32 0.0, %v3055
  %v3057 = vpop.f32.mrb[0].mxu0
  %v3058 = vpop.f32.mrb[0].mxu0
  %v3059 = vadd.f32 0.0, %v3058
  %v3060 = vpop.f32.mrb[0].mxu0
  %3061 = vmatprep.mubr.bf16.mxu0 %v1030
  %3062 = vmatmul.mubr.bf16.gmra.mrb[0].mxu0 %v1029
  %v3063 = vpop.f32.mrb[0].mxu0
  %v3064 = vadd.f32 0.0, %v3063
  %v3065 = vpop.f32.mrb[0].mxu0
  %v3066 = vpop.f32.mrb[0].mxu0
  %v3067 = vadd.f32 0.0, %v3066
  %v3068 = vpop.f32.mrb[0].mxu0
  %3069 = vmatprep.mubr.bf16.mxu0 %v1033
  %3070 = vmatmul.mubr.bf16.gmra.mrb[0].mxu0 %v1032
  %v3071 = vpop.f32.mrb[0].mxu0
  %v3072 = vadd.f32 0.0, %v3071
  %v3073 = vpop.f32.mrb[0].mxu0
  %v3074 = vpop.f32.mrb[0].mxu0
  %v3075 = vadd.f32 0.0, %v3074
  %v3076 = vpop.f32.mrb[0].mxu0
  %3077 = vmatprep.mubr.bf16.mxu0 %v1036
  %3078 = vmatmul.mubr.bf16.gmra.mrb[0].mxu0 %v1035
  %v3079 = vpop.f32.mrb[0].mxu0
  %v3080 = vadd.f32 0.0, %v3079
  %v3081 = vpop.f32.mrb[0].mxu0
  %v3082 = vpop.f32.mrb[0].mxu0
  %v3083 = vadd.f32 0.0, %v3082
  %v3084 = vpop.f32.mrb[0].mxu0
  %3085 = vmatprep.mubr.bf16.mxu0 %v1039
  %3086 = vmatmul.mubr.bf16.gmra.mrb[0].mxu0 %v1038
  %v3087 = vpop.f32.mrb[0].mxu0
  %v3088 = vadd.f32 0.0, %v3087
  %v3089 = vpop.f32.mrb[0].mxu0
  %v3090 = vpop.f32.mrb[0].mxu0
  %v3091 = vadd.f32 0.0, %v3090
  %v3092 = vpop.f32.mrb[0].mxu0
  %3093 = vmatprep.mubr.bf16.mxu0 %v1042
  %3094 = vmatmul.mubr.bf16.gmra.mrb[0].mxu0 %v1041
  %v3095 = vpop.f32.mrb[0].mxu0
  %v3096 = vadd.f32 0.0, %v3095
  %v3097 = vpop.f32.mrb[0].mxu0
  %v3098 = vpop.f32.mrb[0].mxu0
  %v3099 = vadd.f32 0.0, %v3098
  %v3100 = vpop.f32.mrb[0].mxu0
  %3101 = vmatprep.mubr.bf16.mxu0 %v1045
  %3102 = vmatmul.mubr.bf16.gmra.mrb[0].mxu0 %v1044
  %v3103 = vpop.f32.mrb[0].mxu0
  %v3104 = vadd.f32 0.0, %v3103
  %v3105 = vpop.f32.mrb[0].mxu0
  %v3106 = vpop.f32.mrb[0].mxu0
  %v3107 = vadd.f32 0.0, %v3106
  %v3108 = vpop.f32.mrb[0].mxu0
  %3109 = vmatprep.mubr.bf16.mxu0 %v1048
  %3110 = vmatmul.mubr.bf16.gmra.mrb[0].mxu0 %v1047
  %v3111 = vpop.f32.mrb[0].mxu0
  %v3112 = vadd.f32 0.0, %v3111
  %v3113 = vpop.f32.mrb[0].mxu0
  %v3114 = vpop.f32.mrb[0].mxu0
  %v3115 = vadd.f32 0.0, %v3114
  %v3116 = vpop.f32.mrb[0].mxu0
  %3117 = vmatprep.mubr.bf16.mxu0 %v1051
  %3118 = vmatmul.mubr.bf16.gmra.mrb[0].mxu0 %v1050
  %v3119 = vpop.f32.mrb[0].mxu0
  %v3120 = vadd.f32 0.0, %v3119
  %v3121 = vpop.f32.mrb[0].mxu0
  %v3122 = vpop.f32.mrb[0].mxu0
  %v3123 = vadd.f32 0.0, %v3122
  %v3124 = vpop.f32.mrb[0].mxu0
  %3125 = vmatprep.mubr.bf16.mxu0 %v1141
  %3126 = vmatmul.mubr.bf16.gmra.mrb[0].mxu0 %v1140
  %v3127 = vpop.f32.mrb[0].mxu0
  %v3128 = vadd.f32 0.0, %v3127
  %v3129 = vpop.f32.mrb[0].mxu0
  %v3130 = vpop.f32.mrb[0].mxu0
  %v3131 = vadd.f32 0.0, %v3130
  %v3132 = vpop.f32.mrb[0].mxu0
  %3133 = vmatprep.mubr.bf16.mxu0 %v959
  %3134 = vmatmul.mubr.bf16.gmra.mrb[0].mxu0 %v2658
  %v3135 = vpop.f32.mrb[0].mxu0
  %v3136 = vadd.f32 0.0, %v3135
  %v3137 = vpop.f32.mrb[0].mxu0
  %v3138 = vpop.f32.mrb[0].mxu0
  %v3139 = vadd.f32 0.0, %v3138
  %v3140 = vpop.f32.mrb[0].mxu0
  %3141 = vdwg.mxu0
  %3142 = vmatprep.subr.bf16.mxu0 0
  %3143 = vmatpush1.bf16.msra.mxu0 %v2821
  %3144 = vmatprep.subr.bf16.mxu0 0
  %3145 = vmatpush1.bf16.msra.mxu0 %v2822
  %3146 = vmatprep.subr.bf16.mxu0 0
  %3147 = vmatpush1.bf16.msra.mxu0 %v2823
  %3148 = vmatprep.subr.bf16.mxu0 0
  %3149 = vmatpush1.bf16.msra.mxu0 %v2824
  %3150 = vmatprep.subr.bf16.mxu0 0
  %3151 = vmatpush1.bf16.msra.mxu0 %v2825
  %3152 = vmatprep.subr.bf16.mxu0 0
  %3153 = vmatpush1.bf16.msra.mxu0 %v2826
  %3154 = vmatprep.subr.bf16.mxu0 0
  %3155 = vmatpush1.bf16.msra.mxu0 %v2827
  %3156 = vmatprep.subr.bf16.mxu0 0
  %3157 = vmatpush1.bf16.msra.mxu0 %v2828
  %3158 = vmatprep.subr.bf16.mxu0 0
  %3159 = vmatpush1.bf16.msra.mxu0 0
  %3160 = vmatprep.subr.bf16.mxu0 0
  %3161 = vmatpush1.bf16.msra.mxu0 0
  %3162 = vmatprep.subr.bf16.mxu0 0
  %3163 = vmatpush1.bf16.msra.mxu0 0
  %3164 = vmatprep.subr.bf16.mxu0 0
  %3165 = vmatpush1.bf16.msra.mxu0 0
  %3166 = vmatprep.subr.bf16.mxu0 0
  %3167 = vmatpush1.bf16.msra.mxu0 0
  %3168 = vmatprep.subr.bf16.mxu0 0
  %3169 = vmatpush1.bf16.msra.mxu0 0
  %3170 = vmatprep.subr.bf16.mxu0 0
  %3171 = vmatpush1.bf16.msra.mxu0 0
  %3172 = vmatprep.subr.bf16.mxu0 0
  %3173 = vmatpush1.bf16.msra.mxu0 0
  %3174 = vmatprep.mubr.bf16.mxu0 0
  %3175 = vmatmul.mubr.bf16.gmra.mrb[0].mxu0 %v966
  %v3176 = vpop.f32.mrb[0].mxu0
  %v3177 = vadd.f32 %v2888, %v3176
  %v3178 = vpop.f32.mrb[0].mxu0
  %v3179 = vpop.f32.mrb[0].mxu0
  %v3180 = vadd.f32 %v2891, %v3179
  %v3181 = vpop.f32.mrb[0].mxu0
  %3182 = vmatprep.mubr.bf16.mxu0 0
  %3183 = vmatmul.mubr.bf16.gmra.mrb[0].mxu0 %v969
  %v3184 = vpop.f32.mrb[0].mxu0
  %v3185 = vadd.f32 %v2896, %v3184
  %v3186 = vpop.f32.mrb[0].mxu0
  %v3187 = vpop.f32.mrb[0].mxu0
  %v3188 = vadd.f32 %v2899, %v3187
  %v3189 = vpop.f32.mrb[0].mxu0
  %3190 = vmatprep.mubr.bf16.mxu0 0
  %3191 = vmatmul.mubr.bf16.gmra.mrb[0].mxu0 %v972
  %v3192 = vpop.f32.mrb[0].mxu0
  %v3193 = vadd.f32 %v2904, %v3192
  %v3194 = vpop.f32.mrb[0].mxu0
  %v3195 = vpop.f32.mrb[0].mxu0
  %v3196 = vadd.f32 %v2907, %v3195
  %v3197 = vpop.f32.mrb[0].mxu0
  %3198 = vmatprep.mubr.bf16.mxu0 0
  %3199 = vmatmul.mubr.bf16.gmra.mrb[0].mxu0 %v975
  %v3200 = vpop.f32.mrb[0].mxu0
  %v3201 = vadd.f32 %v2912, %v3200
  %v3202 = vpop.f32.mrb[0].mxu0
  %v3203 = vpop.f32.mrb[0].mxu0
  %v3204 = vadd.f32 %v2915, %v3203
  %v3205 = vpop.f32.mrb[0].mxu0
  %3206 = vmatprep.mubr.bf16.mxu0 0
  %3207 = vmatmul.mubr.bf16.gmra.mrb[0].mxu0 %v978
  %v3208 = vpop.f32.mrb[0].mxu0
  %v3209 = vadd.f32 %v2920, %v3208
  %v3210 = vpop.f32.mrb[0].mxu0
  %v3211 = vpop.f32.mrb[0].mxu0
  %v3212 = vadd.f32 %v2923, %v3211
  %v3213 = vpop.f32.mrb[0].mxu0
  %3214 = vmatprep.mubr.bf16.mxu0 0
  %3215 = vmatmul.mubr.bf16.gmra.mrb[0].mxu0 %v981
  %v3216 = vpop.f32.mrb[0].mxu0
  %v3217 = vadd.f32 %v2928, %v3216
  %v3218 = vpop.f32.mrb[0].mxu0
  %v3219 = vpop.f32.mrb[0].mxu0
  %v3220 = vadd.f32 %v2931, %v3219
  %v3221 = vpop.f32.mrb[0].mxu0
  %3222 = vmatprep.mubr.bf16.mxu0 0
  %3223 = vmatmul.mubr.bf16.gmra.mrb[0].mxu0 %v984
  %v3224 = vpop.f32.mrb[0].mxu0
  %v3225 = vadd.f32 %v2936, %v3224
  %v3226 = vpop.f32.mrb[0].mxu0
  %v3227 = vpop.f32.mrb[0].mxu0
  %v3228 = vadd.f32 %v2939, %v3227
  %v3229 = vpop.f32.mrb[0].mxu0
  %3230 = vmatprep.mubr.bf16.mxu0 0
  %3231 = vmatmul.mubr.bf16.gmra.mrb[0].mxu0 %v987
  %v3232 = vpop.f32.mrb[0].mxu0
  %v3233 = vadd.f32 %v2944, %v3232
  %v3234 = vpop.f32.mrb[0].mxu0
  %v3235 = vpop.f32.mrb[0].mxu0
  %v3236 = vadd.f32 %v2947, %v3235
  %v3237 = vpop.f32.mrb[0].mxu0
  %3238 = vmatprep.mubr.bf16.mxu0 0
  %3239 = vmatmul.mubr.bf16.gmra.mrb[0].mxu0 %v990
  %v3240 = vpop.f32.mrb[0].mxu0
  %v3241 = vadd.f32 %v2952, %v3240
  %v3242 = vpop.f32.mrb[0].mxu0
  %v3243 = vpop.f32.mrb[0].mxu0
  %v3244 = vadd.f32 %v2955, %v3243
  %v3245 = vpop.f32.mrb[0].mxu0
  %3246 = vmatprep.mubr.bf16.mxu0 0
  %3247 = vmatmul.mubr.bf16.gmra.mrb[0].mxu0 %v993
  %v3248 = vpop.f32.mrb[0].mxu0
  %v3249 = vadd.f32 %v2960, %v3248
  %v3250 = vpop.f32.mrb[0].mxu0
  %v3251 = vpop.f32.mrb[0].mxu0
  %v3252 = vadd.f32 %v2963, %v3251
  %v3253 = vpop.f32.mrb[0].mxu0
  %3254 = vmatprep.mubr.bf16.mxu0 0
  %3255 = vmatmul.mubr.bf16.gmra.mrb[0].mxu0 %v996
  %v3256 = vpop.f32.mrb[0].mxu0
  %v3257 = vadd.f32 %v2968, %v3256
  %v3258 = vpop.f32.mrb[0].mxu0
  %v3259 = vpop.f32.mrb[0].mxu0
  %v3260 = vadd.f32 %v2971, %v3259
  %v3261 = vpop.f32.mrb[0].mxu0
  %3262 = vmatprep.mubr.bf16.mxu0 0
  %3263 = vmatmul.mubr.bf16.gmra.mrb[0].mxu0 %v999
  %v3264 = vpop.f32.mrb[0].mxu0
  %v3265 = vadd.f32 %v2976, %v3264
  %v3266 = vpop.f32.mrb[0].mxu0
  %v3267 = vpop.f32.mrb[0].mxu0
  %v3268 = vadd.f32 %v2979, %v3267
  %v3269 = vpop.f32.mrb[0].mxu0
  %3270 = vmatprep.mubr.bf16.mxu0 0
  %3271 = vmatmul.mubr.bf16.gmra.mrb[0].mxu0 %v1002
  %v3272 = vpop.f32.mrb[0].mxu0
  %v3273 = vadd.f32 %v2984, %v3272
  %v3274 = vpop.f32.mrb[0].mxu0
  %v3275 = vpop.f32.mrb[0].mxu0
  %v3276 = vadd.f32 %v2987, %v3275
  %v3277 = vpop.f32.mrb[0].mxu0
  %3278 = vmatprep.mubr.bf16.mxu0 0
  %3279 = vmatmul.mubr.bf16.gmra.mrb[0].mxu0 %v1134
  %v3280 = vpop.f32.mrb[0].mxu0
  %v3281 = vadd.f32 %v2992, %v3280
  %v3282 = vpop.f32.mrb[0].mxu0
  %v3283 = vpop.f32.mrb[0].mxu0
  %v3284 = vadd.f32 %v2995, %v3283
  %v3285 = vpop.f32.mrb[0].mxu0
  %3286 = vmatprep.mubr.bf16.mxu0 0
  %3287 = vmatmul.mubr.bf16.gmra.mrb[0].mxu0 %v2653
  %v3288 = vpop.f32.mrb[0].mxu0
  %v3289 = vadd.f32 %v3000, %v3288
  %v3290 = vpop.f32.mrb[0].mxu0
  %v3291 = vpop.f32.mrb[0].mxu0
  %v3292 = vadd.f32 %v3003, %v3291
  %v3293 = vpop.f32.mrb[0].mxu0
  %3294 = vmatprep.mubr.bf16.mxu0 0
  %3295 = vmatmul.mubr.bf16.gmra.mrb[0].mxu0 %v2655
  %v3296 = vpop.f32.mrb[0].mxu0
  %v3297 = vadd.f32 %v3008, %v3296
  %v3298 = vpop.f32.mrb[0].mxu0
  %v3299 = vpop.f32.mrb[0].mxu0
  %v3300 = vadd.f32 %v3011, %v3299
  %v3301 = vpop.f32.mrb[0].mxu0
  %3302 = vmatprep.mubr.bf16.mxu0 0
  %3303 = vmatmul.mubr.bf16.gmra.mrb[0].mxu0 %v1013
  %v3304 = vpop.f32.mrb[0].mxu0
  %v3305 = vadd.f32 %v3016, %v3304
  %v3306 = vpop.f32.mrb[0].mxu0
  %v3307 = vpop.f32.mrb[0].mxu0
  %v3308 = vadd.f32 %v3019, %v3307
  %v3309 = vpop.f32.mrb[0].mxu0
  %3310 = vmatprep.mubr.bf16.mxu0 0
  %3311 = vmatmul.mubr.bf16.gmra.mrb[0].mxu0 %v1016
  %v3312 = vpop.f32.mrb[0].mxu0
  %v3313 = vadd.f32 %v3024, %v3312
  %v3314 = vpop.f32.mrb[0].mxu0
  %v3315 = vpop.f32.mrb[0].mxu0
  %v3316 = vadd.f32 %v3027, %v3315
  %v3317 = vpop.f32.mrb[0].mxu0
  %3318 = vmatprep.mubr.bf16.mxu0 0
  %3319 = vmatmul.mubr.bf16.gmra.mrb[0].mxu0 %v1019
  %v3320 = vpop.f32.mrb[0].mxu0
  %v3321 = vadd.f32 %v3032, %v3320
  %v3322 = vpop.f32.mrb[0].mxu0
  %v3323 = vpop.f32.mrb[0].mxu0
  %v3324 = vadd.f32 %v3035, %v3323
  %v3325 = vpop.f32.mrb[0].mxu0
  %3326 = vmatprep.mubr.bf16.mxu0 0
  %3327 = vmatmul.mubr.bf16.gmra.mrb[0].mxu0 %v1022
  %v3328 = vpop.f32.mrb[0].mxu0
  %v3329 = vadd.f32 %v3040, %v3328
  %v3330 = vpop.f32.mrb[0].mxu0
  %v3331 = vpop.f32.mrb[0].mxu0
  %v3332 = vadd.f32 %v3043, %v3331
  %v3333 = vpop.f32.mrb[0].mxu0
  %3334 = vmatprep.mubr.bf16.mxu0 0
  %3335 = vmatmul.mubr.bf16.gmra.mrb[0].mxu0 %v1025
  %v3336 = vpop.f32.mrb[0].mxu0
  %v3337 = vadd.f32 %v3048, %v3336
  %v3338 = vpop.f32.mrb[0].mxu0
  %v3339 = vpop.f32.mrb[0].mxu0
  %v3340 = vadd.f32 %v3051, %v3339
  %v3341 = vpop.f32.mrb[0].mxu0
  %3342 = vmatprep.mubr.bf16.mxu0 0
  %3343 = vmatmul.mubr.bf16.gmra.mrb[0].mxu0 %v1028
  %v3344 = vpop.f32.mrb[0].mxu0
  %v3345 = vadd.f32 %v3056, %v3344
  %v3346 = vpop.f32.mrb[0].mxu0
  %v3347 = vpop.f32.mrb[0].mxu0
  %v3348 = vadd.f32 %v3059, %v3347
  %v3349 = vpop.f32.mrb[0].mxu0
  %3350 = vmatprep.mubr.bf16.mxu0 0
  %3351 = vmatmul.mubr.bf16.gmra.mrb[0].mxu0 %v1031
  %v3352 = vpop.f32.mrb[0].mxu0
  %v3353 = vadd.f32 %v3064, %v3352
  %v3354 = vpop.f32.mrb[0].mxu0
  %v3355 = vpop.f32.mrb[0].mxu0
  %v3356 = vadd.f32 %v3067, %v3355
  %v3357 = vpop.f32.mrb[0].mxu0
  %3358 = vmatprep.mubr.bf16.mxu0 0
  %3359 = vmatmul.mubr.bf16.gmra.mrb[0].mxu0 %v1034
  %v3360 = vpop.f32.mrb[0].mxu0
  %v3361 = vadd.f32 %v3072, %v3360
  %v3362 = vpop.f32.mrb[0].mxu0
  %v3363 = vpop.f32.mrb[0].mxu0
  %v3364 = vadd.f32 %v3075, %v3363
  %v3365 = vpop.f32.mrb[0].mxu0
  %3366 = vmatprep.mubr.bf16.mxu0 0
  %3367 = vmatmul.mubr.bf16.gmra.mrb[0].mxu0 %v1037
  %v3368 = vpop.f32.mrb[0].mxu0
  %v3369 = vadd.f32 %v3080, %v3368
  %v3370 = vpop.f32.mrb[0].mxu0
  %v3371 = vpop.f32.mrb[0].mxu0
  %v3372 = vadd.f32 %v3083, %v3371
  %v3373 = vpop.f32.mrb[0].mxu0
  %3374 = vmatprep.mubr.bf16.mxu0 0
  %3375 = vmatmul.mubr.bf16.gmra.mrb[0].mxu0 %v1040
  %v3376 = vpop.f32.mrb[0].mxu0
  %v3377 = vadd.f32 %v3088, %v3376
  %v3378 = vpop.f32.mrb[0].mxu0
  %v3379 = vpop.f32.mrb[0].mxu0
  %v3380 = vadd.f32 %v3091, %v3379
  %v3381 = vpop.f32.mrb[0].mxu0
  %3382 = vmatprep.mubr.bf16.mxu0 0
  %3383 = vmatmul.mubr.bf16.gmra.mrb[0].mxu0 %v1043
  %v3384 = vpop.f32.mrb[0].mxu0
  %v3385 = vadd.f32 %v3096, %v3384
  %v3386 = vpop.f32.mrb[0].mxu0
  %v3387 = vpop.f32.mrb[0].mxu0
  %v3388 = vadd.f32 %v3099, %v3387
  %v3389 = vpop.f32.mrb[0].mxu0
  %3390 = vmatprep.mubr.bf16.mxu0 0
  %3391 = vmatmul.mubr.bf16.gmra.mrb[0].mxu0 %v1046
  %v3392 = vpop.f32.mrb[0].mxu0
  %v3393 = vadd.f32 %v3104, %v3392
  %v3394 = vpop.f32.mrb[0].mxu0
  %v3395 = vpop.f32.mrb[0].mxu0
  %v3396 = vadd.f32 %v3107, %v3395
  %v3397 = vpop.f32.mrb[0].mxu0
  %3398 = vmatprep.mubr.bf16.mxu0 0
  %3399 = vmatmul.mubr.bf16.gmra.mrb[0].mxu0 %v1049
  %v3400 = vpop.f32.mrb[0].mxu0
  %v3401 = vadd.f32 %v3112, %v3400
  %v3402 = vpop.f32.mrb[0].mxu0
  %v3403 = vpop.f32.mrb[0].mxu0
  %v3404 = vadd.f32 %v3115, %v3403
  %v3405 = vpop.f32.mrb[0].mxu0
  %3406 = vmatprep.mubr.bf16.mxu0 0
  %3407 = vmatmul.mubr.bf16.gmra.mrb[0].mxu0 %v1139
  %v3408 = vpop.f32.mrb[0].mxu0
  %v3409 = vadd.f32 %v3120, %v3408
  %v3410 = vpop.f32.mrb[0].mxu0
  %v3411 = vpop.f32.mrb[0].mxu0
  %v3412 = vadd.f32 %v3123, %v3411
  %v3413 = vpop.f32.mrb[0].mxu0
  %3414 = vmatprep.mubr.bf16.mxu0 0
  %3415 = vmatmul.mubr.bf16.gmra.mrb[0].mxu0 %v2657
  %v3416 = vpop.f32.mrb[0].mxu0
  %v3417 = vadd.f32 %v3128, %v3416
  %v3418 = vpop.f32.mrb[0].mxu0
  %v3419 = vpop.f32.mrb[0].mxu0
  %v3420 = vadd.f32 %v3131, %v3419
  %v3421 = vpop.f32.mrb[0].mxu0
  %3422 = vmatprep.mubr.bf16.mxu0 0
  %3423 = vmatmul.mubr.bf16.gmra.mrb[0].mxu0 %v2659
  %v3424 = vpop.f32.mrb[0].mxu0
  %v3425 = vadd.f32 %v3136, %v3424
  %v3426 = vpop.f32.mrb[0].mxu0
  %v3427 = vpop.f32.mrb[0].mxu0
  %v3428 = vadd.f32 %v3139, %v3427
  %v3429 = vpop.f32.mrb[0].mxu0
  %3430 = vdwg.mxu0
  %v3431 = vadd.f32 %v2382, %v3177
  %v3432 = vadd.f32 %v2385, %v3180
  %v3433 = vadd.f32 %v2390, %v3185
  %v3434 = vadd.f32 %v2393, %v3188
  %v3435 = vadd.f32 %v2398, %v3193
  %v3436 = vadd.f32 %v2401, %v3196
  %v3437 = vadd.f32 %v2406, %v3201
  %v3438 = vadd.f32 %v2409, %v3204
  %v3439 = vadd.f32 %v2414, %v3209
  %v3440 = vadd.f32 %v2417, %v3212
  %v3441 = vadd.f32 %v2422, %v3217
  %v3442 = vadd.f32 %v2425, %v3220
  %v3443 = vadd.f32 %v2430, %v3225
  %v3444 = vadd.f32 %v2433, %v3228
  %v3445 = vadd.f32 %v2438, %v3233
  %v3446 = vadd.f32 %v2441, %v3236
  %v3447 = vadd.f32 %v2446, %v3241
  %v3448 = vadd.f32 %v2449, %v3244
  %v3449 = vadd.f32 %v2454, %v3249
  %v3450 = vadd.f32 %v2457, %v3252
  %v3451 = vadd.f32 %v2462, %v3257
  %v3452 = vadd.f32 %v2465, %v3260
  %v3453 = vadd.f32 %v2470, %v3265
  %v3454 = vadd.f32 %v2473, %v3268
  %v3455 = vadd.f32 %v2478, %v3273
  %v3456 = vadd.f32 %v2481, %v3276
  %v3457 = vadd.f32 %v2486, %v3281
  %v3458 = vadd.f32 %v2489, %v3284
  %v3459 = vadd.f32 %v2494, %v3289
  %v3460 = vadd.f32 %v2497, %v3292
  %v3461 = vadd.f32 %v2502, %v3297
  %v3462 = vadd.f32 %v2505, %v3300
  %v3463 = vadd.f32 %v2510, %v3305
  %v3464 = vadd.f32 %v2513, %v3308
  %v3465 = vadd.f32 %v2518, %v3313
  %v3466 = vadd.f32 %v2521, %v3316
  %v3467 = vadd.f32 %v2526, %v3321
  %v3468 = vadd.f32 %v2529, %v3324
  %v3469 = vadd.f32 %v2534, %v3329
  %v3470 = vadd.f32 %v2537, %v3332
  %v3471 = vadd.f32 %v2542, %v3337
  %v3472 = vadd.f32 %v2545, %v3340
  %v3473 = vadd.f32 %v2550, %v3345
  %v3474 = vadd.f32 %v2553, %v3348
  %v3475 = vadd.f32 %v2558, %v3353
  %v3476 = vadd.f32 %v2561, %v3356
  %v3477 = vadd.f32 %v2566, %v3361
  %v3478 = vadd.f32 %v2569, %v3364
  %v3479 = vadd.f32 %v2574, %v3369
  %v3480 = vadd.f32 %v2577, %v3372
  %v3481 = vadd.f32 %v2582, %v3377
  %v3482 = vadd.f32 %v2585, %v3380
  %v3483 = vadd.f32 %v2590, %v3385
  %v3484 = vadd.f32 %v2593, %v3388
  %v3485 = vadd.f32 %v2598, %v3393
  %v3486 = vadd.f32 %v2601, %v3396
  %v3487 = vadd.f32 %v2606, %v3401
  %v3488 = vadd.f32 %v2609, %v3404
  %v3489 = vadd.f32 %v2614, %v3409
  %v3490 = vadd.f32 %v2617, %v3412
  %v3491 = vadd.f32 %v2622, %v3417
  %v3492 = vadd.f32 %v2625, %v3420
  %v3493 = vadd.f32 %v2630, %v3425
  %v3494 = vadd.f32 %v2633, %v3428
  %v3495 = vld [vmem:[%s4] sm:$0x1]
  %v3497 = vlaneseq
  %v3498 = vshrl.u32 %v3497, 7
  %v3499 = vsub.s32 0, %v3498
  %v3500 = vrot.slane %v3495, %v3499
  %v3502 = vadd.f32 %v3431, %v3500
  %v3503 = vadd.f32 %v3432, %v3500
  %v3504 = vadd.f32 %v3433, %v3500
  %v3505 = vadd.f32 %v3434, %v3500
  %v3506 = vadd.f32 %v3435, %v3500
  %v3507 = vadd.f32 %v3436, %v3500
  %v3508 = vadd.f32 %v3437, %v3500
  %v3509 = vadd.f32 %v3438, %v3500
  %v3510 = vadd.f32 %v3439, %v3500
  %v3511 = vadd.f32 %v3440, %v3500
  %v3512 = vadd.f32 %v3441, %v3500
  %v3513 = vadd.f32 %v3442, %v3500
  %v3514 = vadd.f32 %v3443, %v3500
  %v3515 = vadd.f32 %v3444, %v3500
  %v3516 = vadd.f32 %v3445, %v3500
  %v3517 = vadd.f32 %v3446, %v3500
  %v3518 = vadd.f32 %v3447, %v3500
  %v3519 = vadd.f32 %v3448, %v3500
  %v3520 = vadd.f32 %v3449, %v3500
  %v3521 = vadd.f32 %v3450, %v3500
  %v3522 = vadd.f32 %v3451, %v3500
  %v3523 = vadd.f32 %v3452, %v3500
  %v3524 = vadd.f32 %v3453, %v3500
  %v3525 = vadd.f32 %v3454, %v3500
  %v3526 = vadd.f32 %v3455, %v3500
  %v3527 = vadd.f32 %v3456, %v3500
  %v3528 = vadd.f32 %v3457, %v3500
  %v3529 = vadd.f32 %v3458, %v3500
  %v3530 = vadd.f32 %v3459, %v3500
  %v3531 = vadd.f32 %v3460, %v3500
  %v3532 = vadd.f32 %v3461, %v3500
  %v3533 = vadd.f32 %v3462, %v3500
  %v3534 = vadd.f32 %v3463, %v3500
  %v3535 = vadd.f32 %v3464, %v3500
  %v3536 = vadd.f32 %v3465, %v3500
  %v3537 = vadd.f32 %v3466, %v3500
  %v3538 = vadd.f32 %v3467, %v3500
  %v3539 = vadd.f32 %v3468, %v3500
  %v3540 = vadd.f32 %v3469, %v3500
  %v3541 = vadd.f32 %v3470, %v3500
  %v3542 = vadd.f32 %v3471, %v3500
  %v3543 = vadd.f32 %v3472, %v3500
  %v3544 = vadd.f32 %v3473, %v3500
  %v3545 = vadd.f32 %v3474, %v3500
  %v3546 = vadd.f32 %v3475, %v3500
  %v3547 = vadd.f32 %v3476, %v3500
  %v3548 = vadd.f32 %v3477, %v3500
  %v3549 = vadd.f32 %v3478, %v3500
  %v3550 = vadd.f32 %v3479, %v3500
  %v3551 = vadd.f32 %v3480, %v3500
  %v3552 = vadd.f32 %v3481, %v3500
  %v3553 = vadd.f32 %v3482, %v3500
  %v3554 = vadd.f32 %v3483, %v3500
  %v3555 = vadd.f32 %v3484, %v3500
  %v3556 = vadd.f32 %v3485, %v3500
  %v3557 = vadd.f32 %v3486, %v3500
  %v3558 = vadd.f32 %v3487, %v3500
  %v3559 = vadd.f32 %v3488, %v3500
  %v3560 = vadd.f32 %v3489, %v3500
  %v3561 = vadd.f32 %v3490, %v3500
  %v3562 = vadd.f32 %v3491, %v3500
  %v3563 = vadd.f32 %v3492, %v3500
  %v3564 = vadd.f32 %v3493, %v3500
  %v3565 = vadd.f32 %v3494, %v3500
  %v3566 = vadd.f32 %v3502, %v21
  %v3567 = vadd.f32 %v3503, %v22
  %v3568 = vadd.f32 %v3504, %v23
  %v3569 = vadd.f32 %v3505, %v24
  %v3570 = vadd.f32 %v3506, %v25
  %v3571 = vadd.f32 %v3507, %v26
  %v3572 = vadd.f32 %v3508, %v27
  %v3573 = vadd.f32 %v3509, %v28
  %v3574 = vadd.f32 %v3510, %v29
  %v3575 = vadd.f32 %v3511, %v30
  %v3576 = vadd.f32 %v3512, %v31
  %v3577 = vadd.f32 %v3513, %v32
  %v3578 = vadd.f32 %v3514, %v33
  %v3579 = vadd.f32 %v3515, %v34
  %v3580 = vadd.f32 %v3516, %v35
  %v3581 = vadd.f32 %v3517, %v36
  %v3582 = vadd.f32 %v3518, %v37
  %v3583 = vadd.f32 %v3519, %v38
  %v3584 = vadd.f32 %v3520, %v39
  %v3585 = vadd.f32 %v3521, %v40
  %v3586 = vadd.f32 %v3522, %v41
  %v3587 = vadd.f32 %v3523, %v42
  %v3588 = vadd.f32 %v3524, %v43
  %v3589 = vadd.f32 %v3525, %v44
  %v3590 = vadd.f32 %v3526, %v45
  %v3591 = vadd.f32 %v3527, %v46
  %v3592 = vadd.f32 %v3528, %v47
  %v3593 = vadd.f32 %v3529, %v48
  %v3594 = vadd.f32 %v3530, %v49
  %v3595 = vadd.f32 %v3531, %v50
  %v3596 = vadd.f32 %v3532, %v51
  %v3597 = vadd.f32 %v3533, %v52
  %v3598 = vadd.f32 %v3534, %v53
  %v3599 = vadd.f32 %v3535, %v54
  %v3600 = vadd.f32 %v3536, %v55
  %v3601 = vadd.f32 %v3537, %v56
  %v3602 = vadd.f32 %v3538, %v57
  %v3603 = vadd.f32 %v3539, %v58
  %v3604 = vadd.f32 %v3540, %v59
  %v3605 = vadd.f32 %v3541, %v60
  %v3606 = vadd.f32 %v3542, %v61
  %v3607 = vadd.f32 %v3543, %v62
  %v3608 = vadd.f32 %v3544, %v63
  %v3609 = vadd.f32 %v3545, %v64
  %v3610 = vadd.f32 %v3546, %v65
  %v3611 = vadd.f32 %v3547, %v66
  %v3612 = vadd.f32 %v3548, %v67
  %v3613 = vadd.f32 %v3549, %v68
  %v3614 = vadd.f32 %v3550, %v69
  %v3615 = vadd.f32 %v3551, %v70
  %v3616 = vadd.f32 %v3552, %v71
  %v3617 = vadd.f32 %v3553, %v72
  %v3618 = vadd.f32 %v3554, %v73
  %v3619 = vadd.f32 %v3555, %v74
  %v3620 = vadd.f32 %v3556, %v75
  %v3621 = vadd.f32 %v3557, %v76
  %v3622 = vadd.f32 %v3558, %v77
  %v3623 = vadd.f32 %v3559, %v78
  %v3624 = vadd.f32 %v3560, %v79
  %v3625 = vadd.f32 %v3561, %v80
  %v3626 = vadd.f32 %v3562, %v81
  %v3627 = vadd.f32 %v3563, %v82
  %v3628 = vadd.f32 %v3564, %v83
  %v3629 = vadd.f32 %v3565, %v84
  %v3630 = vmax.f32 %v3566, 0.0
  %v3631 = vmax.f32 %v3567, 0.0
  %v3632 = vmax.f32 %v3568, 0.0
  %v3633 = vmax.f32 %v3569, 0.0
  %v3634 = vmax.f32 %v3570, 0.0
  %v3635 = vmax.f32 %v3571, 0.0
  %v3636 = vmax.f32 %v3572, 0.0
  %v3637 = vmax.f32 %v3573, 0.0
  %v3638 = vmax.f32 %v3574, 0.0
  %v3639 = vmax.f32 %v3575, 0.0
  %v3640 = vmax.f32 %v3576, 0.0
  %v3641 = vmax.f32 %v3577, 0.0
  %v3642 = vmax.f32 %v3578, 0.0
  %v3643 = vmax.f32 %v3579, 0.0
  %v3644 = vmax.f32 %v3580, 0.0
  %v3645 = vmax.f32 %v3581, 0.0
  %v3646 = vmax.f32 %v3582, 0.0
  %v3647 = vmax.f32 %v3583, 0.0
  %v3648 = vmax.f32 %v3584, 0.0
  %v3649 = vmax.f32 %v3585, 0.0
  %v3650 = vmax.f32 %v3586, 0.0
  %v3651 = vmax.f32 %v3587, 0.0
  %v3652 = vmax.f32 %v3588, 0.0
  %v3653 = vmax.f32 %v3589, 0.0
  %v3654 = vmax.f32 %v3590, 0.0
  %v3655 = vmax.f32 %v3591, 0.0
  %v3656 = vmax.f32 %v3592, 0.0
  %v3657 = vmax.f32 %v3593, 0.0
  %v3658 = vmax.f32 %v3594, 0.0
  %v3659 = vmax.f32 %v3595, 0.0
  %v3660 = vmax.f32 %v3596, 0.0
  %v3661 = vmax.f32 %v3597, 0.0
  %v3662 = vmax.f32 %v3598, 0.0
  %v3663 = vmax.f32 %v3599, 0.0
  %v3664 = vmax.f32 %v3600, 0.0
  %v3665 = vmax.f32 %v3601, 0.0
  %v3666 = vmax.f32 %v3602, 0.0
  %v3667 = vmax.f32 %v3603, 0.0
  %v3668 = vmax.f32 %v3604, 0.0
  %v3669 = vmax.f32 %v3605, 0.0
  %v3670 = vmax.f32 %v3606, 0.0
  %v3671 = vmax.f32 %v3607, 0.0
  %v3672 = vmax.f32 %v3608, 0.0
  %v3673 = vmax.f32 %v3609, 0.0
  %v3674 = vmax.f32 %v3610, 0.0
  %v3675 = vmax.f32 %v3611, 0.0
  %v3676 = vmax.f32 %v3612, 0.0
  %v3677 = vmax.f32 %v3613, 0.0
  %v3678 = vmax.f32 %v3614, 0.0
  %v3679 = vmax.f32 %v3615, 0.0
  %v3680 = vmax.f32 %v3616, 0.0
  %v3681 = vmax.f32 %v3617, 0.0
  %v3682 = vmax.f32 %v3618, 0.0
  %v3683 = vmax.f32 %v3619, 0.0
  %v3684 = vmax.f32 %v3620, 0.0
  %v3685 = vmax.f32 %v3621, 0.0
  %v3686 = vmax.f32 %v3622, 0.0
  %v3687 = vmax.f32 %v3623, 0.0
  %v3688 = vmax.f32 %v3624, 0.0
  %v3689 = vmax.f32 %v3625, 0.0
  %v3690 = vmax.f32 %v3626, 0.0
  %v3691 = vmax.f32 %v3627, 0.0
  %v3692 = vmax.f32 %v3628, 0.0
  %v3693 = vmax.f32 %v3629, 0.0
  %3694 = vst.msk [vmem:[%s5] sm:$0xff] %vm125, %v3630
  %3695 = vst.msk [vmem:[%s5 + $0x8] sm:$0xff] %vm125, %v3631
  %3696 = vst.msk [vmem:[%s5 + $0x10] sm:$0xff] %vm125, %v3632
  %3697 = vst.msk [vmem:[%s5 + $0x18] sm:$0xff] %vm125, %v3633
  %3698 = vst.msk [vmem:[%s5 + $0x20] sm:$0xff] %vm125, %v3634
  %3699 = vst.msk [vmem:[%s5 + $0x28] sm:$0xff] %vm125, %v3635
  %3700 = vst.msk [vmem:[%s5 + $0x30] sm:$0xff] %vm125, %v3636
  %3701 = vst.msk [vmem:[%s5 + $0x38] sm:$0xff] %vm125, %v3637
  %3702 = vst.msk [vmem:[%s5 + $0x40] sm:$0xff] %vm125, %v3638
  %3703 = vst.msk [vmem:[%s5 + $0x48] sm:$0xff] %vm125, %v3639
  %3704 = vst.msk [vmem:[%s5 + $0x50] sm:$0xff] %vm125, %v3640
  %3705 = vst.msk [vmem:[%s5 + $0x58] sm:$0xff] %vm125, %v3641
  %3706 = vst.msk [vmem:[%s5 + $0x60] sm:$0xff] %vm125, %v3642
  %3707 = vst.msk [vmem:[%s5 + $0x68] sm:$0xff] %vm125, %v3643
  %3708 = vst.msk [vmem:[%s5 + $0x70] sm:$0xff] %vm125, %v3644
  %3709 = vst.msk [vmem:[%s5 + $0x78] sm:$0xff] %vm125, %v3645
  %3710 = vst.msk [vmem:[%s5 + $0x80] sm:$0xff] %vm125, %v3646
  %3711 = vst.msk [vmem:[%s5 + $0x88] sm:$0xff] %vm125, %v3647
  %3712 = vst.msk [vmem:[%s5 + $0x90] sm:$0xff] %vm125, %v3648
  %3713 = vst.msk [vmem:[%s5 + $0x98] sm:$0xff] %vm125, %v3649
  %3714 = vst.msk [vmem:[%s5 + $0xa0] sm:$0xff] %vm125, %v3650
  %3715 = vst.msk [vmem:[%s5 + $0xa8] sm:$0xff] %vm125, %v3651
  %3716 = vst.msk [vmem:[%s5 + $0xb0] sm:$0xff] %vm125, %v3652
  %3717 = vst.msk [vmem:[%s5 + $0xb8] sm:$0xff] %vm125, %v3653
  %3718 = vst.msk [vmem:[%s5 + $0xc0] sm:$0xff] %vm125, %v3654
  %3719 = vst.msk [vmem:[%s5 + $0xc8] sm:$0xff] %vm125, %v3655
  %3720 = vst.msk [vmem:[%s5 + $0xd0] sm:$0xff] %vm125, %v3656
  %3721 = vst.msk [vmem:[%s5 + $0xd8] sm:$0xff] %vm125, %v3657
  %3722 = vst.msk [vmem:[%s5 + $0xe0] sm:$0xff] %vm125, %v3658
  %3723 = vst.msk [vmem:[%s5 + $0xe8] sm:$0xff] %vm125, %v3659
  %3724 = vst.msk [vmem:[%s5 + $0xf0] sm:$0xff] %vm125, %v3660
  %3725 = vst.msk [vmem:[%s5 + $0xf8] sm:$0xff] %vm125, %v3661
  %3726 = vst.msk [vmem:[%s5 + $0x100] sm:$0xff] %vm125, %v3662
  %3727 = vst.msk [vmem:[%s5 + $0x108] sm:$0xff] %vm125, %v3663
  %3728 = vst.msk [vmem:[%s5 + $0x110] sm:$0xff] %vm125, %v3664
  %3729 = vst.msk [vmem:[%s5 + $0x118] sm:$0xff] %vm125, %v3665
  %3730 = vst.msk [vmem:[%s5 + $0x120] sm:$0xff] %vm125, %v3666
  %3731 = vst.msk [vmem:[%s5 + $0x128] sm:$0xff] %vm125, %v3667
  %3732 = vst.msk [vmem:[%s5 + $0x130] sm:$0xff] %vm125, %v3668
  %3733 = vst.msk [vmem:[%s5 + $0x138] sm:$0xff] %vm125, %v3669
  %3734 = vst.msk [vmem:[%s5 + $0x140] sm:$0xff] %vm125, %v3670
  %3735 = vst.msk [vmem:[%s5 + $0x148] sm:$0xff] %vm125, %v3671
  %3736 = vst.msk [vmem:[%s5 + $0x150] sm:$0xff] %vm125, %v3672
  %3737 = vst.msk [vmem:[%s5 + $0x158] sm:$0xff] %vm125, %v3673
  %3738 = vst.msk [vmem:[%s5 + $0x160] sm:$0xff] %vm125, %v3674
  %3739 = vst.msk [vmem:[%s5 + $0x168] sm:$0xff] %vm125, %v3675
  %3740 = vst.msk [vmem:[%s5 + $0x170] sm:$0xff] %vm125, %v3676
  %3741 = vst.msk [vmem:[%s5 + $0x178] sm:$0xff] %vm125, %v3677
  %3742 = vst.msk [vmem:[%s5 + $0x180] sm:$0xff] %vm125, %v3678
  %3743 = vst.msk [vmem:[%s5 + $0x188] sm:$0xff] %vm125, %v3679
  %3744 = vst.msk [vmem:[%s5 + $0x190] sm:$0xff] %vm125, %v3680
  %3745 = vst.msk [vmem:[%s5 + $0x198] sm:$0xff] %vm125, %v3681
  %3746 = vst.msk [vmem:[%s5 + $0x1a0] sm:$0xff] %vm125, %v3682
  %3747 = vst.msk [vmem:[%s5 + $0x1a8] sm:$0xff] %vm125, %v3683
  %3748 = vst.msk [vmem:[%s5 + $0x1b0] sm:$0xff] %vm125, %v3684
  %3749 = vst.msk [vmem:[%s5 + $0x1b8] sm:$0xff] %vm125, %v3685
  %3750 = vst.msk [vmem:[%s5 + $0x1c0] sm:$0xff] %vm125, %v3686
  %3751 = vst.msk [vmem:[%s5 + $0x1c8] sm:$0xff] %vm125, %v3687
  %3752 = vst.msk [vmem:[%s5 + $0x1d0] sm:$0xff] %vm125, %v3688
  %3753 = vst.msk [vmem:[%s5 + $0x1d8] sm:$0xff] %vm125, %v3689
  %3754 = vst.msk [vmem:[%s5 + $0x1e0] sm:$0xff] %vm125, %v3690
  %3755 = vst.msk [vmem:[%s5 + $0x1e8] sm:$0xff] %vm125, %v3691
  %3756 = vst.msk [vmem:[%s5 + $0x1f0] sm:$0xff] %vm125, %v3692
  %3757 = vst.msk [vmem:[%s5 + $0x1f8] sm:$0xff] %vm125, %v3693
  // Predicated region
  $region22: #{tpu_custom_call.1} parent=0 // pred_check
    _
  $region23: #{tpu_custom_call.1} parent=0 // pred_check_branch
    %3759 = sbr.rel (0) target = $region25
  $region24: #{tpu_custom_call.1} parent=0 // pred_region
    _
  $region25: #{tpu_custom_call.1} parent=0 // pred_fallthru
    _
  // Predicated region
  $region26: #{tpu_custom_call.1} parent=0 // pred_check
    _
  $region27: #{tpu_custom_call.1} parent=0 // pred_check_branch
    %3761 = sbr.rel (0) target = $region29
  $region28: #{tpu_custom_call.1} parent=0 // pred_region
    _
  $region29: #{tpu_custom_call.1} parent=0 // pred_fallthru
    _

</llo_original>
